<compile_context>
chip_gen: v7x
topology: tpu7x:2x2x1
jax: 0.10.0
libtpu: 0.0.40
codegen_flags: <defaults>
</compile_context>

<pallas_src>
import jax
import jax.numpy as jnp
from jax.experimental import pallas as pl
from jax.experimental.pallas import tpu as pltpu


# ---------------------------------------------------------------------------
# Fused kernel
# ---------------------------------------------------------------------------

def _fused_kernel(x_ref, xc1_ref,
                  w_ih_ref, w_hh_ref, b_lstm_ref,
                  w1_ref, s1_ref, sh1_ref,
                  w2_ref, s2_ref, sh2_ref,
                  w3_ref, s3_ref, sh3_ref,
                  wfc_ref, bfc_ref,
                  out_ref,
                  gx_ref):
    """Whole LSTM_Temporal forward (eval mode) in one kernel.

    x_ref:    [B, T, F]   f32   raw input (LSTM branch)
    xc1_ref:  [B, L1, K1*F] f32 host-built im2col patches for conv1
    w_ih_ref: [F, 4H] f32   w_hh_ref: [H, 4H] bf16   b_lstm_ref: [1, 4H] f32 (b_ih+b_hh)
    w{1,2,3}_ref: [K*Cin, Cout] bf16   im2col-reshaped conv weights
    s*/sh*_ref:   [1, Cout] f32        folded eval-mode BatchNorm scale / shift
    wfc_ref:  [H+C3, Epad] bf16  (fc1 rows stacked over fc2 rows, zero-padded to 128 lanes)
    bfc_ref:  [1, Epad] f32
    out_ref:  [B, Epad] f32
    gx_ref:   [B, T, 4H] f32 VMEM scratch for the hoisted input projection
    """
    B, T, F = x_ref.shape
    H = w_hh_ref.shape[0]
    G = 4 * H
    bf = jnp.bfloat16

    # ------------------- LSTM input projection (VPU outer-product) -------------------
    # Contraction dim is F=2: a matmul would waste the MXU, so do it on the VPU and
    # park the result in VMEM so the unrolled recurrence doesn't pin ~16 vregs.
    x = x_ref[...]                                                   # [B, T, F] f32
    w_ih = w_ih_ref[...]                                             # [F, 4H]   f32
    gates_x = b_lstm_ref[...].reshape(1, 1, G)
    for f in range(F):
        gates_x = gates_x + x[:, :, f:f + 1] * w_ih[f:f + 1, :].reshape(1, 1, G)
    gx_ref[...] = jnp.broadcast_to(gates_x, (B, T, G))               # [B, T, 4H]

    # ------------------------- LSTM recurrence (serial chain) -------------------------
    # Fully unrolled; only h @ W_hh hits the MXU (bf16 operands, f32 accumulation).
    h = jnp.zeros((B, H), jnp.float32)
    c = jnp.zeros((B, H), jnp.float32)
    for t in range(T):
        gates = (jnp.dot(h.astype(bf), w_hh_ref[...],
                         preferred_element_type=jnp.float32)
                 + gx_ref[:, t, :])                                  # [B, 4H] f32
        i_g = jax.nn.sigmoid(gates[:, 0:H])
        f_g = jax.nn.sigmoid(gates[:, H:2 * H])
        g_g = jnp.tanh(gates[:, 2 * H:3 * H])
        o_g = jax.nn.sigmoid(gates[:, 3 * H:4 * H])
        c = f_g * c + i_g * g_g
        h = o_g * jnp.tanh(c)
    h_last = h                                                       # [B, H] f32

    # ------------------------- FCN branch -------------------------
    # conv1: im2col patches prebuilt on host (Cin=2 is far below lane width).
    L1 = xc1_ref.shape[1]
    C1 = w1_ref.shape[1]
    p1 = xc1_ref[...].astype(bf).reshape(B * L1, w1_ref.shape[0])
    y1 = jnp.dot(p1, w1_ref[...], preferred_element_type=jnp.float32)
    y1 = jnp.maximum(y1.reshape(B, L1, C1) * s1_ref[...] + sh1_ref[...], 0.0)

    def conv_bn_relu(xin, w_ref, s_ref, sh_ref, K):
        Bq, Lin, Cin = xin.shape
        Lout = Lin - K + 1
        Cout = w_ref.shape[1]
        # im2col: K shifted windows concatenated on the lane axis (128/256-aligned),
        # then ONE matmul with a large contraction dim (K*Cin).  Patches are built in
        # bf16 (layout copies only; arithmetic stays f32 after the dot).
        xin_b = xin.astype(bf)
        patches = jnp.concatenate([xin_b[:, k:k + Lout, :] for k in range(K)], axis=-1)
        y = jnp.dot(patches.reshape(Bq * Lout, K * Cin), w_ref[...],
                    preferred_element_type=jnp.float32)
        y = y.reshape(Bq, Lout, Cout) * s_ref[...] + sh_ref[...]
        return jnp.maximum(y, 0.0)

    y2 = conv_bn_relu(y1, w2_ref, s2_ref, sh2_ref, K=5)              # [B, L2, C2]
    y3 = conv_bn_relu(y2, w3_ref, s3_ref, sh3_ref, K=3)              # [B, L3, C3]

    # ------------------------- head: single fused matmul -------------------------
    x2 = jnp.mean(y3, axis=1)                                        # [B, C3] f32
    feat = jnp.concatenate([h_last, x2], axis=-1).astype(bf)         # [B, H+C3]
    out_ref[...] = (jnp.dot(feat, wfc_ref[...], preferred_element_type=jnp.float32)
                    + bfc_ref[...])                                  # [B, Epad]


# ---------------------------------------------------------------------------
# Wrapper (single pallas_call, whole-array VMEM blocks; everything is small)
# ---------------------------------------------------------------------------

def _vmem_specs(n):
    return [pl.BlockSpec(memory_space=pltpu.MemorySpace.VMEM) for _ in range(n)]


@jax.jit
def lstm_temporal_forward(x, params):
    """x: [B, T, F] float32  ->  [B, embed_size] float32."""
    B, T, F = x.shape
    H = params["w_hh"].shape[0]
    E = params["w_fc1"].shape[1]
    E_pad = max(128, ((E + 127) // 128) * 128)          # lane-dense head output
    pad = E_pad - E
    bf = jnp.bfloat16

    # Host-side im2col for conv1 only (its Cin = F = 2 is tiny); x itself still goes
    # to the kernel untransposed for the LSTM branch.
    K1, _, C1 = params["w_c1"].shape
    L1 = T - K1 + 1
    x_c1 = jnp.concatenate([x[:, k:k + L1, :] for k in range(K1)], axis=-1)  # [B,L1,K1*F]

    # Reshape conv weights [K, Cin, Cout] -> [K*Cin, Cout], cast to bf16 (MXU operands).
    w1 = params["w_c1"].reshape(K1 * F, C1).astype(bf)
    K2, Cin2, C2 = params["w_c2"].shape
    w2 = params["w_c2"].reshape(K2 * Cin2, C2).astype(bf)
    K3, Cin3, C3 = params["w_c3"].shape
    w3 = params["w_c3"].reshape(K3 * Cin3, C3).astype(bf)

    w_hh = params["w_hh"].astype(bf)                    # recurrence weight, bf16 MXU operand
    # w_ih stays f32: it is only used on the VPU (outer-product input projection).

    # Fused head weight: fc rows for the LSTM half stacked over the conv half,
    # zero-padded on the lane axis so the kernel's output store is 128-lane dense.
    wfc = jnp.pad(jnp.concatenate([params["w_fc1"], params["w_fc2"]], axis=0),
                  ((0, 0), (0, pad))).astype(bf)        # [H + C3, E_pad]
    bfc = jnp.pad(params["b_fc"], ((0, 0), (0, pad)))   # [1, E_pad] f32

    out_pad = pl.pallas_call(
        _fused_kernel,
        out_shape=jax.ShapeDtypeStruct((B, E_pad), jnp.float32),
        in_specs=_vmem_specs(16),
        out_specs=pl.BlockSpec(memory_space=pltpu.MemorySpace.VMEM),
        scratch_shapes=[pltpu.VMEM((B, T, 4 * H), jnp.float32)],
    )(x, x_c1,
      params["w_ih"], w_hh, params["b_lstm"],
      w1, params["s1"], params["sh1"],
      w2, params["s2"], params["sh2"],
      w3, params["s3"], params["sh3"],
      wfc, bfc)
    return out_pad[:, :E]


# ---------------------------------------------------------------------------
# Deterministic parameter initialization (synthetic, matches module shapes)
# ---------------------------------------------------------------------------

def init_params(key, *, num_features=2, hidden=128, c1=128, c2=256, c3=128,
                embed_size=32, eps=1e-5):
    ks = jax.random.split(key, 25)
    u = lambda k, shape, lo, hi: jax.random.uniform(k, shape, jnp.float32, lo, hi)

    def bn_fold(kb, cout, conv_bias):
        gamma = u(kb[0], (1, cout), 0.5, 1.5)
        beta = u(kb[1], (1, cout), -0.1, 0.1)
        rmean = u(kb[2], (1, cout), -0.1, 0.1)
        rvar = u(kb[3], (1, cout), 0.5, 1.5)
        scale = gamma / jnp.sqrt(rvar + eps)
        shift = (conv_bias - rmean) * scale + beta
        return scale, shift

    p = {}
    # LSTM (torch gate order i, f, g, o), weights stored transposed.
    bnd = 1.0 / jnp.sqrt(hidden)
    p["w_ih"] = u(ks[0], (num_features, 4 * hidden), -bnd, bnd)
    p["w_hh"] = u(ks[1], (hidden, 4 * hidden), -bnd, bnd)
    p["b_lstm"] = u(ks[2], (1, 4 * hidden), -bnd, bnd) + u(ks[3], (1, 4 * hidden), -bnd, bnd)

    # Conv1 (k=8), Conv2 (k=5), Conv3 (k=3); weights stored as [K, Cin, Cout].
    p["w_c1"] = u(ks[4], (8, num_features, c1), -0.25, 0.25)
    p["s1"], p["sh1"] = bn_fold(ks[5:9], c1, u(ks[9], (1, c1), -0.1, 0.1))
    p["w_c2"] = u(ks[10], (5, c1, c2), -0.04, 0.04)
    p["s2"], p["sh2"] = bn_fold(ks[11:15], c2, u(ks[15], (1, c2), -0.1, 0.1))
    p["w_c3"] = u(ks[16], (3, c2, c3), -0.03, 0.03)
    p["s3"], p["sh3"] = bn_fold(ks[17:21], c3, u(ks[21], (1, c3), -0.1, 0.1))

    # Final Linear(256, embed_size): rows split into LSTM half and conv half.
    bnd_fc = 1.0 / jnp.sqrt(hidden + c3)
    p["w_fc1"] = u(ks[22], (hidden, embed_size), -bnd_fc, bnd_fc)
    p["w_fc2"] = u(ks[23], (c3, embed_size), -bnd_fc, bnd_fc)
    p["b_fc"] = u(ks[24], (1, embed_size), -bnd_fc, bnd_fc)
    return p


# ---------------------------------------------------------------------------
# Pure-JAX reference (eval-mode semantics of the PyTorch forward), f32 throughout
# ---------------------------------------------------------------------------

def reference_forward(x, p):
    B, T, _ = x.shape
    H = p["w_hh"].shape[0]
    h = jnp.zeros((B, H), jnp.float32)
    c = jnp.zeros((B, H), jnp.float32)
    for t in range(T):
        gates = x[:, t, :] @ p["w_ih"] + h @ p["w_hh"] + p["b_lstm"][0]
        i = jax.nn.sigmoid(gates[:, :H])
        f = jax.nn.sigmoid(gates[:, H:2 * H])
        g = jnp.tanh(gates[:, 2 * H:3 * H])
        o = jax.nn.sigmoid(gates[:, 3 * H:])
        c = f * c + i * g
        h = o * jnp.tanh(c)

    def conv(xin, w, scale, shift):
        K = w.shape[0]
        Lout = xin.shape[1] - K + 1
        acc = 0.0
        for k in range(K):
            acc = acc + jnp.einsum("blc,co->blo", xin[:, k:k + Lout, :], w[k])
        return jnp.maximum(acc * scale + shift, 0.0)

    y = conv(x, p["w_c1"], p["s1"], p["sh1"])
    y = conv(y, p["w_c2"], p["s2"], p["sh2"])
    y = conv(y, p["w_c3"], p["s3"], p["sh3"])
    x2 = jnp.mean(y, axis=1)
    return h @ p["w_fc1"] + x2 @ p["w_fc2"] + p["b_fc"][0]


# ---------------------------------------------------------------------------

if __name__ == "__main__":
    key = jax.random.PRNGKey(0)
    kx, kp = jax.random.split(key)

    B, T, F = 2, 16, 2        # T >= 14 required by the three valid convs (k=8,5,3)
    embed_size = 32

    x = jax.random.normal(kx, (B, T, F), jnp.float32)
    params = init_params(kp, num_features=F, embed_size=embed_size)

    out = lstm_temporal_forward(x, params)
    out = jax.block_until_ready(out)

    ref = reference_forward(x, params)
    assert out.shape == (B, embed_size), out.shape
    # bf16 MXU operands (f32 accumulation) -> relaxed tolerance vs. the f32 reference.
    assert jnp.allclose(out, ref, rtol=5e-2, atol=5e-2), float(jnp.max(jnp.abs(out - ref)))

    print("KERNEL_OK")
</pallas_src>

<mosaic_0001>
module attributes {stable_mosaic.version = 11 : i64} {
  func.func @_fused_kernel(%arg0: memref<2x16x2xf32, #tpu.memory_space<vmem>>, %arg1: memref<2x9x16xf32, #tpu.memory_space<vmem>>, %arg2: memref<2x512xf32, #tpu.memory_space<vmem>>, %arg3: memref<128x512xbf16, #tpu.memory_space<vmem>>, %arg4: memref<1x512xf32, #tpu.memory_space<vmem>>, %arg5: memref<16x128xbf16, #tpu.memory_space<vmem>>, %arg6: memref<1x128xf32, #tpu.memory_space<vmem>>, %arg7: memref<1x128xf32, #tpu.memory_space<vmem>>, %arg8: memref<640x256xbf16, #tpu.memory_space<vmem>>, %arg9: memref<1x256xf32, #tpu.memory_space<vmem>>, %arg10: memref<1x256xf32, #tpu.memory_space<vmem>>, %arg11: memref<768x128xbf16, #tpu.memory_space<vmem>>, %arg12: memref<1x128xf32, #tpu.memory_space<vmem>>, %arg13: memref<1x128xf32, #tpu.memory_space<vmem>>, %arg14: memref<256x128xbf16, #tpu.memory_space<vmem>>, %arg15: memref<1x128xf32, #tpu.memory_space<vmem>>, %arg16: memref<2x128xf32, #tpu.memory_space<vmem>>, %arg17: memref<2x16x512xf32, #tpu.memory_space<vmem>>) attributes {dimension_semantics = [], scalar_prefetch = 0 : i64, scratch_operands = 1 : i64, tpu.core_type = #tpu.core_type<tc>} {
    %c0 = arith.constant 0 : index
    %c0_0 = arith.constant 0 : index
    %c0_1 = arith.constant 0 : index
    %0 = vector.load %arg0[%c0, %c0_0, %c0_1] : memref<2x16x2xf32, #tpu.memory_space<vmem>>, vector<2x16x2xf32>
    %c0_2 = arith.constant 0 : index
    %c0_3 = arith.constant 0 : index
    %1 = vector.load %arg2[%c0_2, %c0_3] : memref<2x512xf32, #tpu.memory_space<vmem>>, vector<2x512xf32>
    %c0_4 = arith.constant 0 : index
    %c0_5 = arith.constant 0 : index
    %2 = vector.load %arg4[%c0_4, %c0_5] : memref<1x512xf32, #tpu.memory_space<vmem>>, vector<1x512xf32>
    %3 = vector.shape_cast %2 : vector<1x512xf32> to vector<1x1x512xf32>
    %4 = vector.extract_strided_slice %0 {offsets = [0, 0, 0], sizes = [2, 16, 1], strides = [1, 1, 1]} : vector<2x16x2xf32> to vector<2x16x1xf32>
    %5 = vector.extract_strided_slice %1 {offsets = [0, 0], sizes = [1, 512], strides = [1, 1]} : vector<2x512xf32> to vector<1x512xf32>
    %6 = vector.shape_cast %5 : vector<1x512xf32> to vector<1x1x512xf32>
    %7 = vector.broadcast %4 : vector<2x16x1xf32> to vector<2x16x512xf32>
    %8 = vector.broadcast %6 : vector<1x1x512xf32> to vector<2x16x512xf32>
    %9 = arith.mulf %7, %8 : vector<2x16x512xf32>
    %10 = vector.broadcast %3 : vector<1x1x512xf32> to vector<2x16x512xf32>
    %11 = arith.addf %10, %9 : vector<2x16x512xf32>
    %12 = vector.extract_strided_slice %0 {offsets = [0, 0, 1], sizes = [2, 16, 1], strides = [1, 1, 1]} : vector<2x16x2xf32> to vector<2x16x1xf32>
    %13 = vector.extract_strided_slice %1 {offsets = [1, 0], sizes = [1, 512], strides = [1, 1]} : vector<2x512xf32> to vector<1x512xf32>
    %14 = vector.shape_cast %13 : vector<1x512xf32> to vector<1x1x512xf32>
    %15 = vector.broadcast %12 : vector<2x16x1xf32> to vector<2x16x512xf32>
    %16 = vector.broadcast %14 : vector<1x1x512xf32> to vector<2x16x512xf32>
    %17 = arith.mulf %15, %16 : vector<2x16x512xf32>
    %18 = arith.addf %11, %17 : vector<2x16x512xf32>
    %c0_6 = arith.constant 0 : index
    %c0_7 = arith.constant 0 : index
    %c0_8 = arith.constant 0 : index
    %19 = vector.load %arg17[%c0_6, %c0_7, %c0_8] : memref<2x16x512xf32, #tpu.memory_space<vmem>>, vector<2x16x512xf32>
    tpu.vector_store %arg17[%c0_6, %c0_7, %c0_8], %18 {strides = array<i32>} : memref<2x16x512xf32, #tpu.memory_space<vmem>>, vector<2x16x512xf32>,
    %cst = arith.constant 0.000000e+00 : f32
    %20 = vector.broadcast %cst : f32 to vector<2x128xf32>
    %cst_9 = arith.constant 0.000000e+00 : f32
    %21 = vector.broadcast %cst_9 : f32 to vector<2x128xf32>
    %22 = arith.truncf %20 : vector<2x128xf32> to vector<2x128xbf16>
    %c0_10 = arith.constant 0 : index
    %c0_11 = arith.constant 0 : index
    %23 = vector.load %arg3[%c0_10, %c0_11] : memref<128x512xbf16, #tpu.memory_space<vmem>>, vector<128x512xbf16>
    %cst_12 = arith.constant dense<0.000000e+00> : vector<2x512xf32>
    %24 = tpu.matmul %22, %23, %cst_12 {dimension_numbers = #tpu.dot_dimension_numbers<[1], [0], [0], [1], [0, 0, 1, 1], [], []>} : vector<2x128xbf16>, vector<128x512xbf16>, vector<2x512xf32> -> vector<2x512xf32>
    %c0_13 = arith.constant 0 : index
    %c0_14 = arith.constant 0 : index
    %c0_15 = arith.constant 0 : index
    %25 = vector.load %arg17[%c0_13, %c0_14, %c0_15] : memref<2x16x512xf32, #tpu.memory_space<vmem>>, vector<2x1x512xf32>
    %26 = vector.shape_cast %25 : vector<2x1x512xf32> to vector<2x512xf32>
    %27 = arith.addf %24, %26 : vector<2x512xf32>
    %28 = vector.extract_strided_slice %27 {offsets = [0, 0], sizes = [2, 128], strides = [1, 1]} : vector<2x512xf32> to vector<2x128xf32>
    %29 = arith.negf %28 : vector<2x128xf32>
    %30 = math.exp %29 : vector<2x128xf32>
    %cst_16 = arith.constant 1.000000e+00 : f32
    %31 = vector.broadcast %cst_16 : f32 to vector<2x128xf32>
    %32 = arith.addf %31, %30 : vector<2x128xf32>
    %33 = arith.divf %31, %32 : vector<2x128xf32>
    %34 = vector.extract_strided_slice %27 {offsets = [0, 128], sizes = [2, 128], strides = [1, 1]} : vector<2x512xf32> to vector<2x128xf32>
    %35 = arith.negf %34 : vector<2x128xf32>
    %36 = math.exp %35 : vector<2x128xf32>
    %cst_17 = arith.constant 1.000000e+00 : f32
    %37 = vector.broadcast %cst_17 : f32 to vector<2x128xf32>
    %38 = arith.addf %37, %36 : vector<2x128xf32>
    %39 = arith.divf %37, %38 : vector<2x128xf32>
    %40 = vector.extract_strided_slice %27 {offsets = [0, 256], sizes = [2, 128], strides = [1, 1]} : vector<2x512xf32> to vector<2x128xf32>
    %41 = math.tanh %40 : vector<2x128xf32>
    %42 = vector.extract_strided_slice %27 {offsets = [0, 384], sizes = [2, 128], strides = [1, 1]} : vector<2x512xf32> to vector<2x128xf32>
    %43 = arith.negf %42 : vector<2x128xf32>
    %44 = math.exp %43 : vector<2x128xf32>
    %cst_18 = arith.constant 1.000000e+00 : f32
    %45 = vector.broadcast %cst_18 : f32 to vector<2x128xf32>
    %46 = arith.addf %45, %44 : vector<2x128xf32>
    %47 = arith.divf %45, %46 : vector<2x128xf32>
    %48 = arith.mulf %39, %21 : vector<2x128xf32>
    %49 = arith.mulf %33, %41 : vector<2x128xf32>
    %50 = arith.addf %48, %49 : vector<2x128xf32>
    %51 = math.tanh %50 : vector<2x128xf32>
    %52 = arith.mulf %47, %51 : vector<2x128xf32>
    %53 = arith.truncf %52 : vector<2x128xf32> to vector<2x128xbf16>
    %c0_19 = arith.constant 0 : index
    %c0_20 = arith.constant 0 : index
    %54 = vector.load %arg3[%c0_19, %c0_20] : memref<128x512xbf16, #tpu.memory_space<vmem>>, vector<128x512xbf16>
    %cst_21 = arith.constant dense<0.000000e+00> : vector<2x512xf32>
    %55 = tpu.matmul %53, %54, %cst_21 {dimension_numbers = #tpu.dot_dimension_numbers<[1], [0], [0], [1], [0, 0, 1, 1], [], []>} : vector<2x128xbf16>, vector<128x512xbf16>, vector<2x512xf32> -> vector<2x512xf32>
    %c0_22 = arith.constant 0 : index
    %c1 = arith.constant 1 : index
    %c0_23 = arith.constant 0 : index
    %56 = vector.load %arg17[%c0_22, %c1, %c0_23] : memref<2x16x512xf32, #tpu.memory_space<vmem>>, vector<2x1x512xf32>
    %57 = vector.shape_cast %56 : vector<2x1x512xf32> to vector<2x512xf32>
    %58 = arith.addf %55, %57 : vector<2x512xf32>
    %59 = vector.extract_strided_slice %58 {offsets = [0, 0], sizes = [2, 128], strides = [1, 1]} : vector<2x512xf32> to vector<2x128xf32>
    %60 = arith.negf %59 : vector<2x128xf32>
    %61 = math.exp %60 : vector<2x128xf32>
    %cst_24 = arith.constant 1.000000e+00 : f32
    %62 = vector.broadcast %cst_24 : f32 to vector<2x128xf32>
    %63 = arith.addf %62, %61 : vector<2x128xf32>
    %64 = arith.divf %62, %63 : vector<2x128xf32>
    %65 = vector.extract_strided_slice %58 {offsets = [0, 128], sizes = [2, 128], strides = [1, 1]} : vector<2x512xf32> to vector<2x128xf32>
    %66 = arith.negf %65 : vector<2x128xf32>
    %67 = math.exp %66 : vector<2x128xf32>
    %cst_25 = arith.constant 1.000000e+00 : f32
    %68 = vector.broadcast %cst_25 : f32 to vector<2x128xf32>
    %69 = arith.addf %68, %67 : vector<2x128xf32>
    %70 = arith.divf %68, %69 : vector<2x128xf32>
    %71 = vector.extract_strided_slice %58 {offsets = [0, 256], sizes = [2, 128], strides = [1, 1]} : vector<2x512xf32> to vector<2x128xf32>
    %72 = math.tanh %71 : vector<2x128xf32>
    %73 = vector.extract_strided_slice %58 {offsets = [0, 384], sizes = [2, 128], strides = [1, 1]} : vector<2x512xf32> to vector<2x128xf32>
    %74 = arith.negf %73 : vector<2x128xf32>
    %75 = math.exp %74 : vector<2x128xf32>
    %cst_26 = arith.constant 1.000000e+00 : f32
    %76 = vector.broadcast %cst_26 : f32 to vector<2x128xf32>
    %77 = arith.addf %76, %75 : vector<2x128xf32>
    %78 = arith.divf %76, %77 : vector<2x128xf32>
    %79 = arith.mulf %70, %50 : vector<2x128xf32>
    %80 = arith.mulf %64, %72 : vector<2x128xf32>
    %81 = arith.addf %79, %80 : vector<2x128xf32>
    %82 = math.tanh %81 : vector<2x128xf32>
    %83 = arith.mulf %78, %82 : vector<2x128xf32>
    %84 = arith.truncf %83 : vector<2x128xf32> to vector<2x128xbf16>
    %c0_27 = arith.constant 0 : index
    %c0_28 = arith.constant 0 : index
    %85 = vector.load %arg3[%c0_27, %c0_28] : memref<128x512xbf16, #tpu.memory_space<vmem>>, vector<128x512xbf16>
    %cst_29 = arith.constant dense<0.000000e+00> : vector<2x512xf32>
    %86 = tpu.matmul %84, %85, %cst_29 {dimension_numbers = #tpu.dot_dimension_numbers<[1], [0], [0], [1], [0, 0, 1, 1], [], []>} : vector<2x128xbf16>, vector<128x512xbf16>, vector<2x512xf32> -> vector<2x512xf32>
    %c0_30 = arith.constant 0 : index
    %c2 = arith.constant 2 : index
    %c0_31 = arith.constant 0 : index
    %87 = vector.load %arg17[%c0_30, %c2, %c0_31] : memref<2x16x512xf32, #tpu.memory_space<vmem>>, vector<2x1x512xf32>
    %88 = vector.shape_cast %87 : vector<2x1x512xf32> to vector<2x512xf32>
    %89 = arith.addf %86, %88 : vector<2x512xf32>
    %90 = vector.extract_strided_slice %89 {offsets = [0, 0], sizes = [2, 128], strides = [1, 1]} : vector<2x512xf32> to vector<2x128xf32>
    %91 = arith.negf %90 : vector<2x128xf32>
    %92 = math.exp %91 : vector<2x128xf32>
    %cst_32 = arith.constant 1.000000e+00 : f32
    %93 = vector.broadcast %cst_32 : f32 to vector<2x128xf32>
    %94 = arith.addf %93, %92 : vector<2x128xf32>
    %95 = arith.divf %93, %94 : vector<2x128xf32>
    %96 = vector.extract_strided_slice %89 {offsets = [0, 128], sizes = [2, 128], strides = [1, 1]} : vector<2x512xf32> to vector<2x128xf32>
    %97 = arith.negf %96 : vector<2x128xf32>
    %98 = math.exp %97 : vector<2x128xf32>
    %cst_33 = arith.constant 1.000000e+00 : f32
    %99 = vector.broadcast %cst_33 : f32 to vector<2x128xf32>
    %100 = arith.addf %99, %98 : vector<2x128xf32>
    %101 = arith.divf %99, %100 : vector<2x128xf32>
    %102 = vector.extract_strided_slice %89 {offsets = [0, 256], sizes = [2, 128], strides = [1, 1]} : vector<2x512xf32> to vector<2x128xf32>
    %103 = math.tanh %102 : vector<2x128xf32>
    %104 = vector.extract_strided_slice %89 {offsets = [0, 384], sizes = [2, 128], strides = [1, 1]} : vector<2x512xf32> to vector<2x128xf32>
    %105 = arith.negf %104 : vector<2x128xf32>
    %106 = math.exp %105 : vector<2x128xf32>
    %cst_34 = arith.constant 1.000000e+00 : f32
    %107 = vector.broadcast %cst_34 : f32 to vector<2x128xf32>
    %108 = arith.addf %107, %106 : vector<2x128xf32>
    %109 = arith.divf %107, %108 : vector<2x128xf32>
    %110 = arith.mulf %101, %81 : vector<2x128xf32>
    %111 = arith.mulf %95, %103 : vector<2x128xf32>
    %112 = arith.addf %110, %111 : vector<2x128xf32>
    %113 = math.tanh %112 : vector<2x128xf32>
    %114 = arith.mulf %109, %113 : vector<2x128xf32>
    %115 = arith.truncf %114 : vector<2x128xf32> to vector<2x128xbf16>
    %c0_35 = arith.constant 0 : index
    %c0_36 = arith.constant 0 : index
    %116 = vector.load %arg3[%c0_35, %c0_36] : memref<128x512xbf16, #tpu.memory_space<vmem>>, vector<128x512xbf16>
    %cst_37 = arith.constant dense<0.000000e+00> : vector<2x512xf32>
    %117 = tpu.matmul %115, %116, %cst_37 {dimension_numbers = #tpu.dot_dimension_numbers<[1], [0], [0], [1], [0, 0, 1, 1], [], []>} : vector<2x128xbf16>, vector<128x512xbf16>, vector<2x512xf32> -> vector<2x512xf32>
    %c0_38 = arith.constant 0 : index
    %c3 = arith.constant 3 : index
    %c0_39 = arith.constant 0 : index
    %118 = vector.load %arg17[%c0_38, %c3, %c0_39] : memref<2x16x512xf32, #tpu.memory_space<vmem>>, vector<2x1x512xf32>
    %119 = vector.shape_cast %118 : vector<2x1x512xf32> to vector<2x512xf32>
    %120 = arith.addf %117, %119 : vector<2x512xf32>
    %121 = vector.extract_strided_slice %120 {offsets = [0, 0], sizes = [2, 128], strides = [1, 1]} : vector<2x512xf32> to vector<2x128xf32>
    %122 = arith.negf %121 : vector<2x128xf32>
    %123 = math.exp %122 : vector<2x128xf32>
    %cst_40 = arith.constant 1.000000e+00 : f32
    %124 = vector.broadcast %cst_40 : f32 to vector<2x128xf32>
    %125 = arith.addf %124, %123 : vector<2x128xf32>
    %126 = arith.divf %124, %125 : vector<2x128xf32>
    %127 = vector.extract_strided_slice %120 {offsets = [0, 128], sizes = [2, 128], strides = [1, 1]} : vector<2x512xf32> to vector<2x128xf32>
    %128 = arith.negf %127 : vector<2x128xf32>
    %129 = math.exp %128 : vector<2x128xf32>
    %cst_41 = arith.constant 1.000000e+00 : f32
    %130 = vector.broadcast %cst_41 : f32 to vector<2x128xf32>
    %131 = arith.addf %130, %129 : vector<2x128xf32>
    %132 = arith.divf %130, %131 : vector<2x128xf32>
    %133 = vector.extract_strided_slice %120 {offsets = [0, 256], sizes = [2, 128], strides = [1, 1]} : vector<2x512xf32> to vector<2x128xf32>
    %134 = math.tanh %133 : vector<2x128xf32>
    %135 = vector.extract_strided_slice %120 {offsets = [0, 384], sizes = [2, 128], strides = [1, 1]} : vector<2x512xf32> to vector<2x128xf32>
    %136 = arith.negf %135 : vector<2x128xf32>
    %137 = math.exp %136 : vector<2x128xf32>
    %cst_42 = arith.constant 1.000000e+00 : f32
    %138 = vector.broadcast %cst_42 : f32 to vector<2x128xf32>
    %139 = arith.addf %138, %137 : vector<2x128xf32>
    %140 = arith.divf %138, %139 : vector<2x128xf32>
    %141 = arith.mulf %132, %112 : vector<2x128xf32>
    %142 = arith.mulf %126, %134 : vector<2x128xf32>
    %143 = arith.addf %141, %142 : vector<2x128xf32>
    %144 = math.tanh %143 : vector<2x128xf32>
    %145 = arith.mulf %140, %144 : vector<2x128xf32>
    %146 = arith.truncf %145 : vector<2x128xf32> to vector<2x128xbf16>
    %c0_43 = arith.constant 0 : index
    %c0_44 = arith.constant 0 : index
    %147 = vector.load %arg3[%c0_43, %c0_44] : memref<128x512xbf16, #tpu.memory_space<vmem>>, vector<128x512xbf16>
    %cst_45 = arith.constant dense<0.000000e+00> : vector<2x512xf32>
    %148 = tpu.matmul %146, %147, %cst_45 {dimension_numbers = #tpu.dot_dimension_numbers<[1], [0], [0], [1], [0, 0, 1, 1], [], []>} : vector<2x128xbf16>, vector<128x512xbf16>, vector<2x512xf32> -> vector<2x512xf32>
    %c0_46 = arith.constant 0 : index
    %c4 = arith.constant 4 : index
    %c0_47 = arith.constant 0 : index
    %149 = vector.load %arg17[%c0_46, %c4, %c0_47] : memref<2x16x512xf32, #tpu.memory_space<vmem>>, vector<2x1x512xf32>
    %150 = vector.shape_cast %149 : vector<2x1x512xf32> to vector<2x512xf32>
    %151 = arith.addf %148, %150 : vector<2x512xf32>
    %152 = vector.extract_strided_slice %151 {offsets = [0, 0], sizes = [2, 128], strides = [1, 1]} : vector<2x512xf32> to vector<2x128xf32>
    %153 = arith.negf %152 : vector<2x128xf32>
    %154 = math.exp %153 : vector<2x128xf32>
    %cst_48 = arith.constant 1.000000e+00 : f32
    %155 = vector.broadcast %cst_48 : f32 to vector<2x128xf32>
    %156 = arith.addf %155, %154 : vector<2x128xf32>
    %157 = arith.divf %155, %156 : vector<2x128xf32>
    %158 = vector.extract_strided_slice %151 {offsets = [0, 128], sizes = [2, 128], strides = [1, 1]} : vector<2x512xf32> to vector<2x128xf32>
    %159 = arith.negf %158 : vector<2x128xf32>
    %160 = math.exp %159 : vector<2x128xf32>
    %cst_49 = arith.constant 1.000000e+00 : f32
    %161 = vector.broadcast %cst_49 : f32 to vector<2x128xf32>
    %162 = arith.addf %161, %160 : vector<2x128xf32>
    %163 = arith.divf %161, %162 : vector<2x128xf32>
    %164 = vector.extract_strided_slice %151 {offsets = [0, 256], sizes = [2, 128], strides = [1, 1]} : vector<2x512xf32> to vector<2x128xf32>
    %165 = math.tanh %164 : vector<2x128xf32>
    %166 = vector.extract_strided_slice %151 {offsets = [0, 384], sizes = [2, 128], strides = [1, 1]} : vector<2x512xf32> to vector<2x128xf32>
    %167 = arith.negf %166 : vector<2x128xf32>
    %168 = math.exp %167 : vector<2x128xf32>
    %cst_50 = arith.constant 1.000000e+00 : f32
    %169 = vector.broadcast %cst_50 : f32 to vector<2x128xf32>
    %170 = arith.addf %169, %168 : vector<2x128xf32>
    %171 = arith.divf %169, %170 : vector<2x128xf32>
    %172 = arith.mulf %163, %143 : vector<2x128xf32>
    %173 = arith.mulf %157, %165 : vector<2x128xf32>
    %174 = arith.addf %172, %173 : vector<2x128xf32>
    %175 = math.tanh %174 : vector<2x128xf32>
    %176 = arith.mulf %171, %175 : vector<2x128xf32>
    %177 = arith.truncf %176 : vector<2x128xf32> to vector<2x128xbf16>
    %c0_51 = arith.constant 0 : index
    %c0_52 = arith.constant 0 : index
    %178 = vector.load %arg3[%c0_51, %c0_52] : memref<128x512xbf16, #tpu.memory_space<vmem>>, vector<128x512xbf16>
    %cst_53 = arith.constant dense<0.000000e+00> : vector<2x512xf32>
    %179 = tpu.matmul %177, %178, %cst_53 {dimension_numbers = #tpu.dot_dimension_numbers<[1], [0], [0], [1], [0, 0, 1, 1], [], []>} : vector<2x128xbf16>, vector<128x512xbf16>, vector<2x512xf32> -> vector<2x512xf32>
    %c0_54 = arith.constant 0 : index
    %c5 = arith.constant 5 : index
    %c0_55 = arith.constant 0 : index
    %180 = vector.load %arg17[%c0_54, %c5, %c0_55] : memref<2x16x512xf32, #tpu.memory_space<vmem>>, vector<2x1x512xf32>
    %181 = vector.shape_cast %180 : vector<2x1x512xf32> to vector<2x512xf32>
    %182 = arith.addf %179, %181 : vector<2x512xf32>
    %183 = vector.extract_strided_slice %182 {offsets = [0, 0], sizes = [2, 128], strides = [1, 1]} : vector<2x512xf32> to vector<2x128xf32>
    %184 = arith.negf %183 : vector<2x128xf32>
    %185 = math.exp %184 : vector<2x128xf32>
    %cst_56 = arith.constant 1.000000e+00 : f32
    %186 = vector.broadcast %cst_56 : f32 to vector<2x128xf32>
    %187 = arith.addf %186, %185 : vector<2x128xf32>
    %188 = arith.divf %186, %187 : vector<2x128xf32>
    %189 = vector.extract_strided_slice %182 {offsets = [0, 128], sizes = [2, 128], strides = [1, 1]} : vector<2x512xf32> to vector<2x128xf32>
    %190 = arith.negf %189 : vector<2x128xf32>
    %191 = math.exp %190 : vector<2x128xf32>
    %cst_57 = arith.constant 1.000000e+00 : f32
    %192 = vector.broadcast %cst_57 : f32 to vector<2x128xf32>
    %193 = arith.addf %192, %191 : vector<2x128xf32>
    %194 = arith.divf %192, %193 : vector<2x128xf32>
    %195 = vector.extract_strided_slice %182 {offsets = [0, 256], sizes = [2, 128], strides = [1, 1]} : vector<2x512xf32> to vector<2x128xf32>
    %196 = math.tanh %195 : vector<2x128xf32>
    %197 = vector.extract_strided_slice %182 {offsets = [0, 384], sizes = [2, 128], strides = [1, 1]} : vector<2x512xf32> to vector<2x128xf32>
    %198 = arith.negf %197 : vector<2x128xf32>
    %199 = math.exp %198 : vector<2x128xf32>
    %cst_58 = arith.constant 1.000000e+00 : f32
    %200 = vector.broadcast %cst_58 : f32 to vector<2x128xf32>
    %201 = arith.addf %200, %199 : vector<2x128xf32>
    %202 = arith.divf %200, %201 : vector<2x128xf32>
    %203 = arith.mulf %194, %174 : vector<2x128xf32>
    %204 = arith.mulf %188, %196 : vector<2x128xf32>
    %205 = arith.addf %203, %204 : vector<2x128xf32>
    %206 = math.tanh %205 : vector<2x128xf32>
    %207 = arith.mulf %202, %206 : vector<2x128xf32>
    %208 = arith.truncf %207 : vector<2x128xf32> to vector<2x128xbf16>
    %c0_59 = arith.constant 0 : index
    %c0_60 = arith.constant 0 : index
    %209 = vector.load %arg3[%c0_59, %c0_60] : memref<128x512xbf16, #tpu.memory_space<vmem>>, vector<128x512xbf16>
    %cst_61 = arith.constant dense<0.000000e+00> : vector<2x512xf32>
    %210 = tpu.matmul %208, %209, %cst_61 {dimension_numbers = #tpu.dot_dimension_numbers<[1], [0], [0], [1], [0, 0, 1, 1], [], []>} : vector<2x128xbf16>, vector<128x512xbf16>, vector<2x512xf32> -> vector<2x512xf32>
    %c0_62 = arith.constant 0 : index
    %c6 = arith.constant 6 : index
    %c0_63 = arith.constant 0 : index
    %211 = vector.load %arg17[%c0_62, %c6, %c0_63] : memref<2x16x512xf32, #tpu.memory_space<vmem>>, vector<2x1x512xf32>
    %212 = vector.shape_cast %211 : vector<2x1x512xf32> to vector<2x512xf32>
    %213 = arith.addf %210, %212 : vector<2x512xf32>
    %214 = vector.extract_strided_slice %213 {offsets = [0, 0], sizes = [2, 128], strides = [1, 1]} : vector<2x512xf32> to vector<2x128xf32>
    %215 = arith.negf %214 : vector<2x128xf32>
    %216 = math.exp %215 : vector<2x128xf32>
    %cst_64 = arith.constant 1.000000e+00 : f32
    %217 = vector.broadcast %cst_64 : f32 to vector<2x128xf32>
    %218 = arith.addf %217, %216 : vector<2x128xf32>
    %219 = arith.divf %217, %218 : vector<2x128xf32>
    %220 = vector.extract_strided_slice %213 {offsets = [0, 128], sizes = [2, 128], strides = [1, 1]} : vector<2x512xf32> to vector<2x128xf32>
    %221 = arith.negf %220 : vector<2x128xf32>
    %222 = math.exp %221 : vector<2x128xf32>
    %cst_65 = arith.constant 1.000000e+00 : f32
    %223 = vector.broadcast %cst_65 : f32 to vector<2x128xf32>
    %224 = arith.addf %223, %222 : vector<2x128xf32>
    %225 = arith.divf %223, %224 : vector<2x128xf32>
    %226 = vector.extract_strided_slice %213 {offsets = [0, 256], sizes = [2, 128], strides = [1, 1]} : vector<2x512xf32> to vector<2x128xf32>
    %227 = math.tanh %226 : vector<2x128xf32>
    %228 = vector.extract_strided_slice %213 {offsets = [0, 384], sizes = [2, 128], strides = [1, 1]} : vector<2x512xf32> to vector<2x128xf32>
    %229 = arith.negf %228 : vector<2x128xf32>
    %230 = math.exp %229 : vector<2x128xf32>
    %cst_66 = arith.constant 1.000000e+00 : f32
    %231 = vector.broadcast %cst_66 : f32 to vector<2x128xf32>
    %232 = arith.addf %231, %230 : vector<2x128xf32>
    %233 = arith.divf %231, %232 : vector<2x128xf32>
    %234 = arith.mulf %225, %205 : vector<2x128xf32>
    %235 = arith.mulf %219, %227 : vector<2x128xf32>
    %236 = arith.addf %234, %235 : vector<2x128xf32>
    %237 = math.tanh %236 : vector<2x128xf32>
    %238 = arith.mulf %233, %237 : vector<2x128xf32>
    %239 = arith.truncf %238 : vector<2x128xf32> to vector<2x128xbf16>
    %c0_67 = arith.constant 0 : index
    %c0_68 = arith.constant 0 : index
    %240 = vector.load %arg3[%c0_67, %c0_68] : memref<128x512xbf16, #tpu.memory_space<vmem>>, vector<128x512xbf16>
    %cst_69 = arith.constant dense<0.000000e+00> : vector<2x512xf32>
    %241 = tpu.matmul %239, %240, %cst_69 {dimension_numbers = #tpu.dot_dimension_numbers<[1], [0], [0], [1], [0, 0, 1, 1], [], []>} : vector<2x128xbf16>, vector<128x512xbf16>, vector<2x512xf32> -> vector<2x512xf32>
    %c0_70 = arith.constant 0 : index
    %c7 = arith.constant 7 : index
    %c0_71 = arith.constant 0 : index
    %242 = vector.load %arg17[%c0_70, %c7, %c0_71] : memref<2x16x512xf32, #tpu.memory_space<vmem>>, vector<2x1x512xf32>
    %243 = vector.shape_cast %242 : vector<2x1x512xf32> to vector<2x512xf32>
    %244 = arith.addf %241, %243 : vector<2x512xf32>
    %245 = vector.extract_strided_slice %244 {offsets = [0, 0], sizes = [2, 128], strides = [1, 1]} : vector<2x512xf32> to vector<2x128xf32>
    %246 = arith.negf %245 : vector<2x128xf32>
    %247 = math.exp %246 : vector<2x128xf32>
    %cst_72 = arith.constant 1.000000e+00 : f32
    %248 = vector.broadcast %cst_72 : f32 to vector<2x128xf32>
    %249 = arith.addf %248, %247 : vector<2x128xf32>
    %250 = arith.divf %248, %249 : vector<2x128xf32>
    %251 = vector.extract_strided_slice %244 {offsets = [0, 128], sizes = [2, 128], strides = [1, 1]} : vector<2x512xf32> to vector<2x128xf32>
    %252 = arith.negf %251 : vector<2x128xf32>
    %253 = math.exp %252 : vector<2x128xf32>
    %cst_73 = arith.constant 1.000000e+00 : f32
    %254 = vector.broadcast %cst_73 : f32 to vector<2x128xf32>
    %255 = arith.addf %254, %253 : vector<2x128xf32>
    %256 = arith.divf %254, %255 : vector<2x128xf32>
    %257 = vector.extract_strided_slice %244 {offsets = [0, 256], sizes = [2, 128], strides = [1, 1]} : vector<2x512xf32> to vector<2x128xf32>
    %258 = math.tanh %257 : vector<2x128xf32>
    %259 = vector.extract_strided_slice %244 {offsets = [0, 384], sizes = [2, 128], strides = [1, 1]} : vector<2x512xf32> to vector<2x128xf32>
    %260 = arith.negf %259 : vector<2x128xf32>
    %261 = math.exp %260 : vector<2x128xf32>
    %cst_74 = arith.constant 1.000000e+00 : f32
    %262 = vector.broadcast %cst_74 : f32 to vector<2x128xf32>
    %263 = arith.addf %262, %261 : vector<2x128xf32>
    %264 = arith.divf %262, %263 : vector<2x128xf32>
    %265 = arith.mulf %256, %236 : vector<2x128xf32>
    %266 = arith.mulf %250, %258 : vector<2x128xf32>
    %267 = arith.addf %265, %266 : vector<2x128xf32>
    %268 = math.tanh %267 : vector<2x128xf32>
    %269 = arith.mulf %264, %268 : vector<2x128xf32>
    %270 = arith.truncf %269 : vector<2x128xf32> to vector<2x128xbf16>
    %c0_75 = arith.constant 0 : index
    %c0_76 = arith.constant 0 : index
    %271 = vector.load %arg3[%c0_75, %c0_76] : memref<128x512xbf16, #tpu.memory_space<vmem>>, vector<128x512xbf16>
    %cst_77 = arith.constant dense<0.000000e+00> : vector<2x512xf32>
    %272 = tpu.matmul %270, %271, %cst_77 {dimension_numbers = #tpu.dot_dimension_numbers<[1], [0], [0], [1], [0, 0, 1, 1], [], []>} : vector<2x128xbf16>, vector<128x512xbf16>, vector<2x512xf32> -> vector<2x512xf32>
    %c0_78 = arith.constant 0 : index
    %c8 = arith.constant 8 : index
    %c0_79 = arith.constant 0 : index
    %273 = vector.load %arg17[%c0_78, %c8, %c0_79] : memref<2x16x512xf32, #tpu.memory_space<vmem>>, vector<2x1x512xf32>
    %274 = vector.shape_cast %273 : vector<2x1x512xf32> to vector<2x512xf32>
    %275 = arith.addf %272, %274 : vector<2x512xf32>
    %276 = vector.extract_strided_slice %275 {offsets = [0, 0], sizes = [2, 128], strides = [1, 1]} : vector<2x512xf32> to vector<2x128xf32>
    %277 = arith.negf %276 : vector<2x128xf32>
    %278 = math.exp %277 : vector<2x128xf32>
    %cst_80 = arith.constant 1.000000e+00 : f32
    %279 = vector.broadcast %cst_80 : f32 to vector<2x128xf32>
    %280 = arith.addf %279, %278 : vector<2x128xf32>
    %281 = arith.divf %279, %280 : vector<2x128xf32>
    %282 = vector.extract_strided_slice %275 {offsets = [0, 128], sizes = [2, 128], strides = [1, 1]} : vector<2x512xf32> to vector<2x128xf32>
    %283 = arith.negf %282 : vector<2x128xf32>
    %284 = math.exp %283 : vector<2x128xf32>
    %cst_81 = arith.constant 1.000000e+00 : f32
    %285 = vector.broadcast %cst_81 : f32 to vector<2x128xf32>
    %286 = arith.addf %285, %284 : vector<2x128xf32>
    %287 = arith.divf %285, %286 : vector<2x128xf32>
    %288 = vector.extract_strided_slice %275 {offsets = [0, 256], sizes = [2, 128], strides = [1, 1]} : vector<2x512xf32> to vector<2x128xf32>
    %289 = math.tanh %288 : vector<2x128xf32>
    %290 = vector.extract_strided_slice %275 {offsets = [0, 384], sizes = [2, 128], strides = [1, 1]} : vector<2x512xf32> to vector<2x128xf32>
    %291 = arith.negf %290 : vector<2x128xf32>
    %292 = math.exp %291 : vector<2x128xf32>
    %cst_82 = arith.constant 1.000000e+00 : f32
    %293 = vector.broadcast %cst_82 : f32 to vector<2x128xf32>
    %294 = arith.addf %293, %292 : vector<2x128xf32>
    %295 = arith.divf %293, %294 : vector<2x128xf32>
    %296 = arith.mulf %287, %267 : vector<2x128xf32>
    %297 = arith.mulf %281, %289 : vector<2x128xf32>
    %298 = arith.addf %296, %297 : vector<2x128xf32>
    %299 = math.tanh %298 : vector<2x128xf32>
    %300 = arith.mulf %295, %299 : vector<2x128xf32>
    %301 = arith.truncf %300 : vector<2x128xf32> to vector<2x128xbf16>
    %c0_83 = arith.constant 0 : index
    %c0_84 = arith.constant 0 : index
    %302 = vector.load %arg3[%c0_83, %c0_84] : memref<128x512xbf16, #tpu.memory_space<vmem>>, vector<128x512xbf16>
    %cst_85 = arith.constant dense<0.000000e+00> : vector<2x512xf32>
    %303 = tpu.matmul %301, %302, %cst_85 {dimension_numbers = #tpu.dot_dimension_numbers<[1], [0], [0], [1], [0, 0, 1, 1], [], []>} : vector<2x128xbf16>, vector<128x512xbf16>, vector<2x512xf32> -> vector<2x512xf32>
    %c0_86 = arith.constant 0 : index
    %c9 = arith.constant 9 : index
    %c0_87 = arith.constant 0 : index
    %304 = vector.load %arg17[%c0_86, %c9, %c0_87] : memref<2x16x512xf32, #tpu.memory_space<vmem>>, vector<2x1x512xf32>
    %305 = vector.shape_cast %304 : vector<2x1x512xf32> to vector<2x512xf32>
    %306 = arith.addf %303, %305 : vector<2x512xf32>
    %307 = vector.extract_strided_slice %306 {offsets = [0, 0], sizes = [2, 128], strides = [1, 1]} : vector<2x512xf32> to vector<2x128xf32>
    %308 = arith.negf %307 : vector<2x128xf32>
    %309 = math.exp %308 : vector<2x128xf32>
    %cst_88 = arith.constant 1.000000e+00 : f32
    %310 = vector.broadcast %cst_88 : f32 to vector<2x128xf32>
    %311 = arith.addf %310, %309 : vector<2x128xf32>
    %312 = arith.divf %310, %311 : vector<2x128xf32>
    %313 = vector.extract_strided_slice %306 {offsets = [0, 128], sizes = [2, 128], strides = [1, 1]} : vector<2x512xf32> to vector<2x128xf32>
    %314 = arith.negf %313 : vector<2x128xf32>
    %315 = math.exp %314 : vector<2x128xf32>
    %cst_89 = arith.constant 1.000000e+00 : f32
    %316 = vector.broadcast %cst_89 : f32 to vector<2x128xf32>
    %317 = arith.addf %316, %315 : vector<2x128xf32>
    %318 = arith.divf %316, %317 : vector<2x128xf32>
    %319 = vector.extract_strided_slice %306 {offsets = [0, 256], sizes = [2, 128], strides = [1, 1]} : vector<2x512xf32> to vector<2x128xf32>
    %320 = math.tanh %319 : vector<2x128xf32>
    %321 = vector.extract_strided_slice %306 {offsets = [0, 384], sizes = [2, 128], strides = [1, 1]} : vector<2x512xf32> to vector<2x128xf32>
    %322 = arith.negf %321 : vector<2x128xf32>
    %323 = math.exp %322 : vector<2x128xf32>
    %cst_90 = arith.constant 1.000000e+00 : f32
    %324 = vector.broadcast %cst_90 : f32 to vector<2x128xf32>
    %325 = arith.addf %324, %323 : vector<2x128xf32>
    %326 = arith.divf %324, %325 : vector<2x128xf32>
    %327 = arith.mulf %318, %298 : vector<2x128xf32>
    %328 = arith.mulf %312, %320 : vector<2x128xf32>
    %329 = arith.addf %327, %328 : vector<2x128xf32>
    %330 = math.tanh %329 : vector<2x128xf32>
    %331 = arith.mulf %326, %330 : vector<2x128xf32>
    %332 = arith.truncf %331 : vector<2x128xf32> to vector<2x128xbf16>
    %c0_91 = arith.constant 0 : index
    %c0_92 = arith.constant 0 : index
    %333 = vector.load %arg3[%c0_91, %c0_92] : memref<128x512xbf16, #tpu.memory_space<vmem>>, vector<128x512xbf16>
    %cst_93 = arith.constant dense<0.000000e+00> : vector<2x512xf32>
    %334 = tpu.matmul %332, %333, %cst_93 {dimension_numbers = #tpu.dot_dimension_numbers<[1], [0], [0], [1], [0, 0, 1, 1], [], []>} : vector<2x128xbf16>, vector<128x512xbf16>, vector<2x512xf32> -> vector<2x512xf32>
    %c0_94 = arith.constant 0 : index
    %c10 = arith.constant 10 : index
    %c0_95 = arith.constant 0 : index
    %335 = vector.load %arg17[%c0_94, %c10, %c0_95] : memref<2x16x512xf32, #tpu.memory_space<vmem>>, vector<2x1x512xf32>
    %336 = vector.shape_cast %335 : vector<2x1x512xf32> to vector<2x512xf32>
    %337 = arith.addf %334, %336 : vector<2x512xf32>
    %338 = vector.extract_strided_slice %337 {offsets = [0, 0], sizes = [2, 128], strides = [1, 1]} : vector<2x512xf32> to vector<2x128xf32>
    %339 = arith.negf %338 : vector<2x128xf32>
    %340 = math.exp %339 : vector<2x128xf32>
    %cst_96 = arith.constant 1.000000e+00 : f32
    %341 = vector.broadcast %cst_96 : f32 to vector<2x128xf32>
    %342 = arith.addf %341, %340 : vector<2x128xf32>
    %343 = arith.divf %341, %342 : vector<2x128xf32>
    %344 = vector.extract_strided_slice %337 {offsets = [0, 128], sizes = [2, 128], strides = [1, 1]} : vector<2x512xf32> to vector<2x128xf32>
    %345 = arith.negf %344 : vector<2x128xf32>
    %346 = math.exp %345 : vector<2x128xf32>
    %cst_97 = arith.constant 1.000000e+00 : f32
    %347 = vector.broadcast %cst_97 : f32 to vector<2x128xf32>
    %348 = arith.addf %347, %346 : vector<2x128xf32>
    %349 = arith.divf %347, %348 : vector<2x128xf32>
    %350 = vector.extract_strided_slice %337 {offsets = [0, 256], sizes = [2, 128], strides = [1, 1]} : vector<2x512xf32> to vector<2x128xf32>
    %351 = math.tanh %350 : vector<2x128xf32>
    %352 = vector.extract_strided_slice %337 {offsets = [0, 384], sizes = [2, 128], strides = [1, 1]} : vector<2x512xf32> to vector<2x128xf32>
    %353 = arith.negf %352 : vector<2x128xf32>
    %354 = math.exp %353 : vector<2x128xf32>
    %cst_98 = arith.constant 1.000000e+00 : f32
    %355 = vector.broadcast %cst_98 : f32 to vector<2x128xf32>
    %356 = arith.addf %355, %354 : vector<2x128xf32>
    %357 = arith.divf %355, %356 : vector<2x128xf32>
    %358 = arith.mulf %349, %329 : vector<2x128xf32>
    %359 = arith.mulf %343, %351 : vector<2x128xf32>
    %360 = arith.addf %358, %359 : vector<2x128xf32>
    %361 = math.tanh %360 : vector<2x128xf32>
    %362 = arith.mulf %357, %361 : vector<2x128xf32>
    %363 = arith.truncf %362 : vector<2x128xf32> to vector<2x128xbf16>
    %c0_99 = arith.constant 0 : index
    %c0_100 = arith.constant 0 : index
    %364 = vector.load %arg3[%c0_99, %c0_100] : memref<128x512xbf16, #tpu.memory_space<vmem>>, vector<128x512xbf16>
    %cst_101 = arith.constant dense<0.000000e+00> : vector<2x512xf32>
    %365 = tpu.matmul %363, %364, %cst_101 {dimension_numbers = #tpu.dot_dimension_numbers<[1], [0], [0], [1], [0, 0, 1, 1], [], []>} : vector<2x128xbf16>, vector<128x512xbf16>, vector<2x512xf32> -> vector<2x512xf32>
    %c0_102 = arith.constant 0 : index
    %c11 = arith.constant 11 : index
    %c0_103 = arith.constant 0 : index
    %366 = vector.load %arg17[%c0_102, %c11, %c0_103] : memref<2x16x512xf32, #tpu.memory_space<vmem>>, vector<2x1x512xf32>
    %367 = vector.shape_cast %366 : vector<2x1x512xf32> to vector<2x512xf32>
    %368 = arith.addf %365, %367 : vector<2x512xf32>
    %369 = vector.extract_strided_slice %368 {offsets = [0, 0], sizes = [2, 128], strides = [1, 1]} : vector<2x512xf32> to vector<2x128xf32>
    %370 = arith.negf %369 : vector<2x128xf32>
    %371 = math.exp %370 : vector<2x128xf32>
    %cst_104 = arith.constant 1.000000e+00 : f32
    %372 = vector.broadcast %cst_104 : f32 to vector<2x128xf32>
    %373 = arith.addf %372, %371 : vector<2x128xf32>
    %374 = arith.divf %372, %373 : vector<2x128xf32>
    %375 = vector.extract_strided_slice %368 {offsets = [0, 128], sizes = [2, 128], strides = [1, 1]} : vector<2x512xf32> to vector<2x128xf32>
    %376 = arith.negf %375 : vector<2x128xf32>
    %377 = math.exp %376 : vector<2x128xf32>
    %cst_105 = arith.constant 1.000000e+00 : f32
    %378 = vector.broadcast %cst_105 : f32 to vector<2x128xf32>
    %379 = arith.addf %378, %377 : vector<2x128xf32>
    %380 = arith.divf %378, %379 : vector<2x128xf32>
    %381 = vector.extract_strided_slice %368 {offsets = [0, 256], sizes = [2, 128], strides = [1, 1]} : vector<2x512xf32> to vector<2x128xf32>
    %382 = math.tanh %381 : vector<2x128xf32>
    %383 = vector.extract_strided_slice %368 {offsets = [0, 384], sizes = [2, 128], strides = [1, 1]} : vector<2x512xf32> to vector<2x128xf32>
    %384 = arith.negf %383 : vector<2x128xf32>
    %385 = math.exp %384 : vector<2x128xf32>
    %cst_106 = arith.constant 1.000000e+00 : f32
    %386 = vector.broadcast %cst_106 : f32 to vector<2x128xf32>
    %387 = arith.addf %386, %385 : vector<2x128xf32>
    %388 = arith.divf %386, %387 : vector<2x128xf32>
    %389 = arith.mulf %380, %360 : vector<2x128xf32>
    %390 = arith.mulf %374, %382 : vector<2x128xf32>
    %391 = arith.addf %389, %390 : vector<2x128xf32>
    %392 = math.tanh %391 : vector<2x128xf32>
    %393 = arith.mulf %388, %392 : vector<2x128xf32>
    %394 = arith.truncf %393 : vector<2x128xf32> to vector<2x128xbf16>
    %c0_107 = arith.constant 0 : index
    %c0_108 = arith.constant 0 : index
    %395 = vector.load %arg3[%c0_107, %c0_108] : memref<128x512xbf16, #tpu.memory_space<vmem>>, vector<128x512xbf16>
    %cst_109 = arith.constant dense<0.000000e+00> : vector<2x512xf32>
    %396 = tpu.matmul %394, %395, %cst_109 {dimension_numbers = #tpu.dot_dimension_numbers<[1], [0], [0], [1], [0, 0, 1, 1], [], []>} : vector<2x128xbf16>, vector<128x512xbf16>, vector<2x512xf32> -> vector<2x512xf32>
    %c0_110 = arith.constant 0 : index
    %c12 = arith.constant 12 : index
    %c0_111 = arith.constant 0 : index
    %397 = vector.load %arg17[%c0_110, %c12, %c0_111] : memref<2x16x512xf32, #tpu.memory_space<vmem>>, vector<2x1x512xf32>
    %398 = vector.shape_cast %397 : vector<2x1x512xf32> to vector<2x512xf32>
    %399 = arith.addf %396, %398 : vector<2x512xf32>
    %400 = vector.extract_strided_slice %399 {offsets = [0, 0], sizes = [2, 128], strides = [1, 1]} : vector<2x512xf32> to vector<2x128xf32>
    %401 = arith.negf %400 : vector<2x128xf32>
    %402 = math.exp %401 : vector<2x128xf32>
    %cst_112 = arith.constant 1.000000e+00 : f32
    %403 = vector.broadcast %cst_112 : f32 to vector<2x128xf32>
    %404 = arith.addf %403, %402 : vector<2x128xf32>
    %405 = arith.divf %403, %404 : vector<2x128xf32>
    %406 = vector.extract_strided_slice %399 {offsets = [0, 128], sizes = [2, 128], strides = [1, 1]} : vector<2x512xf32> to vector<2x128xf32>
    %407 = arith.negf %406 : vector<2x128xf32>
    %408 = math.exp %407 : vector<2x128xf32>
    %cst_113 = arith.constant 1.000000e+00 : f32
    %409 = vector.broadcast %cst_113 : f32 to vector<2x128xf32>
    %410 = arith.addf %409, %408 : vector<2x128xf32>
    %411 = arith.divf %409, %410 : vector<2x128xf32>
    %412 = vector.extract_strided_slice %399 {offsets = [0, 256], sizes = [2, 128], strides = [1, 1]} : vector<2x512xf32> to vector<2x128xf32>
    %413 = math.tanh %412 : vector<2x128xf32>
    %414 = vector.extract_strided_slice %399 {offsets = [0, 384], sizes = [2, 128], strides = [1, 1]} : vector<2x512xf32> to vector<2x128xf32>
    %415 = arith.negf %414 : vector<2x128xf32>
    %416 = math.exp %415 : vector<2x128xf32>
    %cst_114 = arith.constant 1.000000e+00 : f32
    %417 = vector.broadcast %cst_114 : f32 to vector<2x128xf32>
    %418 = arith.addf %417, %416 : vector<2x128xf32>
    %419 = arith.divf %417, %418 : vector<2x128xf32>
    %420 = arith.mulf %411, %391 : vector<2x128xf32>
    %421 = arith.mulf %405, %413 : vector<2x128xf32>
    %422 = arith.addf %420, %421 : vector<2x128xf32>
    %423 = math.tanh %422 : vector<2x128xf32>
    %424 = arith.mulf %419, %423 : vector<2x128xf32>
    %425 = arith.truncf %424 : vector<2x128xf32> to vector<2x128xbf16>
    %c0_115 = arith.constant 0 : index
    %c0_116 = arith.constant 0 : index
    %426 = vector.load %arg3[%c0_115, %c0_116] : memref<128x512xbf16, #tpu.memory_space<vmem>>, vector<128x512xbf16>
    %cst_117 = arith.constant dense<0.000000e+00> : vector<2x512xf32>
    %427 = tpu.matmul %425, %426, %cst_117 {dimension_numbers = #tpu.dot_dimension_numbers<[1], [0], [0], [1], [0, 0, 1, 1], [], []>} : vector<2x128xbf16>, vector<128x512xbf16>, vector<2x512xf32> -> vector<2x512xf32>
    %c0_118 = arith.constant 0 : index
    %c13 = arith.constant 13 : index
    %c0_119 = arith.constant 0 : index
    %428 = vector.load %arg17[%c0_118, %c13, %c0_119] : memref<2x16x512xf32, #tpu.memory_space<vmem>>, vector<2x1x512xf32>
    %429 = vector.shape_cast %428 : vector<2x1x512xf32> to vector<2x512xf32>
    %430 = arith.addf %427, %429 : vector<2x512xf32>
    %431 = vector.extract_strided_slice %430 {offsets = [0, 0], sizes = [2, 128], strides = [1, 1]} : vector<2x512xf32> to vector<2x128xf32>
    %432 = arith.negf %431 : vector<2x128xf32>
    %433 = math.exp %432 : vector<2x128xf32>
    %cst_120 = arith.constant 1.000000e+00 : f32
    %434 = vector.broadcast %cst_120 : f32 to vector<2x128xf32>
    %435 = arith.addf %434, %433 : vector<2x128xf32>
    %436 = arith.divf %434, %435 : vector<2x128xf32>
    %437 = vector.extract_strided_slice %430 {offsets = [0, 128], sizes = [2, 128], strides = [1, 1]} : vector<2x512xf32> to vector<2x128xf32>
    %438 = arith.negf %437 : vector<2x128xf32>
    %439 = math.exp %438 : vector<2x128xf32>
    %cst_121 = arith.constant 1.000000e+00 : f32
    %440 = vector.broadcast %cst_121 : f32 to vector<2x128xf32>
    %441 = arith.addf %440, %439 : vector<2x128xf32>
    %442 = arith.divf %440, %441 : vector<2x128xf32>
    %443 = vector.extract_strided_slice %430 {offsets = [0, 256], sizes = [2, 128], strides = [1, 1]} : vector<2x512xf32> to vector<2x128xf32>
    %444 = math.tanh %443 : vector<2x128xf32>
    %445 = vector.extract_strided_slice %430 {offsets = [0, 384], sizes = [2, 128], strides = [1, 1]} : vector<2x512xf32> to vector<2x128xf32>
    %446 = arith.negf %445 : vector<2x128xf32>
    %447 = math.exp %446 : vector<2x128xf32>
    %cst_122 = arith.constant 1.000000e+00 : f32
    %448 = vector.broadcast %cst_122 : f32 to vector<2x128xf32>
    %449 = arith.addf %448, %447 : vector<2x128xf32>
    %450 = arith.divf %448, %449 : vector<2x128xf32>
    %451 = arith.mulf %442, %422 : vector<2x128xf32>
    %452 = arith.mulf %436, %444 : vector<2x128xf32>
    %453 = arith.addf %451, %452 : vector<2x128xf32>
    %454 = math.tanh %453 : vector<2x128xf32>
    %455 = arith.mulf %450, %454 : vector<2x128xf32>
    %456 = arith.truncf %455 : vector<2x128xf32> to vector<2x128xbf16>
    %c0_123 = arith.constant 0 : index
    %c0_124 = arith.constant 0 : index
    %457 = vector.load %arg3[%c0_123, %c0_124] : memref<128x512xbf16, #tpu.memory_space<vmem>>, vector<128x512xbf16>
    %cst_125 = arith.constant dense<0.000000e+00> : vector<2x512xf32>
    %458 = tpu.matmul %456, %457, %cst_125 {dimension_numbers = #tpu.dot_dimension_numbers<[1], [0], [0], [1], [0, 0, 1, 1], [], []>} : vector<2x128xbf16>, vector<128x512xbf16>, vector<2x512xf32> -> vector<2x512xf32>
    %c0_126 = arith.constant 0 : index
    %c14 = arith.constant 14 : index
    %c0_127 = arith.constant 0 : index
    %459 = vector.load %arg17[%c0_126, %c14, %c0_127] : memref<2x16x512xf32, #tpu.memory_space<vmem>>, vector<2x1x512xf32>
    %460 = vector.shape_cast %459 : vector<2x1x512xf32> to vector<2x512xf32>
    %461 = arith.addf %458, %460 : vector<2x512xf32>
    %462 = vector.extract_strided_slice %461 {offsets = [0, 0], sizes = [2, 128], strides = [1, 1]} : vector<2x512xf32> to vector<2x128xf32>
    %463 = arith.negf %462 : vector<2x128xf32>
    %464 = math.exp %463 : vector<2x128xf32>
    %cst_128 = arith.constant 1.000000e+00 : f32
    %465 = vector.broadcast %cst_128 : f32 to vector<2x128xf32>
    %466 = arith.addf %465, %464 : vector<2x128xf32>
    %467 = arith.divf %465, %466 : vector<2x128xf32>
    %468 = vector.extract_strided_slice %461 {offsets = [0, 128], sizes = [2, 128], strides = [1, 1]} : vector<2x512xf32> to vector<2x128xf32>
    %469 = arith.negf %468 : vector<2x128xf32>
    %470 = math.exp %469 : vector<2x128xf32>
    %cst_129 = arith.constant 1.000000e+00 : f32
    %471 = vector.broadcast %cst_129 : f32 to vector<2x128xf32>
    %472 = arith.addf %471, %470 : vector<2x128xf32>
    %473 = arith.divf %471, %472 : vector<2x128xf32>
    %474 = vector.extract_strided_slice %461 {offsets = [0, 256], sizes = [2, 128], strides = [1, 1]} : vector<2x512xf32> to vector<2x128xf32>
    %475 = math.tanh %474 : vector<2x128xf32>
    %476 = vector.extract_strided_slice %461 {offsets = [0, 384], sizes = [2, 128], strides = [1, 1]} : vector<2x512xf32> to vector<2x128xf32>
    %477 = arith.negf %476 : vector<2x128xf32>
    %478 = math.exp %477 : vector<2x128xf32>
    %cst_130 = arith.constant 1.000000e+00 : f32
    %479 = vector.broadcast %cst_130 : f32 to vector<2x128xf32>
    %480 = arith.addf %479, %478 : vector<2x128xf32>
    %481 = arith.divf %479, %480 : vector<2x128xf32>
    %482 = arith.mulf %473, %453 : vector<2x128xf32>
    %483 = arith.mulf %467, %475 : vector<2x128xf32>
    %484 = arith.addf %482, %483 : vector<2x128xf32>
    %485 = math.tanh %484 : vector<2x128xf32>
    %486 = arith.mulf %481, %485 : vector<2x128xf32>
    %487 = arith.truncf %486 : vector<2x128xf32> to vector<2x128xbf16>
    %c0_131 = arith.constant 0 : index
    %c0_132 = arith.constant 0 : index
    %488 = vector.load %arg3[%c0_131, %c0_132] : memref<128x512xbf16, #tpu.memory_space<vmem>>, vector<128x512xbf16>
    %cst_133 = arith.constant dense<0.000000e+00> : vector<2x512xf32>
    %489 = tpu.matmul %487, %488, %cst_133 {dimension_numbers = #tpu.dot_dimension_numbers<[1], [0], [0], [1], [0, 0, 1, 1], [], []>} : vector<2x128xbf16>, vector<128x512xbf16>, vector<2x512xf32> -> vector<2x512xf32>
    %c0_134 = arith.constant 0 : index
    %c15 = arith.constant 15 : index
    %c0_135 = arith.constant 0 : index
    %490 = vector.load %arg17[%c0_134, %c15, %c0_135] : memref<2x16x512xf32, #tpu.memory_space<vmem>>, vector<2x1x512xf32>
    %491 = vector.shape_cast %490 : vector<2x1x512xf32> to vector<2x512xf32>
    %492 = arith.addf %489, %491 : vector<2x512xf32>
    %493 = vector.extract_strided_slice %492 {offsets = [0, 0], sizes = [2, 128], strides = [1, 1]} : vector<2x512xf32> to vector<2x128xf32>
    %494 = arith.negf %493 : vector<2x128xf32>
    %495 = math.exp %494 : vector<2x128xf32>
    %cst_136 = arith.constant 1.000000e+00 : f32
    %496 = vector.broadcast %cst_136 : f32 to vector<2x128xf32>
    %497 = arith.addf %496, %495 : vector<2x128xf32>
    %498 = arith.divf %496, %497 : vector<2x128xf32>
    %499 = vector.extract_strided_slice %492 {offsets = [0, 128], sizes = [2, 128], strides = [1, 1]} : vector<2x512xf32> to vector<2x128xf32>
    %500 = arith.negf %499 : vector<2x128xf32>
    %501 = math.exp %500 : vector<2x128xf32>
    %cst_137 = arith.constant 1.000000e+00 : f32
    %502 = vector.broadcast %cst_137 : f32 to vector<2x128xf32>
    %503 = arith.addf %502, %501 : vector<2x128xf32>
    %504 = arith.divf %502, %503 : vector<2x128xf32>
    %505 = vector.extract_strided_slice %492 {offsets = [0, 256], sizes = [2, 128], strides = [1, 1]} : vector<2x512xf32> to vector<2x128xf32>
    %506 = math.tanh %505 : vector<2x128xf32>
    %507 = vector.extract_strided_slice %492 {offsets = [0, 384], sizes = [2, 128], strides = [1, 1]} : vector<2x512xf32> to vector<2x128xf32>
    %508 = arith.negf %507 : vector<2x128xf32>
    %509 = math.exp %508 : vector<2x128xf32>
    %cst_138 = arith.constant 1.000000e+00 : f32
    %510 = vector.broadcast %cst_138 : f32 to vector<2x128xf32>
    %511 = arith.addf %510, %509 : vector<2x128xf32>
    %512 = arith.divf %510, %511 : vector<2x128xf32>
    %513 = arith.mulf %504, %484 : vector<2x128xf32>
    %514 = arith.mulf %498, %506 : vector<2x128xf32>
    %515 = arith.addf %513, %514 : vector<2x128xf32>
    %516 = math.tanh %515 : vector<2x128xf32>
    %517 = arith.mulf %512, %516 : vector<2x128xf32>
    %c0_139 = arith.constant 0 : index
    %c0_140 = arith.constant 0 : index
    %c0_141 = arith.constant 0 : index
    %518 = vector.load %arg1[%c0_139, %c0_140, %c0_141] : memref<2x9x16xf32, #tpu.memory_space<vmem>>, vector<2x9x16xf32>
    %519 = arith.truncf %518 : vector<2x9x16xf32> to vector<2x9x16xbf16>
    %520 = vector.shape_cast %519 : vector<2x9x16xbf16> to vector<18x16xbf16>
    %c0_142 = arith.constant 0 : index
    %c0_143 = arith.constant 0 : index
    %521 = vector.load %arg5[%c0_142, %c0_143] : memref<16x128xbf16, #tpu.memory_space<vmem>>, vector<16x128xbf16>
    %cst_144 = arith.constant dense<0.000000e+00> : vector<18x128xf32>
    %522 = tpu.matmul %520, %521, %cst_144 {dimension_numbers = #tpu.dot_dimension_numbers<[1], [0], [0], [1], [0, 0, 1, 1], [], []>} : vector<18x16xbf16>, vector<16x128xbf16>, vector<18x128xf32> -> vector<18x128xf32>
    %523 = vector.shape_cast %522 : vector<18x128xf32> to vector<2x9x128xf32>
    %c0_145 = arith.constant 0 : index
    %c0_146 = arith.constant 0 : index
    %524 = vector.load %arg6[%c0_145, %c0_146] : memref<1x128xf32, #tpu.memory_space<vmem>>, vector<1x128xf32>
    %525 = vector.shape_cast %524 : vector<1x128xf32> to vector<1x1x128xf32>
    %526 = vector.broadcast %525 : vector<1x1x128xf32> to vector<2x9x128xf32>
    %527 = arith.mulf %523, %526 : vector<2x9x128xf32>
    %c0_147 = arith.constant 0 : index
    %c0_148 = arith.constant 0 : index
    %528 = vector.load %arg7[%c0_147, %c0_148] : memref<1x128xf32, #tpu.memory_space<vmem>>, vector<1x128xf32>
    %529 = vector.shape_cast %528 : vector<1x128xf32> to vector<1x1x128xf32>
    %530 = vector.broadcast %529 : vector<1x1x128xf32> to vector<2x9x128xf32>
    %531 = arith.addf %527, %530 : vector<2x9x128xf32>
    %cst_149 = arith.constant 0.000000e+00 : f32
    %532 = vector.broadcast %cst_149 : f32 to vector<2x9x128xf32>
    %533 = arith.maximumf %531, %532 : vector<2x9x128xf32>
    %534 = arith.truncf %533 : vector<2x9x128xf32> to vector<2x9x128xbf16>
    %535 = vector.extract_strided_slice %534 {offsets = [0, 0, 0], sizes = [2, 5, 128], strides = [1, 1, 1]} : vector<2x9x128xbf16> to vector<2x5x128xbf16>
    %536 = vector.extract_strided_slice %534 {offsets = [0, 1, 0], sizes = [2, 5, 128], strides = [1, 1, 1]} : vector<2x9x128xbf16> to vector<2x5x128xbf16>
    %537 = vector.extract_strided_slice %534 {offsets = [0, 2, 0], sizes = [2, 5, 128], strides = [1, 1, 1]} : vector<2x9x128xbf16> to vector<2x5x128xbf16>
    %538 = vector.extract_strided_slice %534 {offsets = [0, 3, 0], sizes = [2, 5, 128], strides = [1, 1, 1]} : vector<2x9x128xbf16> to vector<2x5x128xbf16>
    %539 = vector.extract_strided_slice %534 {offsets = [0, 4, 0], sizes = [2, 5, 128], strides = [1, 1, 1]} : vector<2x9x128xbf16> to vector<2x5x128xbf16>
    %540 = tpu.concatenate %535, %536, %537, %538, %539 in 2 : vector<2x5x128xbf16>, vector<2x5x128xbf16>, vector<2x5x128xbf16>, vector<2x5x128xbf16>, vector<2x5x128xbf16> -> vector<2x5x640xbf16>
    %541 = vector.shape_cast %540 : vector<2x5x640xbf16> to vector<10x640xbf16>
    %c0_150 = arith.constant 0 : index
    %c0_151 = arith.constant 0 : index
    %542 = vector.load %arg8[%c0_150, %c0_151] : memref<640x256xbf16, #tpu.memory_space<vmem>>, vector<640x256xbf16>
    %cst_152 = arith.constant dense<0.000000e+00> : vector<10x256xf32>
    %543 = tpu.matmul %541, %542, %cst_152 {dimension_numbers = #tpu.dot_dimension_numbers<[1], [0], [0], [1], [0, 0, 1, 1], [], []>} : vector<10x640xbf16>, vector<640x256xbf16>, vector<10x256xf32> -> vector<10x256xf32>
    %544 = vector.shape_cast %543 : vector<10x256xf32> to vector<2x5x256xf32>
    %c0_153 = arith.constant 0 : index
    %c0_154 = arith.constant 0 : index
    %545 = vector.load %arg9[%c0_153, %c0_154] : memref<1x256xf32, #tpu.memory_space<vmem>>, vector<1x256xf32>
    %546 = vector.shape_cast %545 : vector<1x256xf32> to vector<1x1x256xf32>
    %547 = vector.broadcast %546 : vector<1x1x256xf32> to vector<2x5x256xf32>
    %548 = arith.mulf %544, %547 : vector<2x5x256xf32>
    %c0_155 = arith.constant 0 : index
    %c0_156 = arith.constant 0 : index
    %549 = vector.load %arg10[%c0_155, %c0_156] : memref<1x256xf32, #tpu.memory_space<vmem>>, vector<1x256xf32>
    %550 = vector.shape_cast %549 : vector<1x256xf32> to vector<1x1x256xf32>
    %551 = vector.broadcast %550 : vector<1x1x256xf32> to vector<2x5x256xf32>
    %552 = arith.addf %548, %551 : vector<2x5x256xf32>
    %cst_157 = arith.constant 0.000000e+00 : f32
    %553 = vector.broadcast %cst_157 : f32 to vector<2x5x256xf32>
    %554 = arith.maximumf %552, %553 : vector<2x5x256xf32>
    %555 = arith.truncf %554 : vector<2x5x256xf32> to vector<2x5x256xbf16>
    %556 = vector.extract_strided_slice %555 {offsets = [0, 0, 0], sizes = [2, 3, 256], strides = [1, 1, 1]} : vector<2x5x256xbf16> to vector<2x3x256xbf16>
    %557 = vector.extract_strided_slice %555 {offsets = [0, 1, 0], sizes = [2, 3, 256], strides = [1, 1, 1]} : vector<2x5x256xbf16> to vector<2x3x256xbf16>
    %558 = vector.extract_strided_slice %555 {offsets = [0, 2, 0], sizes = [2, 3, 256], strides = [1, 1, 1]} : vector<2x5x256xbf16> to vector<2x3x256xbf16>
    %559 = tpu.concatenate %556, %557, %558 in 2 : vector<2x3x256xbf16>, vector<2x3x256xbf16>, vector<2x3x256xbf16> -> vector<2x3x768xbf16>
    %560 = vector.shape_cast %559 : vector<2x3x768xbf16> to vector<6x768xbf16>
    %c0_158 = arith.constant 0 : index
    %c0_159 = arith.constant 0 : index
    %561 = vector.load %arg11[%c0_158, %c0_159] : memref<768x128xbf16, #tpu.memory_space<vmem>>, vector<768x128xbf16>
    %cst_160 = arith.constant dense<0.000000e+00> : vector<6x128xf32>
    %562 = tpu.matmul %560, %561, %cst_160 {dimension_numbers = #tpu.dot_dimension_numbers<[1], [0], [0], [1], [0, 0, 1, 1], [], []>} : vector<6x768xbf16>, vector<768x128xbf16>, vector<6x128xf32> -> vector<6x128xf32>
    %563 = vector.shape_cast %562 : vector<6x128xf32> to vector<2x3x128xf32>
    %c0_161 = arith.constant 0 : index
    %c0_162 = arith.constant 0 : index
    %564 = vector.load %arg12[%c0_161, %c0_162] : memref<1x128xf32, #tpu.memory_space<vmem>>, vector<1x128xf32>
    %565 = vector.shape_cast %564 : vector<1x128xf32> to vector<1x1x128xf32>
    %566 = vector.broadcast %565 : vector<1x1x128xf32> to vector<2x3x128xf32>
    %567 = arith.mulf %563, %566 : vector<2x3x128xf32>
    %c0_163 = arith.constant 0 : index
    %c0_164 = arith.constant 0 : index
    %568 = vector.load %arg13[%c0_163, %c0_164] : memref<1x128xf32, #tpu.memory_space<vmem>>, vector<1x128xf32>
    %569 = vector.shape_cast %568 : vector<1x128xf32> to vector<1x1x128xf32>
    %570 = vector.broadcast %569 : vector<1x1x128xf32> to vector<2x3x128xf32>
    %571 = arith.addf %567, %570 : vector<2x3x128xf32>
    %cst_165 = arith.constant 0.000000e+00 : f32
    %572 = vector.broadcast %cst_165 : f32 to vector<2x3x128xf32>
    %573 = arith.maximumf %571, %572 : vector<2x3x128xf32>
    %cst_166 = arith.constant dense<0.000000e+00> : vector<2x128xf32>
    %574 = vector.multi_reduction <add>, %573, %cst_166 [1] : vector<2x3x128xf32> to vector<2x128xf32>
    %cst_167 = arith.constant 3.000000e+00 : f32
    %575 = vector.broadcast %cst_167 : f32 to vector<2x128xf32>
    %576 = arith.divf %574, %575 : vector<2x128xf32>
    %577 = tpu.concatenate %517, %576 in 1 : vector<2x128xf32>, vector<2x128xf32> -> vector<2x256xf32>
    %578 = arith.truncf %577 : vector<2x256xf32> to vector<2x256xbf16>
    %c0_168 = arith.constant 0 : index
    %c0_169 = arith.constant 0 : index
    %579 = vector.load %arg14[%c0_168, %c0_169] : memref<256x128xbf16, #tpu.memory_space<vmem>>, vector<256x128xbf16>
    %cst_170 = arith.constant dense<0.000000e+00> : vector<2x128xf32>
    %580 = tpu.matmul %578, %579, %cst_170 {dimension_numbers = #tpu.dot_dimension_numbers<[1], [0], [0], [1], [0, 0, 1, 1], [], []>} : vector<2x256xbf16>, vector<256x128xbf16>, vector<2x128xf32> -> vector<2x128xf32>
    %c0_171 = arith.constant 0 : index
    %c0_172 = arith.constant 0 : index
    %581 = vector.load %arg15[%c0_171, %c0_172] : memref<1x128xf32, #tpu.memory_space<vmem>>, vector<1x128xf32>
    %582 = vector.broadcast %581 : vector<1x128xf32> to vector<2x128xf32>
    %583 = arith.addf %580, %582 : vector<2x128xf32>
    %c0_173 = arith.constant 0 : index
    %c0_174 = arith.constant 0 : index
    %584 = vector.load %arg16[%c0_173, %c0_174] : memref<2x128xf32, #tpu.memory_space<vmem>>, vector<2x128xf32>
    tpu.vector_store %arg16[%c0_173, %c0_174], %583 {strides = array<i32>} : memref<2x128xf32, #tpu.memory_space<vmem>>, vector<2x128xf32>,
    return
  }
}

</mosaic_0001>

<llo_original>
// kernel: lstm_temporal_forward.1
$region0: #{lstm_temporal_forward.1}
  #allocation0 [shape = 'u32[]', space=smem, size = 0x4, offset = 0x4, fixed_abs, tag = 'smem constant byte address 0x4 - core index']
  #allocation1 [shape = 'u32[144,128]{1,0:T(1,128)}', space=vmem, size = 0x12000, scoped, tag = 'internal scratch']
  #allocation2 [shape = 'f32[2,16,512]{2,1,0:T(8,128)}', space=vmem, size = 0x10000, scoped, tag = 'scratch operand']
  %s0 = inlined_call_operand.vmem [shape: f32[2,16,2], index: 0, kind: input, shape index: {}]
  %s1 = inlined_call_operand.vmem [shape: f32[2,9,16], index: 1, kind: input, shape index: {}]
  %s2 = inlined_call_operand.vmem [shape: f32[2,512], index: 2, kind: input, shape index: {}]
  %s3 = inlined_call_operand.vmem [shape: bf16[128,512], index: 3, kind: input, shape index: {}]
  %s4 = inlined_call_operand.vmem [shape: f32[1,512], index: 4, kind: input, shape index: {}]
  %s5 = inlined_call_operand.vmem [shape: bf16[16,128], index: 5, kind: input, shape index: {}]
  %s6 = inlined_call_operand.vmem [shape: f32[1,128], index: 6, kind: input, shape index: {}]
  %s7 = inlined_call_operand.vmem [shape: f32[1,128], index: 7, kind: input, shape index: {}]
  %s8 = inlined_call_operand.vmem [shape: bf16[640,256], index: 8, kind: input, shape index: {}]
  %s9 = inlined_call_operand.vmem [shape: f32[1,256], index: 9, kind: input, shape index: {}]
  %s10 = inlined_call_operand.vmem [shape: f32[1,256], index: 10, kind: input, shape index: {}]
  %s11 = inlined_call_operand.vmem [shape: bf16[768,128], index: 11, kind: input, shape index: {}]
  %s12 = inlined_call_operand.vmem [shape: f32[1,128], index: 12, kind: input, shape index: {}]
  %s13 = inlined_call_operand.vmem [shape: f32[1,128], index: 13, kind: input, shape index: {}]
  %s14 = inlined_call_operand.vmem [shape: bf16[256,128], index: 14, kind: input, shape index: {}]
  %s15 = inlined_call_operand.vmem [shape: f32[1,128], index: 15, kind: input, shape index: {}]
  %s16 = inlined_call_operand.hbm [shape: f32[2,128], index: 16, kind: output, shape index: {}]
  %s17 = sld [smem:[#allocation0]]
  $region74: #{lstm_temporal_forward.1} parent=0
    _
  %s19 = ssub.s32 1, %s17
  %s20 = scalar_select 0, %s19, %s17
  $region1: #{lstm_temporal_forward.1} parent=0
    #allocation3 [shape = 'u8[1024]{0}', space=vmem, size = 0x400, scoped, tag = 'output window, operand 0, single buffered']
    #allocation4 [shape = 's32[1]{0}', space=sflag, size = 0x4, scoped, tag = 'scoped memory for lstm_temporal_forward.1']
    %21 = vsyncpa [#allocation4], 0
    // Predicated region
    $region2: #{lstm_temporal_forward.1} parent=1 // pred_check
      _
    $region3: #{lstm_temporal_forward.1} parent=1 // pred_check_branch
      %23 = sbr.rel (0) target = $region5
    $region4: #{lstm_temporal_forward.1} parent=1 // pred_region
      _
    $region5: #{lstm_temporal_forward.1} parent=1 // pred_fallthru
      _
    // Predicated region
    $region6: #{lstm_temporal_forward.1} parent=1 // pred_check
      _
    $region7: #{lstm_temporal_forward.1} parent=1 // pred_check_branch
      %25 = sbr.rel (0) target = $region9
    $region8: #{lstm_temporal_forward.1} parent=1 // pred_region
      _
    $region9: #{lstm_temporal_forward.1} parent=1 // pred_fallthru
      _
    // Predicated region
    $region10: #{lstm_temporal_forward.1} parent=1 // pred_check
      _
    $region11: #{lstm_temporal_forward.1} parent=1 // pred_check_branch
      %27 = sbr.rel (0) target = $region13
    $region12: #{lstm_temporal_forward.1} parent=1 // pred_region
      _
    $region13: #{lstm_temporal_forward.1} parent=1 // pred_fallthru
      _
    // Predicated region
    $region14: #{lstm_temporal_forward.1} parent=1 // pred_check
      _
    $region15: #{lstm_temporal_forward.1} parent=1 // pred_check_branch
      %29 = sbr.rel (0) target = $region17
    $region16: #{lstm_temporal_forward.1} parent=1 // pred_region
      _
    $region17: #{lstm_temporal_forward.1} parent=1 // pred_fallthru
      _
    // Predicated region
    $region18: #{lstm_temporal_forward.1} parent=1 // pred_check
      _
    $region19: #{lstm_temporal_forward.1} parent=1 // pred_check_branch
      %31 = sbr.rel (0) target = $region21
    $region20: #{lstm_temporal_forward.1} parent=1 // pred_region
      _
    $region21: #{lstm_temporal_forward.1} parent=1 // pred_fallthru
      _
    // Predicated region
    $region22: #{lstm_temporal_forward.1} parent=1 // pred_check
      _
    $region23: #{lstm_temporal_forward.1} parent=1 // pred_check_branch
      %33 = sbr.rel (0) target = $region25
    $region24: #{lstm_temporal_forward.1} parent=1 // pred_region
      _
    $region25: #{lstm_temporal_forward.1} parent=1 // pred_fallthru
      _
    // Predicated region
    $region26: #{lstm_temporal_forward.1} parent=1 // pred_check
      _
    $region27: #{lstm_temporal_forward.1} parent=1 // pred_check_branch
      %35 = sbr.rel (0) target = $region29
    $region28: #{lstm_temporal_forward.1} parent=1 // pred_region
      _
    $region29: #{lstm_temporal_forward.1} parent=1 // pred_fallthru
      _
    // Predicated region
    $region30: #{lstm_temporal_forward.1} parent=1 // pred_check
      _
    $region31: #{lstm_temporal_forward.1} parent=1 // pred_check_branch
      %37 = sbr.rel (0) target = $region33
    $region32: #{lstm_temporal_forward.1} parent=1 // pred_region
      _
    $region33: #{lstm_temporal_forward.1} parent=1 // pred_fallthru
      _
    // Predicated region
    $region34: #{lstm_temporal_forward.1} parent=1 // pred_check
      _
    $region35: #{lstm_temporal_forward.1} parent=1 // pred_check_branch
      %39 = sbr.rel (0) target = $region37
    $region36: #{lstm_temporal_forward.1} parent=1 // pred_region
      _
    $region37: #{lstm_temporal_forward.1} parent=1 // pred_fallthru
      _
    // Predicated region
    $region38: #{lstm_temporal_forward.1} parent=1 // pred_check
      _
    $region39: #{lstm_temporal_forward.1} parent=1 // pred_check_branch
      %41 = sbr.rel (0) target = $region41
    $region40: #{lstm_temporal_forward.1} parent=1 // pred_region
      _
    $region41: #{lstm_temporal_forward.1} parent=1 // pred_fallthru
      _
    // Predicated region
    $region42: #{lstm_temporal_forward.1} parent=1 // pred_check
      _
    $region43: #{lstm_temporal_forward.1} parent=1 // pred_check_branch
      %43 = sbr.rel (0) target = $region45
    $region44: #{lstm_temporal_forward.1} parent=1 // pred_region
      _
    $region45: #{lstm_temporal_forward.1} parent=1 // pred_fallthru
      _
    // Predicated region
    $region46: #{lstm_temporal_forward.1} parent=1 // pred_check
      _
    $region47: #{lstm_temporal_forward.1} parent=1 // pred_check_branch
      %45 = sbr.rel (0) target = $region49
    $region48: #{lstm_temporal_forward.1} parent=1 // pred_region
      _
    $region49: #{lstm_temporal_forward.1} parent=1 // pred_fallthru
      _
    // Predicated region
    $region50: #{lstm_temporal_forward.1} parent=1 // pred_check
      _
    $region51: #{lstm_temporal_forward.1} parent=1 // pred_check_branch
      %47 = sbr.rel (0) target = $region53
    $region52: #{lstm_temporal_forward.1} parent=1 // pred_region
      _
    $region53: #{lstm_temporal_forward.1} parent=1 // pred_fallthru
      _
    // Predicated region
    $region54: #{lstm_temporal_forward.1} parent=1 // pred_check
      _
    $region55: #{lstm_temporal_forward.1} parent=1 // pred_check_branch
      %49 = sbr.rel (0) target = $region57
    $region56: #{lstm_temporal_forward.1} parent=1 // pred_region
      _
    $region57: #{lstm_temporal_forward.1} parent=1 // pred_fallthru
      _
    // Predicated region
    $region58: #{lstm_temporal_forward.1} parent=1 // pred_check
      _
    $region59: #{lstm_temporal_forward.1} parent=1 // pred_check_branch
      %51 = sbr.rel (0) target = $region61
    $region60: #{lstm_temporal_forward.1} parent=1 // pred_region
      _
    $region61: #{lstm_temporal_forward.1} parent=1 // pred_fallthru
      _
    // Predicated region
    $region62: #{lstm_temporal_forward.1} parent=1 // pred_check
      _
    $region63: #{lstm_temporal_forward.1} parent=1 // pred_check_branch
      %53 = sbr.rel (0) target = $region65
    $region64: #{lstm_temporal_forward.1} parent=1 // pred_region
      _
    $region65: #{lstm_temporal_forward.1} parent=1 // pred_fallthru
      _
    %v55 = vld [vmem:[%s0] sm:$0xff]
    %v56 = vld [vmem:[%s0 + $0x8] sm:$0xff]
    %v57 = vld [vmem:[%s0 + $0x10] sm:$0xff]
    %v58 = vld [vmem:[%s0 + $0x18] sm:$0xff]
    %v59 = vld [vmem:[%s2] sm:$0xff]
    %v60 = vld [vmem:[%s4] sm:$0xf]
    %62 = vset.pattern.permute.xlu0 0
    %63 = vperm.xlu0 %62, %v55
    %v64 = vpop.permute.xlu0 %63
    %67 = vset.pattern.permute.xlu0 0
    %68 = vperm.xlu0 %67, %v56
    %v69 = vpop.permute.xlu0 %68
    %72 = vset.pattern.permute.xlu0 0
    %73 = vperm.xlu0 %72, %v57
    %v74 = vpop.permute.xlu0 %73
    %77 = vset.pattern.permute.xlu0 0
    %78 = vperm.xlu0 %77, %v58
    %v79 = vpop.permute.xlu0 %78
    %v82 = vlaneseq
    %v83 = vshrl.u32 %v82, 7
    %v84 = vsub.s32 0, %v83
    %v85 = vrot.slane %v59, %v84
    %v86 = vlaneseq
    %v87 = vshrl.u32 %v86, 7
    %v88 = vsub.s32 2, %v87
    %v89 = vrot.slane %v59, %v88
    %v90 = vlaneseq
    %v91 = vshrl.u32 %v90, 7
    %v92 = vsub.s32 4, %v91
    %v93 = vrot.slane %v59, %v92
    %v94 = vlaneseq
    %v95 = vshrl.u32 %v94, 7
    %v96 = vsub.s32 6, %v95
    %v97 = vrot.slane %v59, %v96
    %v102 = vlaneseq
    %v103 = vshrl.u32 %v102, 7
    %v104 = vsub.s32 0, %v103
    %v105 = vrot.slane %v85, %v104
    %v106 = vlaneseq
    %v107 = vshrl.u32 %v106, 7
    %v108 = vsub.s32 0, %v107
    %v109 = vrot.slane %v89, %v108
    %v110 = vlaneseq
    %v111 = vshrl.u32 %v110, 7
    %v112 = vsub.s32 0, %v111
    %v113 = vrot.slane %v93, %v112
    %v114 = vlaneseq
    %v115 = vshrl.u32 %v114, 7
    %v116 = vsub.s32 0, %v115
    %v117 = vrot.slane %v97, %v116
    %v118 = vmul.f32 %v64, %v105
    %v119 = vmul.f32 %v64, %v109
    %v120 = vmul.f32 %v64, %v113
    %v121 = vmul.f32 %v64, %v117
    %v122 = vmul.f32 %v69, %v105
    %v123 = vmul.f32 %v69, %v109
    %v124 = vmul.f32 %v69, %v113
    %v125 = vmul.f32 %v69, %v117
    %v126 = vmul.f32 %v74, %v105
    %v127 = vmul.f32 %v74, %v109
    %v128 = vmul.f32 %v74, %v113
    %v129 = vmul.f32 %v74, %v117
    %v130 = vmul.f32 %v79, %v105
    %v131 = vmul.f32 %v79, %v109
    %v132 = vmul.f32 %v79, %v113
    %v133 = vmul.f32 %v79, %v117
    %v135 = vlaneseq
    %v136 = vshrl.u32 %v135, 7
    %v137 = vsub.s32 0, %v136
    %v138 = vrot.slane %v60, %v137
    %v139 = vlaneseq
    %v140 = vshrl.u32 %v139, 7
    %v141 = vsub.s32 1, %v140
    %v142 = vrot.slane %v60, %v141
    %v143 = vlaneseq
    %v144 = vshrl.u32 %v143, 7
    %v145 = vsub.s32 2, %v144
    %v146 = vrot.slane %v60, %v145
    %v147 = vlaneseq
    %v148 = vshrl.u32 %v147, 7
    %v149 = vsub.s32 3, %v148
    %v150 = vrot.slane %v60, %v149
    %v155 = vadd.f32 %v138, %v118
    %v156 = vadd.f32 %v142, %v119
    %v157 = vadd.f32 %v146, %v120
    %v158 = vadd.f32 %v150, %v121
    %v159 = vadd.f32 %v138, %v122
    %v160 = vadd.f32 %v142, %v123
    %v161 = vadd.f32 %v146, %v124
    %v162 = vadd.f32 %v150, %v125
    %v163 = vadd.f32 %v138, %v126
    %v164 = vadd.f32 %v142, %v127
    %v165 = vadd.f32 %v146, %v128
    %v166 = vadd.f32 %v150, %v129
    %v167 = vadd.f32 %v138, %v130
    %v168 = vadd.f32 %v142, %v131
    %v169 = vadd.f32 %v146, %v132
    %v170 = vadd.f32 %v150, %v133
    %171 = vset.pattern.permute.xlu0 1
    %172 = vperm.xlu0 %171, %v55
    %v173 = vpop.permute.xlu0 %172
    %175 = vset.pattern.permute.xlu0 1
    %176 = vperm.xlu0 %175, %v56
    %v177 = vpop.permute.xlu0 %176
    %179 = vset.pattern.permute.xlu0 1
    %180 = vperm.xlu0 %179, %v57
    %v181 = vpop.permute.xlu0 %180
    %183 = vset.pattern.permute.xlu0 1
    %184 = vperm.xlu0 %183, %v58
    %v185 = vpop.permute.xlu0 %184
    %v187 = vlaneseq
    %v188 = vshrl.u32 %v187, 7
    %v189 = vsub.s32 1, %v188
    %v190 = vrot.slane %v59, %v189
    %v191 = vlaneseq
    %v192 = vshrl.u32 %v191, 7
    %v193 = vsub.s32 3, %v192
    %v194 = vrot.slane %v59, %v193
    %v195 = vlaneseq
    %v196 = vshrl.u32 %v195, 7
    %v197 = vsub.s32 5, %v196
    %v198 = vrot.slane %v59, %v197
    %v199 = vlaneseq
    %v200 = vshrl.u32 %v199, 7
    %v201 = vsub.s32 7, %v200
    %v202 = vrot.slane %v59, %v201
    %v207 = vlaneseq
    %v208 = vshrl.u32 %v207, 7
    %v209 = vsub.s32 1, %v208
    %v210 = vrot.slane %v190, %v209
    %v211 = vlaneseq
    %v212 = vshrl.u32 %v211, 7
    %v213 = vsub.s32 1, %v212
    %v214 = vrot.slane %v194, %v213
    %v215 = vlaneseq
    %v216 = vshrl.u32 %v215, 7
    %v217 = vsub.s32 1, %v216
    %v218 = vrot.slane %v198, %v217
    %v219 = vlaneseq
    %v220 = vshrl.u32 %v219, 7
    %v221 = vsub.s32 1, %v220
    %v222 = vrot.slane %v202, %v221
    %v223 = vmul.f32 %v173, %v210
    %v224 = vmul.f32 %v173, %v214
    %v225 = vmul.f32 %v173, %v218
    %v226 = vmul.f32 %v173, %v222
    %v227 = vmul.f32 %v177, %v210
    %v228 = vmul.f32 %v177, %v214
    %v229 = vmul.f32 %v177, %v218
    %v230 = vmul.f32 %v177, %v222
    %v231 = vmul.f32 %v181, %v210
    %v232 = vmul.f32 %v181, %v214
    %v233 = vmul.f32 %v181, %v218
    %v234 = vmul.f32 %v181, %v222
    %v235 = vmul.f32 %v185, %v210
    %v236 = vmul.f32 %v185, %v214
    %v237 = vmul.f32 %v185, %v218
    %v238 = vmul.f32 %v185, %v222
    %v239 = vadd.f32 %v155, %v223
    %v240 = vadd.f32 %v156, %v224
    %v241 = vadd.f32 %v157, %v225
    %v242 = vadd.f32 %v158, %v226
    %v243 = vadd.f32 %v159, %v227
    %v244 = vadd.f32 %v160, %v228
    %v245 = vadd.f32 %v161, %v229
    %v246 = vadd.f32 %v162, %v230
    %v247 = vadd.f32 %v163, %v231
    %v248 = vadd.f32 %v164, %v232
    %v249 = vadd.f32 %v165, %v233
    %v250 = vadd.f32 %v166, %v234
    %v251 = vadd.f32 %v167, %v235
    %v252 = vadd.f32 %v168, %v236
    %v253 = vadd.f32 %v169, %v237
    %v254 = vadd.f32 %v170, %v238
    %255 = vst [vmem:[#allocation2] sm:$0xff] %v239
    %256 = vst [vmem:[#allocation2 + $0x8] sm:$0xff] %v240
    %257 = vst [vmem:[#allocation2 + $0x10] sm:$0xff] %v241
    %258 = vst [vmem:[#allocation2 + $0x18] sm:$0xff] %v242
    %259 = vst [vmem:[#allocation2 + $0x20] sm:$0xff] %v243
    %260 = vst [vmem:[#allocation2 + $0x28] sm:$0xff] %v244
    %261 = vst [vmem:[#allocation2 + $0x30] sm:$0xff] %v245
    %262 = vst [vmem:[#allocation2 + $0x38] sm:$0xff] %v246
    %263 = vst [vmem:[#allocation2 + $0x40] sm:$0xff] %v247
    %264 = vst [vmem:[#allocation2 + $0x48] sm:$0xff] %v248
    %265 = vst [vmem:[#allocation2 + $0x50] sm:$0xff] %v249
    %266 = vst [vmem:[#allocation2 + $0x58] sm:$0xff] %v250
    %267 = vst [vmem:[#allocation2 + $0x60] sm:$0xff] %v251
    %268 = vst [vmem:[#allocation2 + $0x68] sm:$0xff] %v252
    %269 = vst [vmem:[#allocation2 + $0x70] sm:$0xff] %v253
    %270 = vst [vmem:[#allocation2 + $0x78] sm:$0xff] %v254
    %v271 = vld [vmem:[%s3] sm:$0xff]
    %v272 = vld [vmem:[%s3 + $0x8] sm:$0xff]
    %v273 = vld [vmem:[%s3 + $0x10] sm:$0xff]
    %v274 = vld [vmem:[%s3 + $0x18] sm:$0xff]
    %v275 = vld [vmem:[%s3 + $0x20] sm:$0xff]
    %v276 = vld [vmem:[%s3 + $0x28] sm:$0xff]
    %v277 = vld [vmem:[%s3 + $0x30] sm:$0xff]
    %v278 = vld [vmem:[%s3 + $0x38] sm:$0xff]
    %v279 = vld [vmem:[%s3 + $0x40] sm:$0xff]
    %v280 = vld [vmem:[%s3 + $0x48] sm:$0xff]
    %v281 = vld [vmem:[%s3 + $0x50] sm:$0xff]
    %v282 = vld [vmem:[%s3 + $0x58] sm:$0xff]
    %v283 = vld [vmem:[%s3 + $0x60] sm:$0xff]
    %v284 = vld [vmem:[%s3 + $0x68] sm:$0xff]
    %v285 = vld [vmem:[%s3 + $0x70] sm:$0xff]
    %v286 = vld [vmem:[%s3 + $0x78] sm:$0xff]
    %v287 = vld [vmem:[%s3 + $0x80] sm:$0xff]
    %v288 = vld [vmem:[%s3 + $0x88] sm:$0xff]
    %v289 = vld [vmem:[%s3 + $0x90] sm:$0xff]
    %v290 = vld [vmem:[%s3 + $0x98] sm:$0xff]
    %v291 = vld [vmem:[%s3 + $0xa0] sm:$0xff]
    %v292 = vld [vmem:[%s3 + $0xa8] sm:$0xff]
    %v293 = vld [vmem:[%s3 + $0xb0] sm:$0xff]
    %v294 = vld [vmem:[%s3 + $0xb8] sm:$0xff]
    %v295 = vld [vmem:[%s3 + $0xc0] sm:$0xff]
    %v296 = vld [vmem:[%s3 + $0xc8] sm:$0xff]
    %v297 = vld [vmem:[%s3 + $0xd0] sm:$0xff]
    %v298 = vld [vmem:[%s3 + $0xd8] sm:$0xff]
    %v299 = vld [vmem:[%s3 + $0xe0] sm:$0xff]
    %v300 = vld [vmem:[%s3 + $0xe8] sm:$0xff]
    %v301 = vld [vmem:[%s3 + $0xf0] sm:$0xff]
    %v302 = vld [vmem:[%s3 + $0xf8] sm:$0xff]
    %v303 = vld [vmem:[#allocation2] ss:$8 sm:$0xf]
    %s304 = scalar_lea.vmem [#allocation2], 64
    %v305 = vld [vmem:[%s304] ss:$8 sm:$0xf]
    %v338 = vunpack.c.l.b16 %v271
    %v339 = vunpack.c.h.b16 %v271
    %v340 = vunpack.c.l.b16 %v272
    %v341 = vunpack.c.h.b16 %v272
    %v342 = vunpack.c.l.b16 %v273
    %v343 = vunpack.c.h.b16 %v273
    %v344 = vunpack.c.l.b16 %v274
    %v345 = vunpack.c.h.b16 %v274
    %v346 = vunpack.c.l.b16 %v275
    %v347 = vunpack.c.h.b16 %v275
    %v348 = vunpack.c.l.b16 %v276
    %v349 = vunpack.c.h.b16 %v276
    %v350 = vunpack.c.l.b16 %v277
    %v351 = vunpack.c.h.b16 %v277
    %v352 = vunpack.c.l.b16 %v278
    %v353 = vunpack.c.h.b16 %v278
    %v354 = vunpack.c.l.b16 %v279
    %v355 = vunpack.c.h.b16 %v279
    %v356 = vunpack.c.l.b16 %v280
    %v357 = vunpack.c.h.b16 %v280
    %v358 = vunpack.c.l.b16 %v281
    %v359 = vunpack.c.h.b16 %v281
    %v360 = vunpack.c.l.b16 %v282
    %v361 = vunpack.c.h.b16 %v282
    %v362 = vunpack.c.l.b16 %v283
    %v363 = vunpack.c.h.b16 %v283
    %v364 = vunpack.c.l.b16 %v284
    %v365 = vunpack.c.h.b16 %v284
    %v366 = vunpack.c.l.b16 %v285
    %v367 = vunpack.c.h.b16 %v285
    %v368 = vunpack.c.l.b16 %v286
    %v369 = vunpack.c.h.b16 %v286
    %v370 = vunpack.c.l.b16 %v287
    %v371 = vunpack.c.h.b16 %v287
    %v372 = vunpack.c.l.b16 %v288
    %v373 = vunpack.c.h.b16 %v288
    %v374 = vunpack.c.l.b16 %v289
    %v375 = vunpack.c.h.b16 %v289
    %v376 = vunpack.c.l.b16 %v290
    %v377 = vunpack.c.h.b16 %v290
    %v378 = vunpack.c.l.b16 %v291
    %v379 = vunpack.c.h.b16 %v291
    %v380 = vunpack.c.l.b16 %v292
    %v381 = vunpack.c.h.b16 %v292
    %v382 = vunpack.c.l.b16 %v293
    %v383 = vunpack.c.h.b16 %v293
    %v384 = vunpack.c.l.b16 %v294
    %v385 = vunpack.c.h.b16 %v294
    %v386 = vunpack.c.l.b16 %v295
    %v387 = vunpack.c.h.b16 %v295
    %v388 = vunpack.c.l.b16 %v296
    %v389 = vunpack.c.h.b16 %v296
    %v390 = vunpack.c.l.b16 %v297
    %v391 = vunpack.c.h.b16 %v297
    %v392 = vunpack.c.l.b16 %v298
    %v393 = vunpack.c.h.b16 %v298
    %v394 = vunpack.c.l.b16 %v299
    %v395 = vunpack.c.h.b16 %v299
    %v396 = vunpack.c.l.b16 %v300
    %v397 = vunpack.c.h.b16 %v300
    %v398 = vunpack.c.l.b16 %v301
    %v399 = vunpack.c.h.b16 %v301
    %v400 = vunpack.c.l.b16 %v302
    %v401 = vunpack.c.h.b16 %v302
    %v402 = vpack.c.b16 %v342, %v338
    %v403 = vpack.c.b16 %v343, %v339
    %v404 = vpack.c.b16 %v344, %v340
    %v405 = vpack.c.b16 %v345, %v341
    %v406 = vpack.c.b16 %v350, %v346
    %v407 = vpack.c.b16 %v351, %v347
    %v408 = vpack.c.b16 %v352, %v348
    %v409 = vpack.c.b16 %v353, %v349
    %v410 = vpack.c.b16 %v358, %v354
    %v411 = vpack.c.b16 %v359, %v355
    %v412 = vpack.c.b16 %v360, %v356
    %v413 = vpack.c.b16 %v361, %v357
    %v414 = vpack.c.b16 %v366, %v362
    %v415 = vpack.c.b16 %v367, %v363
    %v416 = vpack.c.b16 %v368, %v364
    %v417 = vpack.c.b16 %v369, %v365
    %v418 = vpack.c.b16 %v374, %v370
    %v419 = vpack.c.b16 %v375, %v371
    %v420 = vpack.c.b16 %v376, %v372
    %v421 = vpack.c.b16 %v377, %v373
    %v422 = vpack.c.b16 %v382, %v378
    %v423 = vpack.c.b16 %v383, %v379
    %v424 = vpack.c.b16 %v384, %v380
    %v425 = vpack.c.b16 %v385, %v381
    %v426 = vpack.c.b16 %v390, %v386
    %v427 = vpack.c.b16 %v391, %v387
    %v428 = vpack.c.b16 %v392, %v388
    %v429 = vpack.c.b16 %v393, %v389
    %v430 = vpack.c.b16 %v398, %v394
    %v431 = vpack.c.b16 %v399, %v395
    %v432 = vpack.c.b16 %v400, %v396
    %v433 = vpack.c.b16 %v401, %v397
    %v468 = vcombine.low %v303, %v305
    %v470 = vunpack.c.l.s4 1966171168
    %v471 = vunpack.c.0.s8 %v470
    %v472 = vlaneseq
    %v473 = vshrl.u32 %v472, 7
    %v474 = vsub.s32 %v471, %v473
    %v475 = vrot.slane %v468, %v474
    %v476 = vcombine.high %v475, %v475
    %v478 = vunpack.c.l.s4 1966171168
    %v479 = vunpack.c.0.s8 %v478
    %v480 = vlaneseq
    %v481 = vshrl.u32 %v480, 7
    %v482 = vsub.s32 %v479, %v481
    %v483 = vrot.slane %v475, %v482
    %v485 = vunpack.c.l.s4 1966171168
    %v486 = vunpack.c.0.s8 %v485
    %v487 = vlaneseq
    %v488 = vshrl.u32 %v487, 7
    %v489 = vsub.s32 %v486, %v488
    %v490 = vrot.slane %v476, %v489
    %v491 = vcombine.high %v483, %v483
    %v492 = vcombine.high %v490, %v490
    %497 = vmatprep.subr.bf16.mxu0 %v403
    %498 = vmatpush1.bf16.msra.mxu0 %v402
    %499 = vmatprep.subr.bf16.mxu0 %v407
    %500 = vmatpush1.bf16.msra.mxu0 %v406
    %501 = vmatprep.subr.bf16.mxu0 %v411
    %502 = vmatpush1.bf16.msra.mxu0 %v410
    %503 = vmatprep.subr.bf16.mxu0 %v415
    %504 = vmatpush1.bf16.msra.mxu0 %v414
    %505 = vmatprep.subr.bf16.mxu0 %v419
    %506 = vmatpush1.bf16.msra.mxu0 %v418
    %507 = vmatprep.subr.bf16.mxu0 %v423
    %508 = vmatpush1.bf16.msra.mxu0 %v422
    %509 = vmatprep.subr.bf16.mxu0 %v427
    %510 = vmatpush1.bf16.msra.mxu0 %v426
    %511 = vmatprep.subr.bf16.mxu0 %v431
    %512 = vmatpush1.bf16.msra.mxu0 %v430
    %513 = vmatprep.subr.bf16.mxu0 0
    %514 = vmatpush1.bf16.msra.mxu0 0
    %515 = vmatprep.subr.bf16.mxu0 0
    %516 = vmatpush1.bf16.msra.mxu0 0
    %517 = vmatprep.subr.bf16.mxu0 0
    %518 = vmatpush1.bf16.msra.mxu0 0
    %519 = vmatprep.subr.bf16.mxu0 0
    %520 = vmatpush1.bf16.msra.mxu0 0
    %521 = vmatprep.subr.bf16.mxu0 0
    %522 = vmatpush1.bf16.msra.mxu0 0
    %523 = vmatprep.subr.bf16.mxu0 0
    %524 = vmatpush1.bf16.msra.mxu0 0
    %525 = vmatprep.subr.bf16.mxu0 0
    %526 = vmatpush1.bf16.msra.mxu0 0
    %527 = vmatprep.subr.bf16.mxu0 0
    %528 = vmatpush1.bf16.msra.mxu0 0
    %529 = vmatprep.mubr.bf16.mxu0 0
    %530 = vmatmul.mubr.bf16.gmra.mrb[0].mxu0 0
    %v531 = vpop.f32.mrb[0].mxu0
    %v532 = vadd.f32 %v483, %v531
    %v533 = vpop.f32.mrb[0].mxu0
    %v534 = vadd.f32 %v490, %v533
    %v535 = vpop.f32.mrb[0].mxu0
    %v536 = vpop.f32.mrb[0].mxu0
    %537 = vdwg.mxu0
    %538 = vmatprep.subr.bf16.mxu0 %v405
    %539 = vmatpush1.bf16.msra.mxu0 %v404
    %540 = vmatprep.subr.bf16.mxu0 %v409
    %541 = vmatpush1.bf16.msra.mxu0 %v408
    %542 = vmatprep.subr.bf16.mxu0 %v413
    %543 = vmatpush1.bf16.msra.mxu0 %v412
    %544 = vmatprep.subr.bf16.mxu0 %v417
    %545 = vmatpush1.bf16.msra.mxu0 %v416
    %546 = vmatprep.subr.bf16.mxu0 %v421
    %547 = vmatpush1.bf16.msra.mxu0 %v420
    %548 = vmatprep.subr.bf16.mxu0 %v425
    %549 = vmatpush1.bf16.msra.mxu0 %v424
    %550 = vmatprep.subr.bf16.mxu0 %v429
    %551 = vmatpush1.bf16.msra.mxu0 %v428
    %552 = vmatprep.subr.bf16.mxu0 %v433
    %553 = vmatpush1.bf16.msra.mxu0 %v432
    %554 = vmatprep.subr.bf16.mxu0 0
    %555 = vmatpush1.bf16.msra.mxu0 0
    %556 = vmatprep.subr.bf16.mxu0 0
    %557 = vmatpush1.bf16.msra.mxu0 0
    %558 = vmatprep.subr.bf16.mxu0 0
    %559 = vmatpush1.bf16.msra.mxu0 0
    %560 = vmatprep.subr.bf16.mxu0 0
    %561 = vmatpush1.bf16.msra.mxu0 0
    %562 = vmatprep.subr.bf16.mxu0 0
    %563 = vmatpush1.bf16.msra.mxu0 0
    %564 = vmatprep.subr.bf16.mxu0 0
    %565 = vmatpush1.bf16.msra.mxu0 0
    %566 = vmatprep.subr.bf16.mxu0 0
    %567 = vmatpush1.bf16.msra.mxu0 0
    %568 = vmatprep.subr.bf16.mxu0 0
    %569 = vmatpush1.bf16.msra.mxu0 0
    %570 = vmatprep.mubr.bf16.mxu0 0
    %571 = vmatmul.mubr.bf16.gmra.mrb[0].mxu0 0
    %v572 = vpop.f32.mrb[0].mxu0
    %v573 = vadd.f32 %v491, %v572
    %v574 = vpop.f32.mrb[0].mxu0
    %v575 = vadd.f32 %v492, %v574
    %v576 = vpop.f32.mrb[0].mxu0
    %v577 = vpop.f32.mrb[0].mxu0
    %578 = vdwg.mxu0
    %v579 = vxor.u32 %v532, 2147483648
    %v580 = vmul.f32 %v579, 1.442695
    %v581 = vpow.pop %v580
    %v582 = vadd.f32 %v581, 1.0
    %v583 = vrcp.pop %v582
    %v584 = vmul.f32 1.0, %v583
    %v585 = vxor.u32 %v534, 2147483648
    %v586 = vmul.f32 %v585, 1.442695
    %v587 = vpow.pop %v586
    %v588 = vadd.f32 %v587, 1.0
    %v589 = vrcp.pop %v588
    %v590 = vmul.f32 1.0, %v589
    %v591 = vtanh.pop %v573
    %v592 = vxor.u32 %v575, 2147483648
    %v593 = vmul.f32 %v592, 1.442695
    %v594 = vpow.pop %v593
    %v595 = vadd.f32 %v594, 1.0
    %v596 = vrcp.pop %v595
    %v597 = vmul.f32 1.0, %v596
    %v598 = vmul.f32 %v590, 0.0
    %v599 = vmul.f32 %v584, %v591
    %v600 = vadd.f32 %v598, %v599
    %v601 = vtanh.pop %v600
    %v602 = vmul.f32 %v597, %v601
    %v603 = vpack.c.bf16 %v602, %v602
    %s604 = scalar_lea.vmem [#allocation2], 1
    %v605 = vld [vmem:[%s604] ss:$8 sm:$0xf]
    %s606 = scalar_lea.vmem [#allocation2], 65
    %v607 = vld [vmem:[%s606] ss:$8 sm:$0xf]
    %v610 = vcombine.low %v605, %v607
    %v612 = vunpack.c.l.s4 1966171168
    %v613 = vunpack.c.0.s8 %v612
    %v614 = vlaneseq
    %v615 = vshrl.u32 %v614, 7
    %v616 = vsub.s32 %v613, %v615
    %v617 = vrot.slane %v610, %v616
    %v618 = vcombine.high %v617, %v617
    %v620 = vunpack.c.l.s4 1966171168
    %v621 = vunpack.c.0.s8 %v620
    %v622 = vlaneseq
    %v623 = vshrl.u32 %v622, 7
    %v624 = vsub.s32 %v621, %v623
    %v625 = vrot.slane %v617, %v624
    %v627 = vunpack.c.l.s4 1966171168
    %v628 = vunpack.c.0.s8 %v627
    %v629 = vlaneseq
    %v630 = vshrl.u32 %v629, 7
    %v631 = vsub.s32 %v628, %v630
    %v632 = vrot.slane %v618, %v631
    %v633 = vcombine.high %v625, %v625
    %v634 = vcombine.high %v632, %v632
    %639 = vmatprep.subr.bf16.mxu0 %v403
    %640 = vmatpush1.bf16.msra.mxu0 %v402
    %641 = vmatprep.subr.bf16.mxu0 %v407
    %642 = vmatpush1.bf16.msra.mxu0 %v406
    %643 = vmatprep.subr.bf16.mxu0 %v411
    %644 = vmatpush1.bf16.msra.mxu0 %v410
    %645 = vmatprep.subr.bf16.mxu0 %v415
    %646 = vmatpush1.bf16.msra.mxu0 %v414
    %647 = vmatprep.subr.bf16.mxu0 %v419
    %648 = vmatpush1.bf16.msra.mxu0 %v418
    %649 = vmatprep.subr.bf16.mxu0 %v423
    %650 = vmatpush1.bf16.msra.mxu0 %v422
    %651 = vmatprep.subr.bf16.mxu0 %v427
    %652 = vmatpush1.bf16.msra.mxu0 %v426
    %653 = vmatprep.subr.bf16.mxu0 %v431
    %654 = vmatpush1.bf16.msra.mxu0 %v430
    %655 = vmatprep.subr.bf16.mxu0 0
    %656 = vmatpush1.bf16.msra.mxu0 0
    %657 = vmatprep.subr.bf16.mxu0 0
    %658 = vmatpush1.bf16.msra.mxu0 0
    %659 = vmatprep.subr.bf16.mxu0 0
    %660 = vmatpush1.bf16.msra.mxu0 0
    %661 = vmatprep.subr.bf16.mxu0 0
    %662 = vmatpush1.bf16.msra.mxu0 0
    %663 = vmatprep.subr.bf16.mxu0 0
    %664 = vmatpush1.bf16.msra.mxu0 0
    %665 = vmatprep.subr.bf16.mxu0 0
    %666 = vmatpush1.bf16.msra.mxu0 0
    %667 = vmatprep.subr.bf16.mxu0 0
    %668 = vmatpush1.bf16.msra.mxu0 0
    %669 = vmatprep.subr.bf16.mxu0 0
    %670 = vmatpush1.bf16.msra.mxu0 0
    %671 = vmatprep.mubr.bf16.mxu0 0
    %672 = vmatmul.mubr.bf16.gmra.mrb[0].mxu0 %v603
    %v673 = vpop.f32.mrb[0].mxu0
    %v674 = vadd.f32 %v625, %v673
    %v675 = vpop.f32.mrb[0].mxu0
    %v676 = vadd.f32 %v632, %v675
    %v677 = vpop.f32.mrb[0].mxu0
    %v678 = vpop.f32.mrb[0].mxu0
    %679 = vdwg.mxu0
    %680 = vmatprep.subr.bf16.mxu0 %v405
    %681 = vmatpush1.bf16.msra.mxu0 %v404
    %682 = vmatprep.subr.bf16.mxu0 %v409
    %683 = vmatpush1.bf16.msra.mxu0 %v408
    %684 = vmatprep.subr.bf16.mxu0 %v413
    %685 = vmatpush1.bf16.msra.mxu0 %v412
    %686 = vmatprep.subr.bf16.mxu0 %v417
    %687 = vmatpush1.bf16.msra.mxu0 %v416
    %688 = vmatprep.subr.bf16.mxu0 %v421
    %689 = vmatpush1.bf16.msra.mxu0 %v420
    %690 = vmatprep.subr.bf16.mxu0 %v425
    %691 = vmatpush1.bf16.msra.mxu0 %v424
    %692 = vmatprep.subr.bf16.mxu0 %v429
    %693 = vmatpush1.bf16.msra.mxu0 %v428
    %694 = vmatprep.subr.bf16.mxu0 %v433
    %695 = vmatpush1.bf16.msra.mxu0 %v432
    %696 = vmatprep.subr.bf16.mxu0 0
    %697 = vmatpush1.bf16.msra.mxu0 0
    %698 = vmatprep.subr.bf16.mxu0 0
    %699 = vmatpush1.bf16.msra.mxu0 0
    %700 = vmatprep.subr.bf16.mxu0 0
    %701 = vmatpush1.bf16.msra.mxu0 0
    %702 = vmatprep.subr.bf16.mxu0 0
    %703 = vmatpush1.bf16.msra.mxu0 0
    %704 = vmatprep.subr.bf16.mxu0 0
    %705 = vmatpush1.bf16.msra.mxu0 0
    %706 = vmatprep.subr.bf16.mxu0 0
    %707 = vmatpush1.bf16.msra.mxu0 0
    %708 = vmatprep.subr.bf16.mxu0 0
    %709 = vmatpush1.bf16.msra.mxu0 0
    %710 = vmatprep.subr.bf16.mxu0 0
    %711 = vmatpush1.bf16.msra.mxu0 0
    %712 = vmatprep.mubr.bf16.mxu0 0
    %713 = vmatmul.mubr.bf16.gmra.mrb[0].mxu0 %v603
    %v714 = vpop.f32.mrb[0].mxu0
    %v715 = vadd.f32 %v633, %v714
    %v716 = vpop.f32.mrb[0].mxu0
    %v717 = vadd.f32 %v634, %v716
    %v718 = vpop.f32.mrb[0].mxu0
    %v719 = vpop.f32.mrb[0].mxu0
    %720 = vdwg.mxu0
    %v721 = vxor.u32 %v674, 2147483648
    %v722 = vmul.f32 %v721, 1.442695
    %v723 = vpow.pop %v722
    %v724 = vadd.f32 %v723, 1.0
    %v725 = vrcp.pop %v724
    %v726 = vmul.f32 1.0, %v725
    %v727 = vxor.u32 %v676, 2147483648
    %v728 = vmul.f32 %v727, 1.442695
    %v729 = vpow.pop %v728
    %v730 = vadd.f32 %v729, 1.0
    %v731 = vrcp.pop %v730
    %v732 = vmul.f32 1.0, %v731
    %v733 = vtanh.pop %v715
    %v734 = vxor.u32 %v717, 2147483648
    %v735 = vmul.f32 %v734, 1.442695
    %v736 = vpow.pop %v735
    %v737 = vadd.f32 %v736, 1.0
    %v738 = vrcp.pop %v737
    %v739 = vmul.f32 1.0, %v738
    %v740 = vmul.f32 %v732, %v600
    %v741 = vmul.f32 %v726, %v733
    %v742 = vadd.f32 %v740, %v741
    %v743 = vtanh.pop %v742
    %v744 = vmul.f32 %v739, %v743
    %v745 = vpack.c.bf16 %v744, %v744
    %s746 = scalar_lea.vmem [#allocation2], 2
    %v747 = vld [vmem:[%s746] ss:$8 sm:$0xf]
    %s748 = scalar_lea.vmem [#allocation2], 66
    %v749 = vld [vmem:[%s748] ss:$8 sm:$0xf]
    %v752 = vcombine.low %v747, %v749
    %v754 = vunpack.c.l.s4 1966171168
    %v755 = vunpack.c.0.s8 %v754
    %v756 = vlaneseq
    %v757 = vshrl.u32 %v756, 7
    %v758 = vsub.s32 %v755, %v757
    %v759 = vrot.slane %v752, %v758
    %v760 = vcombine.high %v759, %v759
    %v762 = vunpack.c.l.s4 1966171168
    %v763 = vunpack.c.0.s8 %v762
    %v764 = vlaneseq
    %v765 = vshrl.u32 %v764, 7
    %v766 = vsub.s32 %v763, %v765
    %v767 = vrot.slane %v759, %v766
    %v769 = vunpack.c.l.s4 1966171168
    %v770 = vunpack.c.0.s8 %v769
    %v771 = vlaneseq
    %v772 = vshrl.u32 %v771, 7
    %v773 = vsub.s32 %v770, %v772
    %v774 = vrot.slane %v760, %v773
    %v775 = vcombine.high %v767, %v767
    %v776 = vcombine.high %v774, %v774
    %781 = vmatprep.subr.bf16.mxu0 %v403
    %782 = vmatpush1.bf16.msra.mxu0 %v402
    %783 = vmatprep.subr.bf16.mxu0 %v407
    %784 = vmatpush1.bf16.msra.mxu0 %v406
    %785 = vmatprep.subr.bf16.mxu0 %v411
    %786 = vmatpush1.bf16.msra.mxu0 %v410
    %787 = vmatprep.subr.bf16.mxu0 %v415
    %788 = vmatpush1.bf16.msra.mxu0 %v414
    %789 = vmatprep.subr.bf16.mxu0 %v419
    %790 = vmatpush1.bf16.msra.mxu0 %v418
    %791 = vmatprep.subr.bf16.mxu0 %v423
    %792 = vmatpush1.bf16.msra.mxu0 %v422
    %793 = vmatprep.subr.bf16.mxu0 %v427
    %794 = vmatpush1.bf16.msra.mxu0 %v426
    %795 = vmatprep.subr.bf16.mxu0 %v431
    %796 = vmatpush1.bf16.msra.mxu0 %v430
    %797 = vmatprep.subr.bf16.mxu0 0
    %798 = vmatpush1.bf16.msra.mxu0 0
    %799 = vmatprep.subr.bf16.mxu0 0
    %800 = vmatpush1.bf16.msra.mxu0 0
    %801 = vmatprep.subr.bf16.mxu0 0
    %802 = vmatpush1.bf16.msra.mxu0 0
    %803 = vmatprep.subr.bf16.mxu0 0
    %804 = vmatpush1.bf16.msra.mxu0 0
    %805 = vmatprep.subr.bf16.mxu0 0
    %806 = vmatpush1.bf16.msra.mxu0 0
    %807 = vmatprep.subr.bf16.mxu0 0
    %808 = vmatpush1.bf16.msra.mxu0 0
    %809 = vmatprep.subr.bf16.mxu0 0
    %810 = vmatpush1.bf16.msra.mxu0 0
    %811 = vmatprep.subr.bf16.mxu0 0
    %812 = vmatpush1.bf16.msra.mxu0 0
    %813 = vmatprep.mubr.bf16.mxu0 0
    %814 = vmatmul.mubr.bf16.gmra.mrb[0].mxu0 %v745
    %v815 = vpop.f32.mrb[0].mxu0
    %v816 = vadd.f32 %v767, %v815
    %v817 = vpop.f32.mrb[0].mxu0
    %v818 = vadd.f32 %v774, %v817
    %v819 = vpop.f32.mrb[0].mxu0
    %v820 = vpop.f32.mrb[0].mxu0
    %821 = vdwg.mxu0
    %822 = vmatprep.subr.bf16.mxu0 %v405
    %823 = vmatpush1.bf16.msra.mxu0 %v404
    %824 = vmatprep.subr.bf16.mxu0 %v409
    %825 = vmatpush1.bf16.msra.mxu0 %v408
    %826 = vmatprep.subr.bf16.mxu0 %v413
    %827 = vmatpush1.bf16.msra.mxu0 %v412
    %828 = vmatprep.subr.bf16.mxu0 %v417
    %829 = vmatpush1.bf16.msra.mxu0 %v416
    %830 = vmatprep.subr.bf16.mxu0 %v421
    %831 = vmatpush1.bf16.msra.mxu0 %v420
    %832 = vmatprep.subr.bf16.mxu0 %v425
    %833 = vmatpush1.bf16.msra.mxu0 %v424
    %834 = vmatprep.subr.bf16.mxu0 %v429
    %835 = vmatpush1.bf16.msra.mxu0 %v428
    %836 = vmatprep.subr.bf16.mxu0 %v433
    %837 = vmatpush1.bf16.msra.mxu0 %v432
    %838 = vmatprep.subr.bf16.mxu0 0
    %839 = vmatpush1.bf16.msra.mxu0 0
    %840 = vmatprep.subr.bf16.mxu0 0
    %841 = vmatpush1.bf16.msra.mxu0 0
    %842 = vmatprep.subr.bf16.mxu0 0
    %843 = vmatpush1.bf16.msra.mxu0 0
    %844 = vmatprep.subr.bf16.mxu0 0
    %845 = vmatpush1.bf16.msra.mxu0 0
    %846 = vmatprep.subr.bf16.mxu0 0
    %847 = vmatpush1.bf16.msra.mxu0 0
    %848 = vmatprep.subr.bf16.mxu0 0
    %849 = vmatpush1.bf16.msra.mxu0 0
    %850 = vmatprep.subr.bf16.mxu0 0
    %851 = vmatpush1.bf16.msra.mxu0 0
    %852 = vmatprep.subr.bf16.mxu0 0
    %853 = vmatpush1.bf16.msra.mxu0 0
    %854 = vmatprep.mubr.bf16.mxu0 0
    %855 = vmatmul.mubr.bf16.gmra.mrb[0].mxu0 %v745
    %v856 = vpop.f32.mrb[0].mxu0
    %v857 = vadd.f32 %v775, %v856
    %v858 = vpop.f32.mrb[0].mxu0
    %v859 = vadd.f32 %v776, %v858
    %v860 = vpop.f32.mrb[0].mxu0
    %v861 = vpop.f32.mrb[0].mxu0
    %862 = vdwg.mxu0
    %v863 = vxor.u32 %v816, 2147483648
    %v864 = vmul.f32 %v863, 1.442695
    %v865 = vpow.pop %v864
    %v866 = vadd.f32 %v865, 1.0
    %v867 = vrcp.pop %v866
    %v868 = vmul.f32 1.0, %v867
    %v869 = vxor.u32 %v818, 2147483648
    %v870 = vmul.f32 %v869, 1.442695
    %v871 = vpow.pop %v870
    %v872 = vadd.f32 %v871, 1.0
    %v873 = vrcp.pop %v872
    %v874 = vmul.f32 1.0, %v873
    %v875 = vtanh.pop %v857
    %v876 = vxor.u32 %v859, 2147483648
    %v877 = vmul.f32 %v876, 1.442695
    %v878 = vpow.pop %v877
    %v879 = vadd.f32 %v878, 1.0
    %v880 = vrcp.pop %v879
    %v881 = vmul.f32 1.0, %v880
    %v882 = vmul.f32 %v874, %v742
    %v883 = vmul.f32 %v868, %v875
    %v884 = vadd.f32 %v882, %v883
    %v885 = vtanh.pop %v884
    %v886 = vmul.f32 %v881, %v885
    %v887 = vpack.c.bf16 %v886, %v886
    %s888 = scalar_lea.vmem [#allocation2], 3
    %v889 = vld [vmem:[%s888] ss:$8 sm:$0xf]
    %s890 = scalar_lea.vmem [#allocation2], 67
    %v891 = vld [vmem:[%s890] ss:$8 sm:$0xf]
    %v894 = vcombine.low %v889, %v891
    %v896 = vunpack.c.l.s4 1966171168
    %v897 = vunpack.c.0.s8 %v896
    %v898 = vlaneseq
    %v899 = vshrl.u32 %v898, 7
    %v900 = vsub.s32 %v897, %v899
    %v901 = vrot.slane %v894, %v900
    %v902 = vcombine.high %v901, %v901
    %v904 = vunpack.c.l.s4 1966171168
    %v905 = vunpack.c.0.s8 %v904
    %v906 = vlaneseq
    %v907 = vshrl.u32 %v906, 7
    %v908 = vsub.s32 %v905, %v907
    %v909 = vrot.slane %v901, %v908
    %v911 = vunpack.c.l.s4 1966171168
    %v912 = vunpack.c.0.s8 %v911
    %v913 = vlaneseq
    %v914 = vshrl.u32 %v913, 7
    %v915 = vsub.s32 %v912, %v914
    %v916 = vrot.slane %v902, %v915
    %v917 = vcombine.high %v909, %v909
    %v918 = vcombine.high %v916, %v916
    %923 = vmatprep.subr.bf16.mxu0 %v403
    %924 = vmatpush1.bf16.msra.mxu0 %v402
    %925 = vmatprep.subr.bf16.mxu0 %v407
    %926 = vmatpush1.bf16.msra.mxu0 %v406
    %927 = vmatprep.subr.bf16.mxu0 %v411
    %928 = vmatpush1.bf16.msra.mxu0 %v410
    %929 = vmatprep.subr.bf16.mxu0 %v415
    %930 = vmatpush1.bf16.msra.mxu0 %v414
    %931 = vmatprep.subr.bf16.mxu0 %v419
    %932 = vmatpush1.bf16.msra.mxu0 %v418
    %933 = vmatprep.subr.bf16.mxu0 %v423
    %934 = vmatpush1.bf16.msra.mxu0 %v422
    %935 = vmatprep.subr.bf16.mxu0 %v427
    %936 = vmatpush1.bf16.msra.mxu0 %v426
    %937 = vmatprep.subr.bf16.mxu0 %v431
    %938 = vmatpush1.bf16.msra.mxu0 %v430
    %939 = vmatprep.subr.bf16.mxu0 0
    %940 = vmatpush1.bf16.msra.mxu0 0
    %941 = vmatprep.subr.bf16.mxu0 0
    %942 = vmatpush1.bf16.msra.mxu0 0
    %943 = vmatprep.subr.bf16.mxu0 0
    %944 = vmatpush1.bf16.msra.mxu0 0
    %945 = vmatprep.subr.bf16.mxu0 0
    %946 = vmatpush1.bf16.msra.mxu0 0
    %947 = vmatprep.subr.bf16.mxu0 0
    %948 = vmatpush1.bf16.msra.mxu0 0
    %949 = vmatprep.subr.bf16.mxu0 0
    %950 = vmatpush1.bf16.msra.mxu0 0
    %951 = vmatprep.subr.bf16.mxu0 0
    %952 = vmatpush1.bf16.msra.mxu0 0
    %953 = vmatprep.subr.bf16.mxu0 0
    %954 = vmatpush1.bf16.msra.mxu0 0
    %955 = vmatprep.mubr.bf16.mxu0 0
    %956 = vmatmul.mubr.bf16.gmra.mrb[0].mxu0 %v887
    %v957 = vpop.f32.mrb[0].mxu0
    %v958 = vadd.f32 %v909, %v957
    %v959 = vpop.f32.mrb[0].mxu0
    %v960 = vadd.f32 %v916, %v959
    %v961 = vpop.f32.mrb[0].mxu0
    %v962 = vpop.f32.mrb[0].mxu0
    %963 = vdwg.mxu0
    %964 = vmatprep.subr.bf16.mxu0 %v405
    %965 = vmatpush1.bf16.msra.mxu0 %v404
    %966 = vmatprep.subr.bf16.mxu0 %v409
    %967 = vmatpush1.bf16.msra.mxu0 %v408
    %968 = vmatprep.subr.bf16.mxu0 %v413
    %969 = vmatpush1.bf16.msra.mxu0 %v412
    %970 = vmatprep.subr.bf16.mxu0 %v417
    %971 = vmatpush1.bf16.msra.mxu0 %v416
    %972 = vmatprep.subr.bf16.mxu0 %v421
    %973 = vmatpush1.bf16.msra.mxu0 %v420
    %974 = vmatprep.subr.bf16.mxu0 %v425
    %975 = vmatpush1.bf16.msra.mxu0 %v424
    %976 = vmatprep.subr.bf16.mxu0 %v429
    %977 = vmatpush1.bf16.msra.mxu0 %v428
    %978 = vmatprep.subr.bf16.mxu0 %v433
    %979 = vmatpush1.bf16.msra.mxu0 %v432
    %980 = vmatprep.subr.bf16.mxu0 0
    %981 = vmatpush1.bf16.msra.mxu0 0
    %982 = vmatprep.subr.bf16.mxu0 0
    %983 = vmatpush1.bf16.msra.mxu0 0
    %984 = vmatprep.subr.bf16.mxu0 0
    %985 = vmatpush1.bf16.msra.mxu0 0
    %986 = vmatprep.subr.bf16.mxu0 0
    %987 = vmatpush1.bf16.msra.mxu0 0
    %988 = vmatprep.subr.bf16.mxu0 0
    %989 = vmatpush1.bf16.msra.mxu0 0
    %990 = vmatprep.subr.bf16.mxu0 0
    %991 = vmatpush1.bf16.msra.mxu0 0
    %992 = vmatprep.subr.bf16.mxu0 0
    %993 = vmatpush1.bf16.msra.mxu0 0
    %994 = vmatprep.subr.bf16.mxu0 0
    %995 = vmatpush1.bf16.msra.mxu0 0
    %996 = vmatprep.mubr.bf16.mxu0 0
    %997 = vmatmul.mubr.bf16.gmra.mrb[0].mxu0 %v887
    %v998 = vpop.f32.mrb[0].mxu0
    %v999 = vadd.f32 %v917, %v998
    %v1000 = vpop.f32.mrb[0].mxu0
    %v1001 = vadd.f32 %v918, %v1000
    %v1002 = vpop.f32.mrb[0].mxu0
    %v1003 = vpop.f32.mrb[0].mxu0
    %1004 = vdwg.mxu0
    %v1005 = vxor.u32 %v958, 2147483648
    %v1006 = vmul.f32 %v1005, 1.442695
    %v1007 = vpow.pop %v1006
    %v1008 = vadd.f32 %v1007, 1.0
    %v1009 = vrcp.pop %v1008
    %v1010 = vmul.f32 1.0, %v1009
    %v1011 = vxor.u32 %v960, 2147483648
    %v1012 = vmul.f32 %v1011, 1.442695
    %v1013 = vpow.pop %v1012
    %v1014 = vadd.f32 %v1013, 1.0
    %v1015 = vrcp.pop %v1014
    %v1016 = vmul.f32 1.0, %v1015
    %v1017 = vtanh.pop %v999
    %v1018 = vxor.u32 %v1001, 2147483648
    %v1019 = vmul.f32 %v1018, 1.442695
    %v1020 = vpow.pop %v1019
    %v1021 = vadd.f32 %v1020, 1.0
    %v1022 = vrcp.pop %v1021
    %v1023 = vmul.f32 1.0, %v1022
    %v1024 = vmul.f32 %v1016, %v884
    %v1025 = vmul.f32 %v1010, %v1017
    %v1026 = vadd.f32 %v1024, %v1025
    %v1027 = vtanh.pop %v1026
    %v1028 = vmul.f32 %v1023, %v1027
    %v1029 = vpack.c.bf16 %v1028, %v1028
    %s1030 = scalar_lea.vmem [#allocation2], 4
    %v1031 = vld [vmem:[%s1030] ss:$8 sm:$0xf]
    %s1032 = scalar_lea.vmem [#allocation2], 68
    %v1033 = vld [vmem:[%s1032] ss:$8 sm:$0xf]
    %v1036 = vcombine.low %v1031, %v1033
    %v1038 = vunpack.c.l.s4 1966171168
    %v1039 = vunpack.c.0.s8 %v1038
    %v1040 = vlaneseq
    %v1041 = vshrl.u32 %v1040, 7
    %v1042 = vsub.s32 %v1039, %v1041
    %v1043 = vrot.slane %v1036, %v1042
    %v1044 = vcombine.high %v1043, %v1043
    %v1046 = vunpack.c.l.s4 1966171168
    %v1047 = vunpack.c.0.s8 %v1046
    %v1048 = vlaneseq
    %v1049 = vshrl.u32 %v1048, 7
    %v1050 = vsub.s32 %v1047, %v1049
    %v1051 = vrot.slane %v1043, %v1050
    %v1053 = vunpack.c.l.s4 1966171168
    %v1054 = vunpack.c.0.s8 %v1053
    %v1055 = vlaneseq
    %v1056 = vshrl.u32 %v1055, 7
    %v1057 = vsub.s32 %v1054, %v1056
    %v1058 = vrot.slane %v1044, %v1057
    %v1059 = vcombine.high %v1051, %v1051
    %v1060 = vcombine.high %v1058, %v1058
    %1065 = vmatprep.subr.bf16.mxu0 %v403
    %1066 = vmatpush1.bf16.msra.mxu0 %v402
    %1067 = vmatprep.subr.bf16.mxu0 %v407
    %1068 = vmatpush1.bf16.msra.mxu0 %v406
    %1069 = vmatprep.subr.bf16.mxu0 %v411
    %1070 = vmatpush1.bf16.msra.mxu0 %v410
    %1071 = vmatprep.subr.bf16.mxu0 %v415
    %1072 = vmatpush1.bf16.msra.mxu0 %v414
    %1073 = vmatprep.subr.bf16.mxu0 %v419
    %1074 = vmatpush1.bf16.msra.mxu0 %v418
    %1075 = vmatprep.subr.bf16.mxu0 %v423
    %1076 = vmatpush1.bf16.msra.mxu0 %v422
    %1077 = vmatprep.subr.bf16.mxu0 %v427
    %1078 = vmatpush1.bf16.msra.mxu0 %v426
    %1079 = vmatprep.subr.bf16.mxu0 %v431
    %1080 = vmatpush1.bf16.msra.mxu0 %v430
    %1081 = vmatprep.subr.bf16.mxu0 0
    %1082 = vmatpush1.bf16.msra.mxu0 0
    %1083 = vmatprep.subr.bf16.mxu0 0
    %1084 = vmatpush1.bf16.msra.mxu0 0
    %1085 = vmatprep.subr.bf16.mxu0 0
    %1086 = vmatpush1.bf16.msra.mxu0 0
    %1087 = vmatprep.subr.bf16.mxu0 0
    %1088 = vmatpush1.bf16.msra.mxu0 0
    %1089 = vmatprep.subr.bf16.mxu0 0
    %1090 = vmatpush1.bf16.msra.mxu0 0
    %1091 = vmatprep.subr.bf16.mxu0 0
    %1092 = vmatpush1.bf16.msra.mxu0 0
    %1093 = vmatprep.subr.bf16.mxu0 0
    %1094 = vmatpush1.bf16.msra.mxu0 0
    %1095 = vmatprep.subr.bf16.mxu0 0
    %1096 = vmatpush1.bf16.msra.mxu0 0
    %1097 = vmatprep.mubr.bf16.mxu0 0
    %1098 = vmatmul.mubr.bf16.gmra.mrb[0].mxu0 %v1029
    %v1099 = vpop.f32.mrb[0].mxu0
    %v1100 = vadd.f32 %v1051, %v1099
    %v1101 = vpop.f32.mrb[0].mxu0
    %v1102 = vadd.f32 %v1058, %v1101
    %v1103 = vpop.f32.mrb[0].mxu0
    %v1104 = vpop.f32.mrb[0].mxu0
    %1105 = vdwg.mxu0
    %1106 = vmatprep.subr.bf16.mxu0 %v405
    %1107 = vmatpush1.bf16.msra.mxu0 %v404
    %1108 = vmatprep.subr.bf16.mxu0 %v409
    %1109 = vmatpush1.bf16.msra.mxu0 %v408
    %1110 = vmatprep.subr.bf16.mxu0 %v413
    %1111 = vmatpush1.bf16.msra.mxu0 %v412
    %1112 = vmatprep.subr.bf16.mxu0 %v417
    %1113 = vmatpush1.bf16.msra.mxu0 %v416
    %1114 = vmatprep.subr.bf16.mxu0 %v421
    %1115 = vmatpush1.bf16.msra.mxu0 %v420
    %1116 = vmatprep.subr.bf16.mxu0 %v425
    %1117 = vmatpush1.bf16.msra.mxu0 %v424
    %1118 = vmatprep.subr.bf16.mxu0 %v429
    %1119 = vmatpush1.bf16.msra.mxu0 %v428
    %1120 = vmatprep.subr.bf16.mxu0 %v433
    %1121 = vmatpush1.bf16.msra.mxu0 %v432
    %1122 = vmatprep.subr.bf16.mxu0 0
    %1123 = vmatpush1.bf16.msra.mxu0 0
    %1124 = vmatprep.subr.bf16.mxu0 0
    %1125 = vmatpush1.bf16.msra.mxu0 0
    %1126 = vmatprep.subr.bf16.mxu0 0
    %1127 = vmatpush1.bf16.msra.mxu0 0
    %1128 = vmatprep.subr.bf16.mxu0 0
    %1129 = vmatpush1.bf16.msra.mxu0 0
    %1130 = vmatprep.subr.bf16.mxu0 0
    %1131 = vmatpush1.bf16.msra.mxu0 0
    %1132 = vmatprep.subr.bf16.mxu0 0
    %1133 = vmatpush1.bf16.msra.mxu0 0
    %1134 = vmatprep.subr.bf16.mxu0 0
    %1135 = vmatpush1.bf16.msra.mxu0 0
    %1136 = vmatprep.subr.bf16.mxu0 0
    %1137 = vmatpush1.bf16.msra.mxu0 0
    %1138 = vmatprep.mubr.bf16.mxu0 0
    %1139 = vmatmul.mubr.bf16.gmra.mrb[0].mxu0 %v1029
    %v1140 = vpop.f32.mrb[0].mxu0
    %v1141 = vadd.f32 %v1059, %v1140
    %v1142 = vpop.f32.mrb[0].mxu0
    %v1143 = vadd.f32 %v1060, %v1142
    %v1144 = vpop.f32.mrb[0].mxu0
    %v1145 = vpop.f32.mrb[0].mxu0
    %1146 = vdwg.mxu0
    %v1147 = vxor.u32 %v1100, 2147483648
    %v1148 = vmul.f32 %v1147, 1.442695
    %v1149 = vpow.pop %v1148
    %v1150 = vadd.f32 %v1149, 1.0
    %v1151 = vrcp.pop %v1150
    %v1152 = vmul.f32 1.0, %v1151
    %v1153 = vxor.u32 %v1102, 2147483648
    %v1154 = vmul.f32 %v1153, 1.442695
    %v1155 = vpow.pop %v1154
    %v1156 = vadd.f32 %v1155, 1.0
    %v1157 = vrcp.pop %v1156
    %v1158 = vmul.f32 1.0, %v1157
    %v1159 = vtanh.pop %v1141
    %v1160 = vxor.u32 %v1143, 2147483648
    %v1161 = vmul.f32 %v1160, 1.442695
    %v1162 = vpow.pop %v1161
    %v1163 = vadd.f32 %v1162, 1.0
    %v1164 = vrcp.pop %v1163
    %v1165 = vmul.f32 1.0, %v1164
    %v1166 = vmul.f32 %v1158, %v1026
    %v1167 = vmul.f32 %v1152, %v1159
    %v1168 = vadd.f32 %v1166, %v1167
    %v1169 = vtanh.pop %v1168
    %v1170 = vmul.f32 %v1165, %v1169
    %v1171 = vpack.c.bf16 %v1170, %v1170
    %s1172 = scalar_lea.vmem [#allocation2], 5
    %v1173 = vld [vmem:[%s1172] ss:$8 sm:$0xf]
    %s1174 = scalar_lea.vmem [#allocation2], 69
    %v1175 = vld [vmem:[%s1174] ss:$8 sm:$0xf]
    %v1178 = vcombine.low %v1173, %v1175
    %v1180 = vunpack.c.l.s4 1966171168
    %v1181 = vunpack.c.0.s8 %v1180
    %v1182 = vlaneseq
    %v1183 = vshrl.u32 %v1182, 7
    %v1184 = vsub.s32 %v1181, %v1183
    %v1185 = vrot.slane %v1178, %v1184
    %v1186 = vcombine.high %v1185, %v1185
    %v1188 = vunpack.c.l.s4 1966171168
    %v1189 = vunpack.c.0.s8 %v1188
    %v1190 = vlaneseq
    %v1191 = vshrl.u32 %v1190, 7
    %v1192 = vsub.s32 %v1189, %v1191
    %v1193 = vrot.slane %v1185, %v1192
    %v1195 = vunpack.c.l.s4 1966171168
    %v1196 = vunpack.c.0.s8 %v1195
    %v1197 = vlaneseq
    %v1198 = vshrl.u32 %v1197, 7
    %v1199 = vsub.s32 %v1196, %v1198
    %v1200 = vrot.slane %v1186, %v1199
    %v1201 = vcombine.high %v1193, %v1193
    %v1202 = vcombine.high %v1200, %v1200
    %1207 = vmatprep.subr.bf16.mxu0 %v403
    %1208 = vmatpush1.bf16.msra.mxu0 %v402
    %1209 = vmatprep.subr.bf16.mxu0 %v407
    %1210 = vmatpush1.bf16.msra.mxu0 %v406
    %1211 = vmatprep.subr.bf16.mxu0 %v411
    %1212 = vmatpush1.bf16.msra.mxu0 %v410
    %1213 = vmatprep.subr.bf16.mxu0 %v415
    %1214 = vmatpush1.bf16.msra.mxu0 %v414
    %1215 = vmatprep.subr.bf16.mxu0 %v419
    %1216 = vmatpush1.bf16.msra.mxu0 %v418
    %1217 = vmatprep.subr.bf16.mxu0 %v423
    %1218 = vmatpush1.bf16.msra.mxu0 %v422
    %1219 = vmatprep.subr.bf16.mxu0 %v427
    %1220 = vmatpush1.bf16.msra.mxu0 %v426
    %1221 = vmatprep.subr.bf16.mxu0 %v431
    %1222 = vmatpush1.bf16.msra.mxu0 %v430
    %1223 = vmatprep.subr.bf16.mxu0 0
    %1224 = vmatpush1.bf16.msra.mxu0 0
    %1225 = vmatprep.subr.bf16.mxu0 0
    %1226 = vmatpush1.bf16.msra.mxu0 0
    %1227 = vmatprep.subr.bf16.mxu0 0
    %1228 = vmatpush1.bf16.msra.mxu0 0
    %1229 = vmatprep.subr.bf16.mxu0 0
    %1230 = vmatpush1.bf16.msra.mxu0 0
    %1231 = vmatprep.subr.bf16.mxu0 0
    %1232 = vmatpush1.bf16.msra.mxu0 0
    %1233 = vmatprep.subr.bf16.mxu0 0
    %1234 = vmatpush1.bf16.msra.mxu0 0
    %1235 = vmatprep.subr.bf16.mxu0 0
    %1236 = vmatpush1.bf16.msra.mxu0 0
    %1237 = vmatprep.subr.bf16.mxu0 0
    %1238 = vmatpush1.bf16.msra.mxu0 0
    %1239 = vmatprep.mubr.bf16.mxu0 0
    %1240 = vmatmul.mubr.bf16.gmra.mrb[0].mxu0 %v1171
    %v1241 = vpop.f32.mrb[0].mxu0
    %v1242 = vadd.f32 %v1193, %v1241
    %v1243 = vpop.f32.mrb[0].mxu0
    %v1244 = vadd.f32 %v1200, %v1243
    %v1245 = vpop.f32.mrb[0].mxu0
    %v1246 = vpop.f32.mrb[0].mxu0
    %1247 = vdwg.mxu0
    %1248 = vmatprep.subr.bf16.mxu0 %v405
    %1249 = vmatpush1.bf16.msra.mxu0 %v404
    %1250 = vmatprep.subr.bf16.mxu0 %v409
    %1251 = vmatpush1.bf16.msra.mxu0 %v408
    %1252 = vmatprep.subr.bf16.mxu0 %v413
    %1253 = vmatpush1.bf16.msra.mxu0 %v412
    %1254 = vmatprep.subr.bf16.mxu0 %v417
    %1255 = vmatpush1.bf16.msra.mxu0 %v416
    %1256 = vmatprep.subr.bf16.mxu0 %v421
    %1257 = vmatpush1.bf16.msra.mxu0 %v420
    %1258 = vmatprep.subr.bf16.mxu0 %v425
    %1259 = vmatpush1.bf16.msra.mxu0 %v424
    %1260 = vmatprep.subr.bf16.mxu0 %v429
    %1261 = vmatpush1.bf16.msra.mxu0 %v428
    %1262 = vmatprep.subr.bf16.mxu0 %v433
    %1263 = vmatpush1.bf16.msra.mxu0 %v432
    %1264 = vmatprep.subr.bf16.mxu0 0
    %1265 = vmatpush1.bf16.msra.mxu0 0
    %1266 = vmatprep.subr.bf16.mxu0 0
    %1267 = vmatpush1.bf16.msra.mxu0 0
    %1268 = vmatprep.subr.bf16.mxu0 0
    %1269 = vmatpush1.bf16.msra.mxu0 0
    %1270 = vmatprep.subr.bf16.mxu0 0
    %1271 = vmatpush1.bf16.msra.mxu0 0
    %1272 = vmatprep.subr.bf16.mxu0 0
    %1273 = vmatpush1.bf16.msra.mxu0 0
    %1274 = vmatprep.subr.bf16.mxu0 0
    %1275 = vmatpush1.bf16.msra.mxu0 0
    %1276 = vmatprep.subr.bf16.mxu0 0
    %1277 = vmatpush1.bf16.msra.mxu0 0
    %1278 = vmatprep.subr.bf16.mxu0 0
    %1279 = vmatpush1.bf16.msra.mxu0 0
    %1280 = vmatprep.mubr.bf16.mxu0 0
    %1281 = vmatmul.mubr.bf16.gmra.mrb[0].mxu0 %v1171
    %v1282 = vpop.f32.mrb[0].mxu0
    %v1283 = vadd.f32 %v1201, %v1282
    %v1284 = vpop.f32.mrb[0].mxu0
    %v1285 = vadd.f32 %v1202, %v1284
    %v1286 = vpop.f32.mrb[0].mxu0
    %v1287 = vpop.f32.mrb[0].mxu0
    %1288 = vdwg.mxu0
    %v1289 = vxor.u32 %v1242, 2147483648
    %v1290 = vmul.f32 %v1289, 1.442695
    %v1291 = vpow.pop %v1290
    %v1292 = vadd.f32 %v1291, 1.0
    %v1293 = vrcp.pop %v1292
    %v1294 = vmul.f32 1.0, %v1293
    %v1295 = vxor.u32 %v1244, 2147483648
    %v1296 = vmul.f32 %v1295, 1.442695
    %v1297 = vpow.pop %v1296
    %v1298 = vadd.f32 %v1297, 1.0
    %v1299 = vrcp.pop %v1298
    %v1300 = vmul.f32 1.0, %v1299
    %v1301 = vtanh.pop %v1283
    %v1302 = vxor.u32 %v1285, 2147483648
    %v1303 = vmul.f32 %v1302, 1.442695
    %v1304 = vpow.pop %v1303
    %v1305 = vadd.f32 %v1304, 1.0
    %v1306 = vrcp.pop %v1305
    %v1307 = vmul.f32 1.0, %v1306
    %v1308 = vmul.f32 %v1300, %v1168
    %v1309 = vmul.f32 %v1294, %v1301
    %v1310 = vadd.f32 %v1308, %v1309
    %v1311 = vtanh.pop %v1310
    %v1312 = vmul.f32 %v1307, %v1311
    %v1313 = vpack.c.bf16 %v1312, %v1312
    %s1314 = scalar_lea.vmem [#allocation2], 6
    %v1315 = vld [vmem:[%s1314] ss:$8 sm:$0xf]
    %s1316 = scalar_lea.vmem [#allocation2], 70
    %v1317 = vld [vmem:[%s1316] ss:$8 sm:$0xf]
    %v1320 = vcombine.low %v1315, %v1317
    %v1322 = vunpack.c.l.s4 1966171168
    %v1323 = vunpack.c.0.s8 %v1322
    %v1324 = vlaneseq
    %v1325 = vshrl.u32 %v1324, 7
    %v1326 = vsub.s32 %v1323, %v1325
    %v1327 = vrot.slane %v1320, %v1326
    %v1328 = vcombine.high %v1327, %v1327
    %v1330 = vunpack.c.l.s4 1966171168
    %v1331 = vunpack.c.0.s8 %v1330
    %v1332 = vlaneseq
    %v1333 = vshrl.u32 %v1332, 7
    %v1334 = vsub.s32 %v1331, %v1333
    %v1335 = vrot.slane %v1327, %v1334
    %v1337 = vunpack.c.l.s4 1966171168
    %v1338 = vunpack.c.0.s8 %v1337
    %v1339 = vlaneseq
    %v1340 = vshrl.u32 %v1339, 7
    %v1341 = vsub.s32 %v1338, %v1340
    %v1342 = vrot.slane %v1328, %v1341
    %v1343 = vcombine.high %v1335, %v1335
    %v1344 = vcombine.high %v1342, %v1342
    %1349 = vmatprep.subr.bf16.mxu0 %v403
    %1350 = vmatpush1.bf16.msra.mxu0 %v402
    %1351 = vmatprep.subr.bf16.mxu0 %v407
    %1352 = vmatpush1.bf16.msra.mxu0 %v406
    %1353 = vmatprep.subr.bf16.mxu0 %v411
    %1354 = vmatpush1.bf16.msra.mxu0 %v410
    %1355 = vmatprep.subr.bf16.mxu0 %v415
    %1356 = vmatpush1.bf16.msra.mxu0 %v414
    %1357 = vmatprep.subr.bf16.mxu0 %v419
    %1358 = vmatpush1.bf16.msra.mxu0 %v418
    %1359 = vmatprep.subr.bf16.mxu0 %v423
    %1360 = vmatpush1.bf16.msra.mxu0 %v422
    %1361 = vmatprep.subr.bf16.mxu0 %v427
    %1362 = vmatpush1.bf16.msra.mxu0 %v426
    %1363 = vmatprep.subr.bf16.mxu0 %v431
    %1364 = vmatpush1.bf16.msra.mxu0 %v430
    %1365 = vmatprep.subr.bf16.mxu0 0
    %1366 = vmatpush1.bf16.msra.mxu0 0
    %1367 = vmatprep.subr.bf16.mxu0 0
    %1368 = vmatpush1.bf16.msra.mxu0 0
    %1369 = vmatprep.subr.bf16.mxu0 0
    %1370 = vmatpush1.bf16.msra.mxu0 0
    %1371 = vmatprep.subr.bf16.mxu0 0
    %1372 = vmatpush1.bf16.msra.mxu0 0
    %1373 = vmatprep.subr.bf16.mxu0 0
    %1374 = vmatpush1.bf16.msra.mxu0 0
    %1375 = vmatprep.subr.bf16.mxu0 0
    %1376 = vmatpush1.bf16.msra.mxu0 0
    %1377 = vmatprep.subr.bf16.mxu0 0
    %1378 = vmatpush1.bf16.msra.mxu0 0
    %1379 = vmatprep.subr.bf16.mxu0 0
    %1380 = vmatpush1.bf16.msra.mxu0 0
    %1381 = vmatprep.mubr.bf16.mxu0 0
    %1382 = vmatmul.mubr.bf16.gmra.mrb[0].mxu0 %v1313
    %v1383 = vpop.f32.mrb[0].mxu0
    %v1384 = vadd.f32 %v1335, %v1383
    %v1385 = vpop.f32.mrb[0].mxu0
    %v1386 = vadd.f32 %v1342, %v1385
    %v1387 = vpop.f32.mrb[0].mxu0
    %v1388 = vpop.f32.mrb[0].mxu0
    %1389 = vdwg.mxu0
    %1390 = vmatprep.subr.bf16.mxu0 %v405
    %1391 = vmatpush1.bf16.msra.mxu0 %v404
    %1392 = vmatprep.subr.bf16.mxu0 %v409
    %1393 = vmatpush1.bf16.msra.mxu0 %v408
    %1394 = vmatprep.subr.bf16.mxu0 %v413
    %1395 = vmatpush1.bf16.msra.mxu0 %v412
    %1396 = vmatprep.subr.bf16.mxu0 %v417
    %1397 = vmatpush1.bf16.msra.mxu0 %v416
    %1398 = vmatprep.subr.bf16.mxu0 %v421
    %1399 = vmatpush1.bf16.msra.mxu0 %v420
    %1400 = vmatprep.subr.bf16.mxu0 %v425
    %1401 = vmatpush1.bf16.msra.mxu0 %v424
    %1402 = vmatprep.subr.bf16.mxu0 %v429
    %1403 = vmatpush1.bf16.msra.mxu0 %v428
    %1404 = vmatprep.subr.bf16.mxu0 %v433
    %1405 = vmatpush1.bf16.msra.mxu0 %v432
    %1406 = vmatprep.subr.bf16.mxu0 0
    %1407 = vmatpush1.bf16.msra.mxu0 0
    %1408 = vmatprep.subr.bf16.mxu0 0
    %1409 = vmatpush1.bf16.msra.mxu0 0
    %1410 = vmatprep.subr.bf16.mxu0 0
    %1411 = vmatpush1.bf16.msra.mxu0 0
    %1412 = vmatprep.subr.bf16.mxu0 0
    %1413 = vmatpush1.bf16.msra.mxu0 0
    %1414 = vmatprep.subr.bf16.mxu0 0
    %1415 = vmatpush1.bf16.msra.mxu0 0
    %1416 = vmatprep.subr.bf16.mxu0 0
    %1417 = vmatpush1.bf16.msra.mxu0 0
    %1418 = vmatprep.subr.bf16.mxu0 0
    %1419 = vmatpush1.bf16.msra.mxu0 0
    %1420 = vmatprep.subr.bf16.mxu0 0
    %1421 = vmatpush1.bf16.msra.mxu0 0
    %1422 = vmatprep.mubr.bf16.mxu0 0
    %1423 = vmatmul.mubr.bf16.gmra.mrb[0].mxu0 %v1313
    %v1424 = vpop.f32.mrb[0].mxu0
    %v1425 = vadd.f32 %v1343, %v1424
    %v1426 = vpop.f32.mrb[0].mxu0
    %v1427 = vadd.f32 %v1344, %v1426
    %v1428 = vpop.f32.mrb[0].mxu0
    %v1429 = vpop.f32.mrb[0].mxu0
    %1430 = vdwg.mxu0
    %v1431 = vxor.u32 %v1384, 2147483648
    %v1432 = vmul.f32 %v1431, 1.442695
    %v1433 = vpow.pop %v1432
    %v1434 = vadd.f32 %v1433, 1.0
    %v1435 = vrcp.pop %v1434
    %v1436 = vmul.f32 1.0, %v1435
    %v1437 = vxor.u32 %v1386, 2147483648
    %v1438 = vmul.f32 %v1437, 1.442695
    %v1439 = vpow.pop %v1438
    %v1440 = vadd.f32 %v1439, 1.0
    %v1441 = vrcp.pop %v1440
    %v1442 = vmul.f32 1.0, %v1441
    %v1443 = vtanh.pop %v1425
    %v1444 = vxor.u32 %v1427, 2147483648
    %v1445 = vmul.f32 %v1444, 1.442695
    %v1446 = vpow.pop %v1445
    %v1447 = vadd.f32 %v1446, 1.0
    %v1448 = vrcp.pop %v1447
    %v1449 = vmul.f32 1.0, %v1448
    %v1450 = vmul.f32 %v1442, %v1310
    %v1451 = vmul.f32 %v1436, %v1443
    %v1452 = vadd.f32 %v1450, %v1451
    %v1453 = vtanh.pop %v1452
    %v1454 = vmul.f32 %v1449, %v1453
    %v1455 = vpack.c.bf16 %v1454, %v1454
    %s1456 = scalar_lea.vmem [#allocation2], 7
    %v1457 = vld [vmem:[%s1456] ss:$8 sm:$0xf]
    %s1458 = scalar_lea.vmem [#allocation2], 71
    %v1459 = vld [vmem:[%s1458] ss:$8 sm:$0xf]
    %v1462 = vcombine.low %v1457, %v1459
    %v1464 = vunpack.c.l.s4 1966171168
    %v1465 = vunpack.c.0.s8 %v1464
    %v1466 = vlaneseq
    %v1467 = vshrl.u32 %v1466, 7
    %v1468 = vsub.s32 %v1465, %v1467
    %v1469 = vrot.slane %v1462, %v1468
    %v1470 = vcombine.high %v1469, %v1469
    %v1472 = vunpack.c.l.s4 1966171168
    %v1473 = vunpack.c.0.s8 %v1472
    %v1474 = vlaneseq
    %v1475 = vshrl.u32 %v1474, 7
    %v1476 = vsub.s32 %v1473, %v1475
    %v1477 = vrot.slane %v1469, %v1476
    %v1479 = vunpack.c.l.s4 1966171168
    %v1480 = vunpack.c.0.s8 %v1479
    %v1481 = vlaneseq
    %v1482 = vshrl.u32 %v1481, 7
    %v1483 = vsub.s32 %v1480, %v1482
    %v1484 = vrot.slane %v1470, %v1483
    %v1485 = vcombine.high %v1477, %v1477
    %v1486 = vcombine.high %v1484, %v1484
    %1491 = vmatprep.subr.bf16.mxu0 %v403
    %1492 = vmatpush1.bf16.msra.mxu0 %v402
    %1493 = vmatprep.subr.bf16.mxu0 %v407
    %1494 = vmatpush1.bf16.msra.mxu0 %v406
    %1495 = vmatprep.subr.bf16.mxu0 %v411
    %1496 = vmatpush1.bf16.msra.mxu0 %v410
    %1497 = vmatprep.subr.bf16.mxu0 %v415
    %1498 = vmatpush1.bf16.msra.mxu0 %v414
    %1499 = vmatprep.subr.bf16.mxu0 %v419
    %1500 = vmatpush1.bf16.msra.mxu0 %v418
    %1501 = vmatprep.subr.bf16.mxu0 %v423
    %1502 = vmatpush1.bf16.msra.mxu0 %v422
    %1503 = vmatprep.subr.bf16.mxu0 %v427
    %1504 = vmatpush1.bf16.msra.mxu0 %v426
    %1505 = vmatprep.subr.bf16.mxu0 %v431
    %1506 = vmatpush1.bf16.msra.mxu0 %v430
    %1507 = vmatprep.subr.bf16.mxu0 0
    %1508 = vmatpush1.bf16.msra.mxu0 0
    %1509 = vmatprep.subr.bf16.mxu0 0
    %1510 = vmatpush1.bf16.msra.mxu0 0
    %1511 = vmatprep.subr.bf16.mxu0 0
    %1512 = vmatpush1.bf16.msra.mxu0 0
    %1513 = vmatprep.subr.bf16.mxu0 0
    %1514 = vmatpush1.bf16.msra.mxu0 0
    %1515 = vmatprep.subr.bf16.mxu0 0
    %1516 = vmatpush1.bf16.msra.mxu0 0
    %1517 = vmatprep.subr.bf16.mxu0 0
    %1518 = vmatpush1.bf16.msra.mxu0 0
    %1519 = vmatprep.subr.bf16.mxu0 0
    %1520 = vmatpush1.bf16.msra.mxu0 0
    %1521 = vmatprep.subr.bf16.mxu0 0
    %1522 = vmatpush1.bf16.msra.mxu0 0
    %1523 = vmatprep.mubr.bf16.mxu0 0
    %1524 = vmatmul.mubr.bf16.gmra.mrb[0].mxu0 %v1455
    %v1525 = vpop.f32.mrb[0].mxu0
    %v1526 = vadd.f32 %v1477, %v1525
    %v1527 = vpop.f32.mrb[0].mxu0
    %v1528 = vadd.f32 %v1484, %v1527
    %v1529 = vpop.f32.mrb[0].mxu0
    %v1530 = vpop.f32.mrb[0].mxu0
    %1531 = vdwg.mxu0
    %1532 = vmatprep.subr.bf16.mxu0 %v405
    %1533 = vmatpush1.bf16.msra.mxu0 %v404
    %1534 = vmatprep.subr.bf16.mxu0 %v409
    %1535 = vmatpush1.bf16.msra.mxu0 %v408
    %1536 = vmatprep.subr.bf16.mxu0 %v413
    %1537 = vmatpush1.bf16.msra.mxu0 %v412
    %1538 = vmatprep.subr.bf16.mxu0 %v417
    %1539 = vmatpush1.bf16.msra.mxu0 %v416
    %1540 = vmatprep.subr.bf16.mxu0 %v421
    %1541 = vmatpush1.bf16.msra.mxu0 %v420
    %1542 = vmatprep.subr.bf16.mxu0 %v425
    %1543 = vmatpush1.bf16.msra.mxu0 %v424
    %1544 = vmatprep.subr.bf16.mxu0 %v429
    %1545 = vmatpush1.bf16.msra.mxu0 %v428
    %1546 = vmatprep.subr.bf16.mxu0 %v433
    %1547 = vmatpush1.bf16.msra.mxu0 %v432
    %1548 = vmatprep.subr.bf16.mxu0 0
    %1549 = vmatpush1.bf16.msra.mxu0 0
    %1550 = vmatprep.subr.bf16.mxu0 0
    %1551 = vmatpush1.bf16.msra.mxu0 0
    %1552 = vmatprep.subr.bf16.mxu0 0
    %1553 = vmatpush1.bf16.msra.mxu0 0
    %1554 = vmatprep.subr.bf16.mxu0 0
    %1555 = vmatpush1.bf16.msra.mxu0 0
    %1556 = vmatprep.subr.bf16.mxu0 0
    %1557 = vmatpush1.bf16.msra.mxu0 0
    %1558 = vmatprep.subr.bf16.mxu0 0
    %1559 = vmatpush1.bf16.msra.mxu0 0
    %1560 = vmatprep.subr.bf16.mxu0 0
    %1561 = vmatpush1.bf16.msra.mxu0 0
    %1562 = vmatprep.subr.bf16.mxu0 0
    %1563 = vmatpush1.bf16.msra.mxu0 0
    %1564 = vmatprep.mubr.bf16.mxu0 0
    %1565 = vmatmul.mubr.bf16.gmra.mrb[0].mxu0 %v1455
    %v1566 = vpop.f32.mrb[0].mxu0
    %v1567 = vadd.f32 %v1485, %v1566
    %v1568 = vpop.f32.mrb[0].mxu0
    %v1569 = vadd.f32 %v1486, %v1568
    %v1570 = vpop.f32.mrb[0].mxu0
    %v1571 = vpop.f32.mrb[0].mxu0
    %1572 = vdwg.mxu0
    %v1573 = vxor.u32 %v1526, 2147483648
    %v1574 = vmul.f32 %v1573, 1.442695
    %v1575 = vpow.pop %v1574
    %v1576 = vadd.f32 %v1575, 1.0
    %v1577 = vrcp.pop %v1576
    %v1578 = vmul.f32 1.0, %v1577
    %v1579 = vxor.u32 %v1528, 2147483648
    %v1580 = vmul.f32 %v1579, 1.442695
    %v1581 = vpow.pop %v1580
    %v1582 = vadd.f32 %v1581, 1.0
    %v1583 = vrcp.pop %v1582
    %v1584 = vmul.f32 1.0, %v1583
    %v1585 = vtanh.pop %v1567
    %v1586 = vxor.u32 %v1569, 2147483648
    %v1587 = vmul.f32 %v1586, 1.442695
    %v1588 = vpow.pop %v1587
    %v1589 = vadd.f32 %v1588, 1.0
    %v1590 = vrcp.pop %v1589
    %v1591 = vmul.f32 1.0, %v1590
    %v1592 = vmul.f32 %v1584, %v1452
    %v1593 = vmul.f32 %v1578, %v1585
    %v1594 = vadd.f32 %v1592, %v1593
    %v1595 = vtanh.pop %v1594
    %v1596 = vmul.f32 %v1591, %v1595
    %v1597 = vpack.c.bf16 %v1596, %v1596
    %s1598 = scalar_lea.vmem [#allocation2], 32
    %v1599 = vld [vmem:[%s1598] ss:$8 sm:$0xf]
    %s1600 = scalar_lea.vmem [#allocation2], 96
    %v1601 = vld [vmem:[%s1600] ss:$8 sm:$0xf]
    %v1604 = vcombine.low %v1599, %v1601
    %v1606 = vunpack.c.l.s4 1966171168
    %v1607 = vunpack.c.0.s8 %v1606
    %v1608 = vlaneseq
    %v1609 = vshrl.u32 %v1608, 7
    %v1610 = vsub.s32 %v1607, %v1609
    %v1611 = vrot.slane %v1604, %v1610
    %v1612 = vcombine.high %v1611, %v1611
    %v1614 = vunpack.c.l.s4 1966171168
    %v1615 = vunpack.c.0.s8 %v1614
    %v1616 = vlaneseq
    %v1617 = vshrl.u32 %v1616, 7
    %v1618 = vsub.s32 %v1615, %v1617
    %v1619 = vrot.slane %v1611, %v1618
    %v1621 = vunpack.c.l.s4 1966171168
    %v1622 = vunpack.c.0.s8 %v1621
    %v1623 = vlaneseq
    %v1624 = vshrl.u32 %v1623, 7
    %v1625 = vsub.s32 %v1622, %v1624
    %v1626 = vrot.slane %v1612, %v1625
    %v1627 = vcombine.high %v1619, %v1619
    %v1628 = vcombine.high %v1626, %v1626
    %1633 = vmatprep.subr.bf16.mxu0 %v403
    %1634 = vmatpush1.bf16.msra.mxu0 %v402
    %1635 = vmatprep.subr.bf16.mxu0 %v407
    %1636 = vmatpush1.bf16.msra.mxu0 %v406
    %1637 = vmatprep.subr.bf16.mxu0 %v411
    %1638 = vmatpush1.bf16.msra.mxu0 %v410
    %1639 = vmatprep.subr.bf16.mxu0 %v415
    %1640 = vmatpush1.bf16.msra.mxu0 %v414
    %1641 = vmatprep.subr.bf16.mxu0 %v419
    %1642 = vmatpush1.bf16.msra.mxu0 %v418
    %1643 = vmatprep.subr.bf16.mxu0 %v423
    %1644 = vmatpush1.bf16.msra.mxu0 %v422
    %1645 = vmatprep.subr.bf16.mxu0 %v427
    %1646 = vmatpush1.bf16.msra.mxu0 %v426
    %1647 = vmatprep.subr.bf16.mxu0 %v431
    %1648 = vmatpush1.bf16.msra.mxu0 %v430
    %1649 = vmatprep.subr.bf16.mxu0 0
    %1650 = vmatpush1.bf16.msra.mxu0 0
    %1651 = vmatprep.subr.bf16.mxu0 0
    %1652 = vmatpush1.bf16.msra.mxu0 0
    %1653 = vmatprep.subr.bf16.mxu0 0
    %1654 = vmatpush1.bf16.msra.mxu0 0
    %1655 = vmatprep.subr.bf16.mxu0 0
    %1656 = vmatpush1.bf16.msra.mxu0 0
    %1657 = vmatprep.subr.bf16.mxu0 0
    %1658 = vmatpush1.bf16.msra.mxu0 0
    %1659 = vmatprep.subr.bf16.mxu0 0
    %1660 = vmatpush1.bf16.msra.mxu0 0
    %1661 = vmatprep.subr.bf16.mxu0 0
    %1662 = vmatpush1.bf16.msra.mxu0 0
    %1663 = vmatprep.subr.bf16.mxu0 0
    %1664 = vmatpush1.bf16.msra.mxu0 0
    %1665 = vmatprep.mubr.bf16.mxu0 0
    %1666 = vmatmul.mubr.bf16.gmra.mrb[0].mxu0 %v1597
    %v1667 = vpop.f32.mrb[0].mxu0
    %v1668 = vadd.f32 %v1619, %v1667
    %v1669 = vpop.f32.mrb[0].mxu0
    %v1670 = vadd.f32 %v1626, %v1669
    %v1671 = vpop.f32.mrb[0].mxu0
    %v1672 = vpop.f32.mrb[0].mxu0
    %1673 = vdwg.mxu0
    %1674 = vmatprep.subr.bf16.mxu0 %v405
    %1675 = vmatpush1.bf16.msra.mxu0 %v404
    %1676 = vmatprep.subr.bf16.mxu0 %v409
    %1677 = vmatpush1.bf16.msra.mxu0 %v408
    %1678 = vmatprep.subr.bf16.mxu0 %v413
    %1679 = vmatpush1.bf16.msra.mxu0 %v412
    %1680 = vmatprep.subr.bf16.mxu0 %v417
    %1681 = vmatpush1.bf16.msra.mxu0 %v416
    %1682 = vmatprep.subr.bf16.mxu0 %v421
    %1683 = vmatpush1.bf16.msra.mxu0 %v420
    %1684 = vmatprep.subr.bf16.mxu0 %v425
    %1685 = vmatpush1.bf16.msra.mxu0 %v424
    %1686 = vmatprep.subr.bf16.mxu0 %v429
    %1687 = vmatpush1.bf16.msra.mxu0 %v428
    %1688 = vmatprep.subr.bf16.mxu0 %v433
    %1689 = vmatpush1.bf16.msra.mxu0 %v432
    %1690 = vmatprep.subr.bf16.mxu0 0
    %1691 = vmatpush1.bf16.msra.mxu0 0
    %1692 = vmatprep.subr.bf16.mxu0 0
    %1693 = vmatpush1.bf16.msra.mxu0 0
    %1694 = vmatprep.subr.bf16.mxu0 0
    %1695 = vmatpush1.bf16.msra.mxu0 0
    %1696 = vmatprep.subr.bf16.mxu0 0
    %1697 = vmatpush1.bf16.msra.mxu0 0
    %1698 = vmatprep.subr.bf16.mxu0 0
    %1699 = vmatpush1.bf16.msra.mxu0 0
    %1700 = vmatprep.subr.bf16.mxu0 0
    %1701 = vmatpush1.bf16.msra.mxu0 0
    %1702 = vmatprep.subr.bf16.mxu0 0
    %1703 = vmatpush1.bf16.msra.mxu0 0
    %1704 = vmatprep.subr.bf16.mxu0 0
    %1705 = vmatpush1.bf16.msra.mxu0 0
    %1706 = vmatprep.mubr.bf16.mxu0 0
    %1707 = vmatmul.mubr.bf16.gmra.mrb[0].mxu0 %v1597
    %v1708 = vpop.f32.mrb[0].mxu0
    %v1709 = vadd.f32 %v1627, %v1708
    %v1710 = vpop.f32.mrb[0].mxu0
    %v1711 = vadd.f32 %v1628, %v1710
    %v1712 = vpop.f32.mrb[0].mxu0
    %v1713 = vpop.f32.mrb[0].mxu0
    %1714 = vdwg.mxu0
    %v1715 = vxor.u32 %v1668, 2147483648
    %v1716 = vmul.f32 %v1715, 1.442695
    %v1717 = vpow.pop %v1716
    %v1718 = vadd.f32 %v1717, 1.0
    %v1719 = vrcp.pop %v1718
    %v1720 = vmul.f32 1.0, %v1719
    %v1721 = vxor.u32 %v1670, 2147483648
    %v1722 = vmul.f32 %v1721, 1.442695
    %v1723 = vpow.pop %v1722
    %v1724 = vadd.f32 %v1723, 1.0
    %v1725 = vrcp.pop %v1724
    %v1726 = vmul.f32 1.0, %v1725
    %v1727 = vtanh.pop %v1709
    %v1728 = vxor.u32 %v1711, 2147483648
    %v1729 = vmul.f32 %v1728, 1.442695
    %v1730 = vpow.pop %v1729
    %v1731 = vadd.f32 %v1730, 1.0
    %v1732 = vrcp.pop %v1731
    %v1733 = vmul.f32 1.0, %v1732
    %v1734 = vmul.f32 %v1726, %v1594
    %v1735 = vmul.f32 %v1720, %v1727
    %v1736 = vadd.f32 %v1734, %v1735
    %v1737 = vtanh.pop %v1736
    %v1738 = vmul.f32 %v1733, %v1737
    %v1739 = vpack.c.bf16 %v1738, %v1738
    %s1740 = scalar_lea.vmem [#allocation2], 33
    %v1741 = vld [vmem:[%s1740] ss:$8 sm:$0xf]
    %s1742 = scalar_lea.vmem [#allocation2], 97
    %v1743 = vld [vmem:[%s1742] ss:$8 sm:$0xf]
    %v1746 = vcombine.low %v1741, %v1743
    %v1748 = vunpack.c.l.s4 1966171168
    %v1749 = vunpack.c.0.s8 %v1748
    %v1750 = vlaneseq
    %v1751 = vshrl.u32 %v1750, 7
    %v1752 = vsub.s32 %v1749, %v1751
    %v1753 = vrot.slane %v1746, %v1752
    %v1754 = vcombine.high %v1753, %v1753
    %v1756 = vunpack.c.l.s4 1966171168
    %v1757 = vunpack.c.0.s8 %v1756
    %v1758 = vlaneseq
    %v1759 = vshrl.u32 %v1758, 7
    %v1760 = vsub.s32 %v1757, %v1759
    %v1761 = vrot.slane %v1753, %v1760
    %v1763 = vunpack.c.l.s4 1966171168
    %v1764 = vunpack.c.0.s8 %v1763
    %v1765 = vlaneseq
    %v1766 = vshrl.u32 %v1765, 7
    %v1767 = vsub.s32 %v1764, %v1766
    %v1768 = vrot.slane %v1754, %v1767
    %v1769 = vcombine.high %v1761, %v1761
    %v1770 = vcombine.high %v1768, %v1768
    %1775 = vmatprep.subr.bf16.mxu0 %v403
    %1776 = vmatpush1.bf16.msra.mxu0 %v402
    %1777 = vmatprep.subr.bf16.mxu0 %v407
    %1778 = vmatpush1.bf16.msra.mxu0 %v406
    %1779 = vmatprep.subr.bf16.mxu0 %v411
    %1780 = vmatpush1.bf16.msra.mxu0 %v410
    %1781 = vmatprep.subr.bf16.mxu0 %v415
    %1782 = vmatpush1.bf16.msra.mxu0 %v414
    %1783 = vmatprep.subr.bf16.mxu0 %v419
    %1784 = vmatpush1.bf16.msra.mxu0 %v418
    %1785 = vmatprep.subr.bf16.mxu0 %v423
    %1786 = vmatpush1.bf16.msra.mxu0 %v422
    %1787 = vmatprep.subr.bf16.mxu0 %v427
    %1788 = vmatpush1.bf16.msra.mxu0 %v426
    %1789 = vmatprep.subr.bf16.mxu0 %v431
    %1790 = vmatpush1.bf16.msra.mxu0 %v430
    %1791 = vmatprep.subr.bf16.mxu0 0
    %1792 = vmatpush1.bf16.msra.mxu0 0
    %1793 = vmatprep.subr.bf16.mxu0 0
    %1794 = vmatpush1.bf16.msra.mxu0 0
    %1795 = vmatprep.subr.bf16.mxu0 0
    %1796 = vmatpush1.bf16.msra.mxu0 0
    %1797 = vmatprep.subr.bf16.mxu0 0
    %1798 = vmatpush1.bf16.msra.mxu0 0
    %1799 = vmatprep.subr.bf16.mxu0 0
    %1800 = vmatpush1.bf16.msra.mxu0 0
    %1801 = vmatprep.subr.bf16.mxu0 0
    %1802 = vmatpush1.bf16.msra.mxu0 0
    %1803 = vmatprep.subr.bf16.mxu0 0
    %1804 = vmatpush1.bf16.msra.mxu0 0
    %1805 = vmatprep.subr.bf16.mxu0 0
    %1806 = vmatpush1.bf16.msra.mxu0 0
    %1807 = vmatprep.mubr.bf16.mxu0 0
    %1808 = vmatmul.mubr.bf16.gmra.mrb[0].mxu0 %v1739
    %v1809 = vpop.f32.mrb[0].mxu0
    %v1810 = vadd.f32 %v1761, %v1809
    %v1811 = vpop.f32.mrb[0].mxu0
    %v1812 = vadd.f32 %v1768, %v1811
    %v1813 = vpop.f32.mrb[0].mxu0
    %v1814 = vpop.f32.mrb[0].mxu0
    %1815 = vdwg.mxu0
    %1816 = vmatprep.subr.bf16.mxu0 %v405
    %1817 = vmatpush1.bf16.msra.mxu0 %v404
    %1818 = vmatprep.subr.bf16.mxu0 %v409
    %1819 = vmatpush1.bf16.msra.mxu0 %v408
    %1820 = vmatprep.subr.bf16.mxu0 %v413
    %1821 = vmatpush1.bf16.msra.mxu0 %v412
    %1822 = vmatprep.subr.bf16.mxu0 %v417
    %1823 = vmatpush1.bf16.msra.mxu0 %v416
    %1824 = vmatprep.subr.bf16.mxu0 %v421
    %1825 = vmatpush1.bf16.msra.mxu0 %v420
    %1826 = vmatprep.subr.bf16.mxu0 %v425
    %1827 = vmatpush1.bf16.msra.mxu0 %v424
    %1828 = vmatprep.subr.bf16.mxu0 %v429
    %1829 = vmatpush1.bf16.msra.mxu0 %v428
    %1830 = vmatprep.subr.bf16.mxu0 %v433
    %1831 = vmatpush1.bf16.msra.mxu0 %v432
    %1832 = vmatprep.subr.bf16.mxu0 0
    %1833 = vmatpush1.bf16.msra.mxu0 0
    %1834 = vmatprep.subr.bf16.mxu0 0
    %1835 = vmatpush1.bf16.msra.mxu0 0
    %1836 = vmatprep.subr.bf16.mxu0 0
    %1837 = vmatpush1.bf16.msra.mxu0 0
    %1838 = vmatprep.subr.bf16.mxu0 0
    %1839 = vmatpush1.bf16.msra.mxu0 0
    %1840 = vmatprep.subr.bf16.mxu0 0
    %1841 = vmatpush1.bf16.msra.mxu0 0
    %1842 = vmatprep.subr.bf16.mxu0 0
    %1843 = vmatpush1.bf16.msra.mxu0 0
    %1844 = vmatprep.subr.bf16.mxu0 0
    %1845 = vmatpush1.bf16.msra.mxu0 0
    %1846 = vmatprep.subr.bf16.mxu0 0
    %1847 = vmatpush1.bf16.msra.mxu0 0
    %1848 = vmatprep.mubr.bf16.mxu0 0
    %1849 = vmatmul.mubr.bf16.gmra.mrb[0].mxu0 %v1739
    %v1850 = vpop.f32.mrb[0].mxu0
    %v1851 = vadd.f32 %v1769, %v1850
    %v1852 = vpop.f32.mrb[0].mxu0
    %v1853 = vadd.f32 %v1770, %v1852
    %v1854 = vpop.f32.mrb[0].mxu0
    %v1855 = vpop.f32.mrb[0].mxu0
    %1856 = vdwg.mxu0
    %v1857 = vxor.u32 %v1810, 2147483648
    %v1858 = vmul.f32 %v1857, 1.442695
    %v1859 = vpow.pop %v1858
    %v1860 = vadd.f32 %v1859, 1.0
    %v1861 = vrcp.pop %v1860
    %v1862 = vmul.f32 1.0, %v1861
    %v1863 = vxor.u32 %v1812, 2147483648
    %v1864 = vmul.f32 %v1863, 1.442695
    %v1865 = vpow.pop %v1864
    %v1866 = vadd.f32 %v1865, 1.0
    %v1867 = vrcp.pop %v1866
    %v1868 = vmul.f32 1.0, %v1867
    %v1869 = vtanh.pop %v1851
    %v1870 = vxor.u32 %v1853, 2147483648
    %v1871 = vmul.f32 %v1870, 1.442695
    %v1872 = vpow.pop %v1871
    %v1873 = vadd.f32 %v1872, 1.0
    %v1874 = vrcp.pop %v1873
    %v1875 = vmul.f32 1.0, %v1874
    %v1876 = vmul.f32 %v1868, %v1736
    %v1877 = vmul.f32 %v1862, %v1869
    %v1878 = vadd.f32 %v1876, %v1877
    %v1879 = vtanh.pop %v1878
    %v1880 = vmul.f32 %v1875, %v1879
    %v1881 = vpack.c.bf16 %v1880, %v1880
    %s1882 = scalar_lea.vmem [#allocation2], 34
    %v1883 = vld [vmem:[%s1882] ss:$8 sm:$0xf]
    %s1884 = scalar_lea.vmem [#allocation2], 98
    %v1885 = vld [vmem:[%s1884] ss:$8 sm:$0xf]
    %v1888 = vcombine.low %v1883, %v1885
    %v1890 = vunpack.c.l.s4 1966171168
    %v1891 = vunpack.c.0.s8 %v1890
    %v1892 = vlaneseq
    %v1893 = vshrl.u32 %v1892, 7
    %v1894 = vsub.s32 %v1891, %v1893
    %v1895 = vrot.slane %v1888, %v1894
    %v1896 = vcombine.high %v1895, %v1895
    %v1898 = vunpack.c.l.s4 1966171168
    %v1899 = vunpack.c.0.s8 %v1898
    %v1900 = vlaneseq
    %v1901 = vshrl.u32 %v1900, 7
    %v1902 = vsub.s32 %v1899, %v1901
    %v1903 = vrot.slane %v1895, %v1902
    %v1905 = vunpack.c.l.s4 1966171168
    %v1906 = vunpack.c.0.s8 %v1905
    %v1907 = vlaneseq
    %v1908 = vshrl.u32 %v1907, 7
    %v1909 = vsub.s32 %v1906, %v1908
    %v1910 = vrot.slane %v1896, %v1909
    %v1911 = vcombine.high %v1903, %v1903
    %v1912 = vcombine.high %v1910, %v1910
    %1917 = vmatprep.subr.bf16.mxu0 %v403
    %1918 = vmatpush1.bf16.msra.mxu0 %v402
    %1919 = vmatprep.subr.bf16.mxu0 %v407
    %1920 = vmatpush1.bf16.msra.mxu0 %v406
    %1921 = vmatprep.subr.bf16.mxu0 %v411
    %1922 = vmatpush1.bf16.msra.mxu0 %v410
    %1923 = vmatprep.subr.bf16.mxu0 %v415
    %1924 = vmatpush1.bf16.msra.mxu0 %v414
    %1925 = vmatprep.subr.bf16.mxu0 %v419
    %1926 = vmatpush1.bf16.msra.mxu0 %v418
    %1927 = vmatprep.subr.bf16.mxu0 %v423
    %1928 = vmatpush1.bf16.msra.mxu0 %v422
    %1929 = vmatprep.subr.bf16.mxu0 %v427
    %1930 = vmatpush1.bf16.msra.mxu0 %v426
    %1931 = vmatprep.subr.bf16.mxu0 %v431
    %1932 = vmatpush1.bf16.msra.mxu0 %v430
    %1933 = vmatprep.subr.bf16.mxu0 0
    %1934 = vmatpush1.bf16.msra.mxu0 0
    %1935 = vmatprep.subr.bf16.mxu0 0
    %1936 = vmatpush1.bf16.msra.mxu0 0
    %1937 = vmatprep.subr.bf16.mxu0 0
    %1938 = vmatpush1.bf16.msra.mxu0 0
    %1939 = vmatprep.subr.bf16.mxu0 0
    %1940 = vmatpush1.bf16.msra.mxu0 0
    %1941 = vmatprep.subr.bf16.mxu0 0
    %1942 = vmatpush1.bf16.msra.mxu0 0
    %1943 = vmatprep.subr.bf16.mxu0 0
    %1944 = vmatpush1.bf16.msra.mxu0 0
    %1945 = vmatprep.subr.bf16.mxu0 0
    %1946 = vmatpush1.bf16.msra.mxu0 0
    %1947 = vmatprep.subr.bf16.mxu0 0
    %1948 = vmatpush1.bf16.msra.mxu0 0
    %1949 = vmatprep.mubr.bf16.mxu0 0
    %1950 = vmatmul.mubr.bf16.gmra.mrb[0].mxu0 %v1881
    %v1951 = vpop.f32.mrb[0].mxu0
    %v1952 = vadd.f32 %v1903, %v1951
    %v1953 = vpop.f32.mrb[0].mxu0
    %v1954 = vadd.f32 %v1910, %v1953
    %v1955 = vpop.f32.mrb[0].mxu0
    %v1956 = vpop.f32.mrb[0].mxu0
    %1957 = vdwg.mxu0
    %1958 = vmatprep.subr.bf16.mxu0 %v405
    %1959 = vmatpush1.bf16.msra.mxu0 %v404
    %1960 = vmatprep.subr.bf16.mxu0 %v409
    %1961 = vmatpush1.bf16.msra.mxu0 %v408
    %1962 = vmatprep.subr.bf16.mxu0 %v413
    %1963 = vmatpush1.bf16.msra.mxu0 %v412
    %1964 = vmatprep.subr.bf16.mxu0 %v417
    %1965 = vmatpush1.bf16.msra.mxu0 %v416
    %1966 = vmatprep.subr.bf16.mxu0 %v421
    %1967 = vmatpush1.bf16.msra.mxu0 %v420
    %1968 = vmatprep.subr.bf16.mxu0 %v425
    %1969 = vmatpush1.bf16.msra.mxu0 %v424
    %1970 = vmatprep.subr.bf16.mxu0 %v429
    %1971 = vmatpush1.bf16.msra.mxu0 %v428
    %1972 = vmatprep.subr.bf16.mxu0 %v433
    %1973 = vmatpush1.bf16.msra.mxu0 %v432
    %1974 = vmatprep.subr.bf16.mxu0 0
    %1975 = vmatpush1.bf16.msra.mxu0 0
    %1976 = vmatprep.subr.bf16.mxu0 0
    %1977 = vmatpush1.bf16.msra.mxu0 0
    %1978 = vmatprep.subr.bf16.mxu0 0
    %1979 = vmatpush1.bf16.msra.mxu0 0
    %1980 = vmatprep.subr.bf16.mxu0 0
    %1981 = vmatpush1.bf16.msra.mxu0 0
    %1982 = vmatprep.subr.bf16.mxu0 0
    %1983 = vmatpush1.bf16.msra.mxu0 0
    %1984 = vmatprep.subr.bf16.mxu0 0
    %1985 = vmatpush1.bf16.msra.mxu0 0
    %1986 = vmatprep.subr.bf16.mxu0 0
    %1987 = vmatpush1.bf16.msra.mxu0 0
    %1988 = vmatprep.subr.bf16.mxu0 0
    %1989 = vmatpush1.bf16.msra.mxu0 0
    %1990 = vmatprep.mubr.bf16.mxu0 0
    %1991 = vmatmul.mubr.bf16.gmra.mrb[0].mxu0 %v1881
    %v1992 = vpop.f32.mrb[0].mxu0
    %v1993 = vadd.f32 %v1911, %v1992
    %v1994 = vpop.f32.mrb[0].mxu0
    %v1995 = vadd.f32 %v1912, %v1994
    %v1996 = vpop.f32.mrb[0].mxu0
    %v1997 = vpop.f32.mrb[0].mxu0
    %1998 = vdwg.mxu0
    %v1999 = vxor.u32 %v1952, 2147483648
    %v2000 = vmul.f32 %v1999, 1.442695
    %v2001 = vpow.pop %v2000
    %v2002 = vadd.f32 %v2001, 1.0
    %v2003 = vrcp.pop %v2002
    %v2004 = vmul.f32 1.0, %v2003
    %v2005 = vxor.u32 %v1954, 2147483648
    %v2006 = vmul.f32 %v2005, 1.442695
    %v2007 = vpow.pop %v2006
    %v2008 = vadd.f32 %v2007, 1.0
    %v2009 = vrcp.pop %v2008
    %v2010 = vmul.f32 1.0, %v2009
    %v2011 = vtanh.pop %v1993
    %v2012 = vxor.u32 %v1995, 2147483648
    %v2013 = vmul.f32 %v2012, 1.442695
    %v2014 = vpow.pop %v2013
    %v2015 = vadd.f32 %v2014, 1.0
    %v2016 = vrcp.pop %v2015
    %v2017 = vmul.f32 1.0, %v2016
    %v2018 = vmul.f32 %v2010, %v1878
    %v2019 = vmul.f32 %v2004, %v2011
    %v2020 = vadd.f32 %v2018, %v2019
    %v2021 = vtanh.pop %v2020
    %v2022 = vmul.f32 %v2017, %v2021
    %v2023 = vpack.c.bf16 %v2022, %v2022
    %s2024 = scalar_lea.vmem [#allocation2], 35
    %v2025 = vld [vmem:[%s2024] ss:$8 sm:$0xf]
    %s2026 = scalar_lea.vmem [#allocation2], 99
    %v2027 = vld [vmem:[%s2026] ss:$8 sm:$0xf]
    %v2030 = vcombine.low %v2025, %v2027
    %v2032 = vunpack.c.l.s4 1966171168
    %v2033 = vunpack.c.0.s8 %v2032
    %v2034 = vlaneseq
    %v2035 = vshrl.u32 %v2034, 7
    %v2036 = vsub.s32 %v2033, %v2035
    %v2037 = vrot.slane %v2030, %v2036
    %v2038 = vcombine.high %v2037, %v2037
    %v2040 = vunpack.c.l.s4 1966171168
    %v2041 = vunpack.c.0.s8 %v2040
    %v2042 = vlaneseq
    %v2043 = vshrl.u32 %v2042, 7
    %v2044 = vsub.s32 %v2041, %v2043
    %v2045 = vrot.slane %v2037, %v2044
    %v2047 = vunpack.c.l.s4 1966171168
    %v2048 = vunpack.c.0.s8 %v2047
    %v2049 = vlaneseq
    %v2050 = vshrl.u32 %v2049, 7
    %v2051 = vsub.s32 %v2048, %v2050
    %v2052 = vrot.slane %v2038, %v2051
    %v2053 = vcombine.high %v2045, %v2045
    %v2054 = vcombine.high %v2052, %v2052
    %2059 = vmatprep.subr.bf16.mxu0 %v403
    %2060 = vmatpush1.bf16.msra.mxu0 %v402
    %2061 = vmatprep.subr.bf16.mxu0 %v407
    %2062 = vmatpush1.bf16.msra.mxu0 %v406
    %2063 = vmatprep.subr.bf16.mxu0 %v411
    %2064 = vmatpush1.bf16.msra.mxu0 %v410
    %2065 = vmatprep.subr.bf16.mxu0 %v415
    %2066 = vmatpush1.bf16.msra.mxu0 %v414
    %2067 = vmatprep.subr.bf16.mxu0 %v419
    %2068 = vmatpush1.bf16.msra.mxu0 %v418
    %2069 = vmatprep.subr.bf16.mxu0 %v423
    %2070 = vmatpush1.bf16.msra.mxu0 %v422
    %2071 = vmatprep.subr.bf16.mxu0 %v427
    %2072 = vmatpush1.bf16.msra.mxu0 %v426
    %2073 = vmatprep.subr.bf16.mxu0 %v431
    %2074 = vmatpush1.bf16.msra.mxu0 %v430
    %2075 = vmatprep.subr.bf16.mxu0 0
    %2076 = vmatpush1.bf16.msra.mxu0 0
    %2077 = vmatprep.subr.bf16.mxu0 0
    %2078 = vmatpush1.bf16.msra.mxu0 0
    %2079 = vmatprep.subr.bf16.mxu0 0
    %2080 = vmatpush1.bf16.msra.mxu0 0
    %2081 = vmatprep.subr.bf16.mxu0 0
    %2082 = vmatpush1.bf16.msra.mxu0 0
    %2083 = vmatprep.subr.bf16.mxu0 0
    %2084 = vmatpush1.bf16.msra.mxu0 0
    %2085 = vmatprep.subr.bf16.mxu0 0
    %2086 = vmatpush1.bf16.msra.mxu0 0
    %2087 = vmatprep.subr.bf16.mxu0 0
    %2088 = vmatpush1.bf16.msra.mxu0 0
    %2089 = vmatprep.subr.bf16.mxu0 0
    %2090 = vmatpush1.bf16.msra.mxu0 0
    %2091 = vmatprep.mubr.bf16.mxu0 0
    %2092 = vmatmul.mubr.bf16.gmra.mrb[0].mxu0 %v2023
    %v2093 = vpop.f32.mrb[0].mxu0
    %v2094 = vadd.f32 %v2045, %v2093
    %v2095 = vpop.f32.mrb[0].mxu0
    %v2096 = vadd.f32 %v2052, %v2095
    %v2097 = vpop.f32.mrb[0].mxu0
    %v2098 = vpop.f32.mrb[0].mxu0
    %2099 = vdwg.mxu0
    %2100 = vmatprep.subr.bf16.mxu0 %v405
    %2101 = vmatpush1.bf16.msra.mxu0 %v404
    %2102 = vmatprep.subr.bf16.mxu0 %v409
    %2103 = vmatpush1.bf16.msra.mxu0 %v408
    %2104 = vmatprep.subr.bf16.mxu0 %v413
    %2105 = vmatpush1.bf16.msra.mxu0 %v412
    %2106 = vmatprep.subr.bf16.mxu0 %v417
    %2107 = vmatpush1.bf16.msra.mxu0 %v416
    %2108 = vmatprep.subr.bf16.mxu0 %v421
    %2109 = vmatpush1.bf16.msra.mxu0 %v420
    %2110 = vmatprep.subr.bf16.mxu0 %v425
    %2111 = vmatpush1.bf16.msra.mxu0 %v424
    %2112 = vmatprep.subr.bf16.mxu0 %v429
    %2113 = vmatpush1.bf16.msra.mxu0 %v428
    %2114 = vmatprep.subr.bf16.mxu0 %v433
    %2115 = vmatpush1.bf16.msra.mxu0 %v432
    %2116 = vmatprep.subr.bf16.mxu0 0
    %2117 = vmatpush1.bf16.msra.mxu0 0
    %2118 = vmatprep.subr.bf16.mxu0 0
    %2119 = vmatpush1.bf16.msra.mxu0 0
    %2120 = vmatprep.subr.bf16.mxu0 0
    %2121 = vmatpush1.bf16.msra.mxu0 0
    %2122 = vmatprep.subr.bf16.mxu0 0
    %2123 = vmatpush1.bf16.msra.mxu0 0
    %2124 = vmatprep.subr.bf16.mxu0 0
    %2125 = vmatpush1.bf16.msra.mxu0 0
    %2126 = vmatprep.subr.bf16.mxu0 0
    %2127 = vmatpush1.bf16.msra.mxu0 0
    %2128 = vmatprep.subr.bf16.mxu0 0
    %2129 = vmatpush1.bf16.msra.mxu0 0
    %2130 = vmatprep.subr.bf16.mxu0 0
    %2131 = vmatpush1.bf16.msra.mxu0 0
    %2132 = vmatprep.mubr.bf16.mxu0 0
    %2133 = vmatmul.mubr.bf16.gmra.mrb[0].mxu0 %v2023
    %v2134 = vpop.f32.mrb[0].mxu0
    %v2135 = vadd.f32 %v2053, %v2134
    %v2136 = vpop.f32.mrb[0].mxu0
    %v2137 = vadd.f32 %v2054, %v2136
    %v2138 = vpop.f32.mrb[0].mxu0
    %v2139 = vpop.f32.mrb[0].mxu0
    %2140 = vdwg.mxu0
    %v2141 = vxor.u32 %v2094, 2147483648
    %v2142 = vmul.f32 %v2141, 1.442695
    %v2143 = vpow.pop %v2142
    %v2144 = vadd.f32 %v2143, 1.0
    %v2145 = vrcp.pop %v2144
    %v2146 = vmul.f32 1.0, %v2145
    %v2147 = vxor.u32 %v2096, 2147483648
    %v2148 = vmul.f32 %v2147, 1.442695
    %v2149 = vpow.pop %v2148
    %v2150 = vadd.f32 %v2149, 1.0
    %v2151 = vrcp.pop %v2150
    %v2152 = vmul.f32 1.0, %v2151
    %v2153 = vtanh.pop %v2135
    %v2154 = vxor.u32 %v2137, 2147483648
    %v2155 = vmul.f32 %v2154, 1.442695
    %v2156 = vpow.pop %v2155
    %v2157 = vadd.f32 %v2156, 1.0
    %v2158 = vrcp.pop %v2157
    %v2159 = vmul.f32 1.0, %v2158
    %v2160 = vmul.f32 %v2152, %v2020
    %v2161 = vmul.f32 %v2146, %v2153
    %v2162 = vadd.f32 %v2160, %v2161
    %v2163 = vtanh.pop %v2162
    %v2164 = vmul.f32 %v2159, %v2163
    %v2165 = vpack.c.bf16 %v2164, %v2164
    %s2166 = scalar_lea.vmem [#allocation2], 36
    %v2167 = vld [vmem:[%s2166] ss:$8 sm:$0xf]
    %s2168 = scalar_lea.vmem [#allocation2], 100
    %v2169 = vld [vmem:[%s2168] ss:$8 sm:$0xf]
    %v2172 = vcombine.low %v2167, %v2169
    %v2174 = vunpack.c.l.s4 1966171168
    %v2175 = vunpack.c.0.s8 %v2174
    %v2176 = vlaneseq
    %v2177 = vshrl.u32 %v2176, 7
    %v2178 = vsub.s32 %v2175, %v2177
    %v2179 = vrot.slane %v2172, %v2178
    %v2180 = vcombine.high %v2179, %v2179
    %v2182 = vunpack.c.l.s4 1966171168
    %v2183 = vunpack.c.0.s8 %v2182
    %v2184 = vlaneseq
    %v2185 = vshrl.u32 %v2184, 7
    %v2186 = vsub.s32 %v2183, %v2185
    %v2187 = vrot.slane %v2179, %v2186
    %v2189 = vunpack.c.l.s4 1966171168
    %v2190 = vunpack.c.0.s8 %v2189
    %v2191 = vlaneseq
    %v2192 = vshrl.u32 %v2191, 7
    %v2193 = vsub.s32 %v2190, %v2192
    %v2194 = vrot.slane %v2180, %v2193
    %v2195 = vcombine.high %v2187, %v2187
    %v2196 = vcombine.high %v2194, %v2194
    %2201 = vmatprep.subr.bf16.mxu0 %v403
    %2202 = vmatpush1.bf16.msra.mxu0 %v402
    %2203 = vmatprep.subr.bf16.mxu0 %v407
    %2204 = vmatpush1.bf16.msra.mxu0 %v406
    %2205 = vmatprep.subr.bf16.mxu0 %v411
    %2206 = vmatpush1.bf16.msra.mxu0 %v410
    %2207 = vmatprep.subr.bf16.mxu0 %v415
    %2208 = vmatpush1.bf16.msra.mxu0 %v414
    %2209 = vmatprep.subr.bf16.mxu0 %v419
    %2210 = vmatpush1.bf16.msra.mxu0 %v418
    %2211 = vmatprep.subr.bf16.mxu0 %v423
    %2212 = vmatpush1.bf16.msra.mxu0 %v422
    %2213 = vmatprep.subr.bf16.mxu0 %v427
    %2214 = vmatpush1.bf16.msra.mxu0 %v426
    %2215 = vmatprep.subr.bf16.mxu0 %v431
    %2216 = vmatpush1.bf16.msra.mxu0 %v430
    %2217 = vmatprep.subr.bf16.mxu0 0
    %2218 = vmatpush1.bf16.msra.mxu0 0
    %2219 = vmatprep.subr.bf16.mxu0 0
    %2220 = vmatpush1.bf16.msra.mxu0 0
    %2221 = vmatprep.subr.bf16.mxu0 0
    %2222 = vmatpush1.bf16.msra.mxu0 0
    %2223 = vmatprep.subr.bf16.mxu0 0
    %2224 = vmatpush1.bf16.msra.mxu0 0
    %2225 = vmatprep.subr.bf16.mxu0 0
    %2226 = vmatpush1.bf16.msra.mxu0 0
    %2227 = vmatprep.subr.bf16.mxu0 0
    %2228 = vmatpush1.bf16.msra.mxu0 0
    %2229 = vmatprep.subr.bf16.mxu0 0
    %2230 = vmatpush1.bf16.msra.mxu0 0
    %2231 = vmatprep.subr.bf16.mxu0 0
    %2232 = vmatpush1.bf16.msra.mxu0 0
    %2233 = vmatprep.mubr.bf16.mxu0 0
    %2234 = vmatmul.mubr.bf16.gmra.mrb[0].mxu0 %v2165
    %v2235 = vpop.f32.mrb[0].mxu0
    %v2236 = vadd.f32 %v2187, %v2235
    %v2237 = vpop.f32.mrb[0].mxu0
    %v2238 = vadd.f32 %v2194, %v2237
    %v2239 = vpop.f32.mrb[0].mxu0
    %v2240 = vpop.f32.mrb[0].mxu0
    %2241 = vdwg.mxu0
    %2242 = vmatprep.subr.bf16.mxu0 %v405
    %2243 = vmatpush1.bf16.msra.mxu0 %v404
    %2244 = vmatprep.subr.bf16.mxu0 %v409
    %2245 = vmatpush1.bf16.msra.mxu0 %v408
    %2246 = vmatprep.subr.bf16.mxu0 %v413
    %2247 = vmatpush1.bf16.msra.mxu0 %v412
    %2248 = vmatprep.subr.bf16.mxu0 %v417
    %2249 = vmatpush1.bf16.msra.mxu0 %v416
    %2250 = vmatprep.subr.bf16.mxu0 %v421
    %2251 = vmatpush1.bf16.msra.mxu0 %v420
    %2252 = vmatprep.subr.bf16.mxu0 %v425
    %2253 = vmatpush1.bf16.msra.mxu0 %v424
    %2254 = vmatprep.subr.bf16.mxu0 %v429
    %2255 = vmatpush1.bf16.msra.mxu0 %v428
    %2256 = vmatprep.subr.bf16.mxu0 %v433
    %2257 = vmatpush1.bf16.msra.mxu0 %v432
    %2258 = vmatprep.subr.bf16.mxu0 0
    %2259 = vmatpush1.bf16.msra.mxu0 0
    %2260 = vmatprep.subr.bf16.mxu0 0
    %2261 = vmatpush1.bf16.msra.mxu0 0
    %2262 = vmatprep.subr.bf16.mxu0 0
    %2263 = vmatpush1.bf16.msra.mxu0 0
    %2264 = vmatprep.subr.bf16.mxu0 0
    %2265 = vmatpush1.bf16.msra.mxu0 0
    %2266 = vmatprep.subr.bf16.mxu0 0
    %2267 = vmatpush1.bf16.msra.mxu0 0
    %2268 = vmatprep.subr.bf16.mxu0 0
    %2269 = vmatpush1.bf16.msra.mxu0 0
    %2270 = vmatprep.subr.bf16.mxu0 0
    %2271 = vmatpush1.bf16.msra.mxu0 0
    %2272 = vmatprep.subr.bf16.mxu0 0
    %2273 = vmatpush1.bf16.msra.mxu0 0
    %2274 = vmatprep.mubr.bf16.mxu0 0
    %2275 = vmatmul.mubr.bf16.gmra.mrb[0].mxu0 %v2165
    %v2276 = vpop.f32.mrb[0].mxu0
    %v2277 = vadd.f32 %v2195, %v2276
    %v2278 = vpop.f32.mrb[0].mxu0
    %v2279 = vadd.f32 %v2196, %v2278
    %v2280 = vpop.f32.mrb[0].mxu0
    %v2281 = vpop.f32.mrb[0].mxu0
    %2282 = vdwg.mxu0
    %v2283 = vxor.u32 %v2236, 2147483648
    %v2284 = vmul.f32 %v2283, 1.442695
    %v2285 = vpow.pop %v2284
    %v2286 = vadd.f32 %v2285, 1.0
    %v2287 = vrcp.pop %v2286
    %v2288 = vmul.f32 1.0, %v2287
    %v2289 = vxor.u32 %v2238, 2147483648
    %v2290 = vmul.f32 %v2289, 1.442695
    %v2291 = vpow.pop %v2290
    %v2292 = vadd.f32 %v2291, 1.0
    %v2293 = vrcp.pop %v2292
    %v2294 = vmul.f32 1.0, %v2293
    %v2295 = vtanh.pop %v2277
    %v2296 = vxor.u32 %v2279, 2147483648
    %v2297 = vmul.f32 %v2296, 1.442695
    %v2298 = vpow.pop %v2297
    %v2299 = vadd.f32 %v2298, 1.0
    %v2300 = vrcp.pop %v2299
    %v2301 = vmul.f32 1.0, %v2300
    %v2302 = vmul.f32 %v2294, %v2162
    %v2303 = vmul.f32 %v2288, %v2295
    %v2304 = vadd.f32 %v2302, %v2303
    %v2305 = vtanh.pop %v2304
    %v2306 = vmul.f32 %v2301, %v2305
    %v2307 = vpack.c.bf16 %v2306, %v2306
    %s2308 = scalar_lea.vmem [#allocation2], 37
    %v2309 = vld [vmem:[%s2308] ss:$8 sm:$0xf]
    %s2310 = scalar_lea.vmem [#allocation2], 101
    %v2311 = vld [vmem:[%s2310] ss:$8 sm:$0xf]
    %v2314 = vcombine.low %v2309, %v2311
    %v2316 = vunpack.c.l.s4 1966171168
    %v2317 = vunpack.c.0.s8 %v2316
    %v2318 = vlaneseq
    %v2319 = vshrl.u32 %v2318, 7
    %v2320 = vsub.s32 %v2317, %v2319
    %v2321 = vrot.slane %v2314, %v2320
    %v2322 = vcombine.high %v2321, %v2321
    %v2324 = vunpack.c.l.s4 1966171168
    %v2325 = vunpack.c.0.s8 %v2324
    %v2326 = vlaneseq
    %v2327 = vshrl.u32 %v2326, 7
    %v2328 = vsub.s32 %v2325, %v2327
    %v2329 = vrot.slane %v2321, %v2328
    %v2331 = vunpack.c.l.s4 1966171168
    %v2332 = vunpack.c.0.s8 %v2331
    %v2333 = vlaneseq
    %v2334 = vshrl.u32 %v2333, 7
    %v2335 = vsub.s32 %v2332, %v2334
    %v2336 = vrot.slane %v2322, %v2335
    %v2337 = vcombine.high %v2329, %v2329
    %v2338 = vcombine.high %v2336, %v2336
    %2343 = vmatprep.subr.bf16.mxu0 %v403
    %2344 = vmatpush1.bf16.msra.mxu0 %v402
    %2345 = vmatprep.subr.bf16.mxu0 %v407
    %2346 = vmatpush1.bf16.msra.mxu0 %v406
    %2347 = vmatprep.subr.bf16.mxu0 %v411
    %2348 = vmatpush1.bf16.msra.mxu0 %v410
    %2349 = vmatprep.subr.bf16.mxu0 %v415
    %2350 = vmatpush1.bf16.msra.mxu0 %v414
    %2351 = vmatprep.subr.bf16.mxu0 %v419
    %2352 = vmatpush1.bf16.msra.mxu0 %v418
    %2353 = vmatprep.subr.bf16.mxu0 %v423
    %2354 = vmatpush1.bf16.msra.mxu0 %v422
    %2355 = vmatprep.subr.bf16.mxu0 %v427
    %2356 = vmatpush1.bf16.msra.mxu0 %v426
    %2357 = vmatprep.subr.bf16.mxu0 %v431
    %2358 = vmatpush1.bf16.msra.mxu0 %v430
    %2359 = vmatprep.subr.bf16.mxu0 0
    %2360 = vmatpush1.bf16.msra.mxu0 0
    %2361 = vmatprep.subr.bf16.mxu0 0
    %2362 = vmatpush1.bf16.msra.mxu0 0
    %2363 = vmatprep.subr.bf16.mxu0 0
    %2364 = vmatpush1.bf16.msra.mxu0 0
    %2365 = vmatprep.subr.bf16.mxu0 0
    %2366 = vmatpush1.bf16.msra.mxu0 0
    %2367 = vmatprep.subr.bf16.mxu0 0
    %2368 = vmatpush1.bf16.msra.mxu0 0
    %2369 = vmatprep.subr.bf16.mxu0 0
    %2370 = vmatpush1.bf16.msra.mxu0 0
    %2371 = vmatprep.subr.bf16.mxu0 0
    %2372 = vmatpush1.bf16.msra.mxu0 0
    %2373 = vmatprep.subr.bf16.mxu0 0
    %2374 = vmatpush1.bf16.msra.mxu0 0
    %2375 = vmatprep.mubr.bf16.mxu0 0
    %2376 = vmatmul.mubr.bf16.gmra.mrb[0].mxu0 %v2307
    %v2377 = vpop.f32.mrb[0].mxu0
    %v2378 = vadd.f32 %v2329, %v2377
    %v2379 = vpop.f32.mrb[0].mxu0
    %v2380 = vadd.f32 %v2336, %v2379
    %v2381 = vpop.f32.mrb[0].mxu0
    %v2382 = vpop.f32.mrb[0].mxu0
    %2383 = vdwg.mxu0
    %2384 = vmatprep.subr.bf16.mxu0 %v405
    %2385 = vmatpush1.bf16.msra.mxu0 %v404
    %2386 = vmatprep.subr.bf16.mxu0 %v409
    %2387 = vmatpush1.bf16.msra.mxu0 %v408
    %2388 = vmatprep.subr.bf16.mxu0 %v413
    %2389 = vmatpush1.bf16.msra.mxu0 %v412
    %2390 = vmatprep.subr.bf16.mxu0 %v417
    %2391 = vmatpush1.bf16.msra.mxu0 %v416
    %2392 = vmatprep.subr.bf16.mxu0 %v421
    %2393 = vmatpush1.bf16.msra.mxu0 %v420
    %2394 = vmatprep.subr.bf16.mxu0 %v425
    %2395 = vmatpush1.bf16.msra.mxu0 %v424
    %2396 = vmatprep.subr.bf16.mxu0 %v429
    %2397 = vmatpush1.bf16.msra.mxu0 %v428
    %2398 = vmatprep.subr.bf16.mxu0 %v433
    %2399 = vmatpush1.bf16.msra.mxu0 %v432
    %2400 = vmatprep.subr.bf16.mxu0 0
    %2401 = vmatpush1.bf16.msra.mxu0 0
    %2402 = vmatprep.subr.bf16.mxu0 0
    %2403 = vmatpush1.bf16.msra.mxu0 0
    %2404 = vmatprep.subr.bf16.mxu0 0
    %2405 = vmatpush1.bf16.msra.mxu0 0
    %2406 = vmatprep.subr.bf16.mxu0 0
    %2407 = vmatpush1.bf16.msra.mxu0 0
    %2408 = vmatprep.subr.bf16.mxu0 0
    %2409 = vmatpush1.bf16.msra.mxu0 0
    %2410 = vmatprep.subr.bf16.mxu0 0
    %2411 = vmatpush1.bf16.msra.mxu0 0
    %2412 = vmatprep.subr.bf16.mxu0 0
    %2413 = vmatpush1.bf16.msra.mxu0 0
    %2414 = vmatprep.subr.bf16.mxu0 0
    %2415 = vmatpush1.bf16.msra.mxu0 0
    %2416 = vmatprep.mubr.bf16.mxu0 0
    %2417 = vmatmul.mubr.bf16.gmra.mrb[0].mxu0 %v2307
    %v2418 = vpop.f32.mrb[0].mxu0
    %v2419 = vadd.f32 %v2337, %v2418
    %v2420 = vpop.f32.mrb[0].mxu0
    %v2421 = vadd.f32 %v2338, %v2420
    %v2422 = vpop.f32.mrb[0].mxu0
    %v2423 = vpop.f32.mrb[0].mxu0
    %2424 = vdwg.mxu0
    %v2425 = vxor.u32 %v2378, 2147483648
    %v2426 = vmul.f32 %v2425, 1.442695
    %v2427 = vpow.pop %v2426
    %v2428 = vadd.f32 %v2427, 1.0
    %v2429 = vrcp.pop %v2428
    %v2430 = vmul.f32 1.0, %v2429
    %v2431 = vxor.u32 %v2380, 2147483648
    %v2432 = vmul.f32 %v2431, 1.442695
    %v2433 = vpow.pop %v2432
    %v2434 = vadd.f32 %v2433, 1.0
    %v2435 = vrcp.pop %v2434
    %v2436 = vmul.f32 1.0, %v2435
    %v2437 = vtanh.pop %v2419
    %v2438 = vxor.u32 %v2421, 2147483648
    %v2439 = vmul.f32 %v2438, 1.442695
    %v2440 = vpow.pop %v2439
    %v2441 = vadd.f32 %v2440, 1.0
    %v2442 = vrcp.pop %v2441
    %v2443 = vmul.f32 1.0, %v2442
    %v2444 = vmul.f32 %v2436, %v2304
    %v2445 = vmul.f32 %v2430, %v2437
    %v2446 = vadd.f32 %v2444, %v2445
    %v2447 = vtanh.pop %v2446
    %v2448 = vmul.f32 %v2443, %v2447
    %v2449 = vpack.c.bf16 %v2448, %v2448
    %s2450 = scalar_lea.vmem [#allocation2], 38
    %v2451 = vld [vmem:[%s2450] ss:$8 sm:$0xf]
    %s2452 = scalar_lea.vmem [#allocation2], 102
    %v2453 = vld [vmem:[%s2452] ss:$8 sm:$0xf]
    %v2456 = vcombine.low %v2451, %v2453
    %v2458 = vunpack.c.l.s4 1966171168
    %v2459 = vunpack.c.0.s8 %v2458
    %v2460 = vlaneseq
    %v2461 = vshrl.u32 %v2460, 7
    %v2462 = vsub.s32 %v2459, %v2461
    %v2463 = vrot.slane %v2456, %v2462
    %v2464 = vcombine.high %v2463, %v2463
    %v2466 = vunpack.c.l.s4 1966171168
    %v2467 = vunpack.c.0.s8 %v2466
    %v2468 = vlaneseq
    %v2469 = vshrl.u32 %v2468, 7
    %v2470 = vsub.s32 %v2467, %v2469
    %v2471 = vrot.slane %v2463, %v2470
    %v2473 = vunpack.c.l.s4 1966171168
    %v2474 = vunpack.c.0.s8 %v2473
    %v2475 = vlaneseq
    %v2476 = vshrl.u32 %v2475, 7
    %v2477 = vsub.s32 %v2474, %v2476
    %v2478 = vrot.slane %v2464, %v2477
    %v2479 = vcombine.high %v2471, %v2471
    %v2480 = vcombine.high %v2478, %v2478
    %2485 = vmatprep.subr.bf16.mxu0 %v403
    %2486 = vmatpush1.bf16.msra.mxu0 %v402
    %2487 = vmatprep.subr.bf16.mxu0 %v407
    %2488 = vmatpush1.bf16.msra.mxu0 %v406
    %2489 = vmatprep.subr.bf16.mxu0 %v411
    %2490 = vmatpush1.bf16.msra.mxu0 %v410
    %2491 = vmatprep.subr.bf16.mxu0 %v415
    %2492 = vmatpush1.bf16.msra.mxu0 %v414
    %2493 = vmatprep.subr.bf16.mxu0 %v419
    %2494 = vmatpush1.bf16.msra.mxu0 %v418
    %2495 = vmatprep.subr.bf16.mxu0 %v423
    %2496 = vmatpush1.bf16.msra.mxu0 %v422
    %2497 = vmatprep.subr.bf16.mxu0 %v427
    %2498 = vmatpush1.bf16.msra.mxu0 %v426
    %2499 = vmatprep.subr.bf16.mxu0 %v431
    %2500 = vmatpush1.bf16.msra.mxu0 %v430
    %2501 = vmatprep.subr.bf16.mxu0 0
    %2502 = vmatpush1.bf16.msra.mxu0 0
    %2503 = vmatprep.subr.bf16.mxu0 0
    %2504 = vmatpush1.bf16.msra.mxu0 0
    %2505 = vmatprep.subr.bf16.mxu0 0
    %2506 = vmatpush1.bf16.msra.mxu0 0
    %2507 = vmatprep.subr.bf16.mxu0 0
    %2508 = vmatpush1.bf16.msra.mxu0 0
    %2509 = vmatprep.subr.bf16.mxu0 0
    %2510 = vmatpush1.bf16.msra.mxu0 0
    %2511 = vmatprep.subr.bf16.mxu0 0
    %2512 = vmatpush1.bf16.msra.mxu0 0
    %2513 = vmatprep.subr.bf16.mxu0 0
    %2514 = vmatpush1.bf16.msra.mxu0 0
    %2515 = vmatprep.subr.bf16.mxu0 0
    %2516 = vmatpush1.bf16.msra.mxu0 0
    %2517 = vmatprep.mubr.bf16.mxu0 0
    %2518 = vmatmul.mubr.bf16.gmra.mrb[0].mxu0 %v2449
    %v2519 = vpop.f32.mrb[0].mxu0
    %v2520 = vadd.f32 %v2471, %v2519
    %v2521 = vpop.f32.mrb[0].mxu0
    %v2522 = vadd.f32 %v2478, %v2521
    %v2523 = vpop.f32.mrb[0].mxu0
    %v2524 = vpop.f32.mrb[0].mxu0
    %2525 = vdwg.mxu0
    %2526 = vmatprep.subr.bf16.mxu0 %v405
    %2527 = vmatpush1.bf16.msra.mxu0 %v404
    %2528 = vmatprep.subr.bf16.mxu0 %v409
    %2529 = vmatpush1.bf16.msra.mxu0 %v408
    %2530 = vmatprep.subr.bf16.mxu0 %v413
    %2531 = vmatpush1.bf16.msra.mxu0 %v412
    %2532 = vmatprep.subr.bf16.mxu0 %v417
    %2533 = vmatpush1.bf16.msra.mxu0 %v416
    %2534 = vmatprep.subr.bf16.mxu0 %v421
    %2535 = vmatpush1.bf16.msra.mxu0 %v420
    %2536 = vmatprep.subr.bf16.mxu0 %v425
    %2537 = vmatpush1.bf16.msra.mxu0 %v424
    %2538 = vmatprep.subr.bf16.mxu0 %v429
    %2539 = vmatpush1.bf16.msra.mxu0 %v428
    %2540 = vmatprep.subr.bf16.mxu0 %v433
    %2541 = vmatpush1.bf16.msra.mxu0 %v432
    %2542 = vmatprep.subr.bf16.mxu0 0
    %2543 = vmatpush1.bf16.msra.mxu0 0
    %2544 = vmatprep.subr.bf16.mxu0 0
    %2545 = vmatpush1.bf16.msra.mxu0 0
    %2546 = vmatprep.subr.bf16.mxu0 0
    %2547 = vmatpush1.bf16.msra.mxu0 0
    %2548 = vmatprep.subr.bf16.mxu0 0
    %2549 = vmatpush1.bf16.msra.mxu0 0
    %2550 = vmatprep.subr.bf16.mxu0 0
    %2551 = vmatpush1.bf16.msra.mxu0 0
    %2552 = vmatprep.subr.bf16.mxu0 0
    %2553 = vmatpush1.bf16.msra.mxu0 0
    %2554 = vmatprep.subr.bf16.mxu0 0
    %2555 = vmatpush1.bf16.msra.mxu0 0
    %2556 = vmatprep.subr.bf16.mxu0 0
    %2557 = vmatpush1.bf16.msra.mxu0 0
    %2558 = vmatprep.mubr.bf16.mxu0 0
    %2559 = vmatmul.mubr.bf16.gmra.mrb[0].mxu0 %v2449
    %v2560 = vpop.f32.mrb[0].mxu0
    %v2561 = vadd.f32 %v2479, %v2560
    %v2562 = vpop.f32.mrb[0].mxu0
    %v2563 = vadd.f32 %v2480, %v2562
    %v2564 = vpop.f32.mrb[0].mxu0
    %v2565 = vpop.f32.mrb[0].mxu0
    %2566 = vdwg.mxu0
    %v2567 = vxor.u32 %v2520, 2147483648
    %v2568 = vmul.f32 %v2567, 1.442695
    %v2569 = vpow.pop %v2568
    %v2570 = vadd.f32 %v2569, 1.0
    %v2571 = vrcp.pop %v2570
    %v2572 = vmul.f32 1.0, %v2571
    %v2573 = vxor.u32 %v2522, 2147483648
    %v2574 = vmul.f32 %v2573, 1.442695
    %v2575 = vpow.pop %v2574
    %v2576 = vadd.f32 %v2575, 1.0
    %v2577 = vrcp.pop %v2576
    %v2578 = vmul.f32 1.0, %v2577
    %v2579 = vtanh.pop %v2561
    %v2580 = vxor.u32 %v2563, 2147483648
    %v2581 = vmul.f32 %v2580, 1.442695
    %v2582 = vpow.pop %v2581
    %v2583 = vadd.f32 %v2582, 1.0
    %v2584 = vrcp.pop %v2583
    %v2585 = vmul.f32 1.0, %v2584
    %v2586 = vmul.f32 %v2578, %v2446
    %v2587 = vmul.f32 %v2572, %v2579
    %v2588 = vadd.f32 %v2586, %v2587
    %v2589 = vtanh.pop %v2588
    %v2590 = vmul.f32 %v2585, %v2589
    %v2591 = vpack.c.bf16 %v2590, %v2590
    %s2592 = scalar_lea.vmem [#allocation2], 39
    %v2593 = vld [vmem:[%s2592] ss:$8 sm:$0xf]
    %s2594 = scalar_lea.vmem [#allocation2], 103
    %v2595 = vld [vmem:[%s2594] ss:$8 sm:$0xf]
    %v2598 = vcombine.low %v2593, %v2595
    %v2600 = vunpack.c.l.s4 1966171168
    %v2601 = vunpack.c.0.s8 %v2600
    %v2602 = vlaneseq
    %v2603 = vshrl.u32 %v2602, 7
    %v2604 = vsub.s32 %v2601, %v2603
    %v2605 = vrot.slane %v2598, %v2604
    %v2606 = vcombine.high %v2605, %v2605
    %v2608 = vunpack.c.l.s4 1966171168
    %v2609 = vunpack.c.0.s8 %v2608
    %v2610 = vlaneseq
    %v2611 = vshrl.u32 %v2610, 7
    %v2612 = vsub.s32 %v2609, %v2611
    %v2613 = vrot.slane %v2605, %v2612
    %v2615 = vunpack.c.l.s4 1966171168
    %v2616 = vunpack.c.0.s8 %v2615
    %v2617 = vlaneseq
    %v2618 = vshrl.u32 %v2617, 7
    %v2619 = vsub.s32 %v2616, %v2618
    %v2620 = vrot.slane %v2606, %v2619
    %v2621 = vcombine.high %v2613, %v2613
    %v2622 = vcombine.high %v2620, %v2620
    %2627 = vmatprep.subr.bf16.mxu0 %v403
    %2628 = vmatpush1.bf16.msra.mxu0 %v402
    %2629 = vmatprep.subr.bf16.mxu0 %v407
    %2630 = vmatpush1.bf16.msra.mxu0 %v406
    %2631 = vmatprep.subr.bf16.mxu0 %v411
    %2632 = vmatpush1.bf16.msra.mxu0 %v410
    %2633 = vmatprep.subr.bf16.mxu0 %v415
    %2634 = vmatpush1.bf16.msra.mxu0 %v414
    %2635 = vmatprep.subr.bf16.mxu0 %v419
    %2636 = vmatpush1.bf16.msra.mxu0 %v418
    %2637 = vmatprep.subr.bf16.mxu0 %v423
    %2638 = vmatpush1.bf16.msra.mxu0 %v422
    %2639 = vmatprep.subr.bf16.mxu0 %v427
    %2640 = vmatpush1.bf16.msra.mxu0 %v426
    %2641 = vmatprep.subr.bf16.mxu0 %v431
    %2642 = vmatpush1.bf16.msra.mxu0 %v430
    %2643 = vmatprep.subr.bf16.mxu0 0
    %2644 = vmatpush1.bf16.msra.mxu0 0
    %2645 = vmatprep.subr.bf16.mxu0 0
    %2646 = vmatpush1.bf16.msra.mxu0 0
    %2647 = vmatprep.subr.bf16.mxu0 0
    %2648 = vmatpush1.bf16.msra.mxu0 0
    %2649 = vmatprep.subr.bf16.mxu0 0
    %2650 = vmatpush1.bf16.msra.mxu0 0
    %2651 = vmatprep.subr.bf16.mxu0 0
    %2652 = vmatpush1.bf16.msra.mxu0 0
    %2653 = vmatprep.subr.bf16.mxu0 0
    %2654 = vmatpush1.bf16.msra.mxu0 0
    %2655 = vmatprep.subr.bf16.mxu0 0
    %2656 = vmatpush1.bf16.msra.mxu0 0
    %2657 = vmatprep.subr.bf16.mxu0 0
    %2658 = vmatpush1.bf16.msra.mxu0 0
    %2659 = vmatprep.mubr.bf16.mxu0 0
    %2660 = vmatmul.mubr.bf16.gmra.mrb[0].mxu0 %v2591
    %v2661 = vpop.f32.mrb[0].mxu0
    %v2662 = vadd.f32 %v2613, %v2661
    %v2663 = vpop.f32.mrb[0].mxu0
    %v2664 = vadd.f32 %v2620, %v2663
    %v2665 = vpop.f32.mrb[0].mxu0
    %v2666 = vpop.f32.mrb[0].mxu0
    %2667 = vdwg.mxu0
    %2668 = vmatprep.subr.bf16.mxu0 %v405
    %2669 = vmatpush1.bf16.msra.mxu0 %v404
    %2670 = vmatprep.subr.bf16.mxu0 %v409
    %2671 = vmatpush1.bf16.msra.mxu0 %v408
    %2672 = vmatprep.subr.bf16.mxu0 %v413
    %2673 = vmatpush1.bf16.msra.mxu0 %v412
    %2674 = vmatprep.subr.bf16.mxu0 %v417
    %2675 = vmatpush1.bf16.msra.mxu0 %v416
    %2676 = vmatprep.subr.bf16.mxu0 %v421
    %2677 = vmatpush1.bf16.msra.mxu0 %v420
    %2678 = vmatprep.subr.bf16.mxu0 %v425
    %2679 = vmatpush1.bf16.msra.mxu0 %v424
    %2680 = vmatprep.subr.bf16.mxu0 %v429
    %2681 = vmatpush1.bf16.msra.mxu0 %v428
    %2682 = vmatprep.subr.bf16.mxu0 %v433
    %2683 = vmatpush1.bf16.msra.mxu0 %v432
    %2684 = vmatprep.subr.bf16.mxu0 0
    %2685 = vmatpush1.bf16.msra.mxu0 0
    %2686 = vmatprep.subr.bf16.mxu0 0
    %2687 = vmatpush1.bf16.msra.mxu0 0
    %2688 = vmatprep.subr.bf16.mxu0 0
    %2689 = vmatpush1.bf16.msra.mxu0 0
    %2690 = vmatprep.subr.bf16.mxu0 0
    %2691 = vmatpush1.bf16.msra.mxu0 0
    %2692 = vmatprep.subr.bf16.mxu0 0
    %2693 = vmatpush1.bf16.msra.mxu0 0
    %2694 = vmatprep.subr.bf16.mxu0 0
    %2695 = vmatpush1.bf16.msra.mxu0 0
    %2696 = vmatprep.subr.bf16.mxu0 0
    %2697 = vmatpush1.bf16.msra.mxu0 0
    %2698 = vmatprep.subr.bf16.mxu0 0
    %2699 = vmatpush1.bf16.msra.mxu0 0
    %2700 = vmatprep.mubr.bf16.mxu0 0
    %2701 = vmatmul.mubr.bf16.gmra.mrb[0].mxu0 %v2591
    %v2702 = vpop.f32.mrb[0].mxu0
    %v2703 = vadd.f32 %v2621, %v2702
    %v2704 = vpop.f32.mrb[0].mxu0
    %v2705 = vadd.f32 %v2622, %v2704
    %v2706 = vpop.f32.mrb[0].mxu0
    %v2707 = vpop.f32.mrb[0].mxu0
    %2708 = vdwg.mxu0
    %v2709 = vxor.u32 %v2662, 2147483648
    %v2710 = vmul.f32 %v2709, 1.442695
    %v2711 = vpow.pop %v2710
    %v2712 = vadd.f32 %v2711, 1.0
    %v2713 = vrcp.pop %v2712
    %v2714 = vmul.f32 1.0, %v2713
    %v2715 = vxor.u32 %v2664, 2147483648
    %v2716 = vmul.f32 %v2715, 1.442695
    %v2717 = vpow.pop %v2716
    %v2718 = vadd.f32 %v2717, 1.0
    %v2719 = vrcp.pop %v2718
    %v2720 = vmul.f32 1.0, %v2719
    %v2721 = vtanh.pop %v2703
    %v2722 = vxor.u32 %v2705, 2147483648
    %v2723 = vmul.f32 %v2722, 1.442695
    %v2724 = vpow.pop %v2723
    %v2725 = vadd.f32 %v2724, 1.0
    %v2726 = vrcp.pop %v2725
    %v2727 = vmul.f32 1.0, %v2726
    %v2728 = vmul.f32 %v2720, %v2588
    %v2729 = vmul.f32 %v2714, %v2721
    %v2730 = vadd.f32 %v2728, %v2729
    %v2731 = vtanh.pop %v2730
    %v2732 = vmul.f32 %v2727, %v2731
    %v2733 = vld [vmem:[%s1] sm:$0xff]
    %v2734 = vld [vmem:[%s1 + $0x8] sm:$0x1]
    %v2735 = vld [vmem:[%s1 + $0x10] sm:$0xff]
    %v2736 = vld [vmem:[%s1 + $0x18] sm:$0x1]
    %v2737 = vpack.c.bf16 %v2734, %v2733
    %v2738 = vpack.c.bf16 %v2736, %v2735
    %v2741 = vcombine.high %v2737, %v2737
    %v2743 = vunpack.c.l.s4 1966171168
    %v2744 = vunpack.c.0.s8 %v2743
    %v2745 = vlaneseq
    %v2746 = vshrl.u32 %v2745, 7
    %v2747 = vsub.s32 %v2744, %v2746
    %v2748 = vrot.slane %v2737, %v2747
    %v2750 = vunpack.c.l.s4 1966171168
    %v2751 = vunpack.c.0.s8 %v2750
    %v2752 = vlaneseq
    %v2753 = vshrl.u32 %v2752, 7
    %v2754 = vsub.s32 %v2751, %v2753
    %v2755 = vrot.slane %v2741, %v2754
    %v2756 = vcombine.high %v2748, %v2748
    %v2758 = vunpack.c.l.s4 1966171168
    %v2759 = vunpack.c.0.s8 %v2758
    %v2760 = vlaneseq
    %v2761 = vshrl.u32 %v2760, 7
    %v2762 = vsub.s32 %v2759, %v2761
    %v2763 = vrot.slane %v2748, %v2762
    %v2765 = vunpack.c.l.s4 1966171168
    %v2766 = vunpack.c.0.s8 %v2765
    %v2767 = vlaneseq
    %v2768 = vshrl.u32 %v2767, 7
    %v2769 = vsub.s32 %v2766, %v2768
    %v2770 = vrot.slane %v2755, %v2769
    %v2772 = vunpack.c.l.s4 1966171168
    %v2773 = vunpack.c.0.s8 %v2772
    %v2774 = vlaneseq
    %v2775 = vshrl.u32 %v2774, 7
    %v2776 = vsub.s32 %v2773, %v2775
    %v2777 = vrot.slane %v2756, %v2776
    %v2778 = vcombine.high %v2763, %v2763
    %v2779 = vcombine.high %v2777, %v2777
    %v2780 = vcombine.high %v2738, %v2738
    %v2782 = vunpack.c.l.s4 1966171168
    %v2783 = vunpack.c.0.s8 %v2782
    %v2784 = vlaneseq
    %v2785 = vshrl.u32 %v2784, 7
    %v2786 = vsub.s32 %v2783, %v2785
    %v2787 = vrot.slane %v2738, %v2786
    %v2789 = vunpack.c.l.s4 1966171168
    %v2790 = vunpack.c.0.s8 %v2789
    %v2791 = vlaneseq
    %v2792 = vshrl.u32 %v2791, 7
    %v2793 = vsub.s32 %v2790, %v2792
    %v2794 = vrot.slane %v2780, %v2793
    %v2795 = vcombine.high %v2787, %v2787
    %v2797 = vunpack.c.l.s4 1966171168
    %v2798 = vunpack.c.0.s8 %v2797
    %v2799 = vlaneseq
    %v2800 = vshrl.u32 %v2799, 7
    %v2801 = vsub.s32 %v2798, %v2800
    %v2802 = vrot.slane %v2787, %v2801
    %v2804 = vunpack.c.l.s4 1966171168
    %v2805 = vunpack.c.0.s8 %v2804
    %v2806 = vlaneseq
    %v2807 = vshrl.u32 %v2806, 7
    %v2808 = vsub.s32 %v2805, %v2807
    %v2809 = vrot.slane %v2794, %v2808
    %v2811 = vunpack.c.l.s4 1966171168
    %v2812 = vunpack.c.0.s8 %v2811
    %v2813 = vlaneseq
    %v2814 = vshrl.u32 %v2813, 7
    %v2815 = vsub.s32 %v2812, %v2814
    %v2816 = vrot.slane %v2795, %v2815
    %v2817 = vcombine.high %v2802, %v2802
    %v2818 = vcombine.high %v2816, %v2816
    %v2819 = vunpack.i.l.s16 %v2763
    %v2820 = vunpack.i.h.s16 %v2763
    %v2821 = vunpack.i.l.s16 %v2777
    %v2822 = vunpack.i.h.s16 %v2777
    %v2823 = vunpack.i.l.s16 %v2778
    %v2824 = vunpack.i.h.s16 %v2778
    %v2825 = vunpack.i.l.s16 %v2779
    %v2826 = vunpack.i.h.s16 %v2779
    %v2827 = vunpack.i.l.s16 %v2770
    %v2828 = vunpack.i.l.s16 %v2802
    %v2829 = vunpack.i.h.s16 %v2802
    %v2830 = vunpack.i.l.s16 %v2816
    %v2831 = vunpack.i.h.s16 %v2816
    %v2832 = vunpack.i.l.s16 %v2817
    %v2833 = vunpack.i.h.s16 %v2817
    %v2834 = vunpack.i.l.s16 %v2818
    %v2835 = vunpack.i.h.s16 %v2818
    %v2836 = vunpack.i.l.s16 %v2809
    %v2837 = vld [vmem:[%s5] sm:$0xf]
    %v2838 = vld [vmem:[%s5 + $0x4] sm:$0xf]
    %v2839 = vpack.i.b16 %v2820, %v2819
    %v2840 = vpack.i.b16 %v2822, %v2821
    %v2841 = vpack.i.b16 %v2824, %v2823
    %v2842 = vpack.i.b16 %v2826, %v2825
    %v2843 = vpack.i.b16 %v2828, %v2827
    %v2844 = vpack.i.b16 %v2830, %v2829
    %v2845 = vpack.i.b16 %v2832, %v2831
    %v2846 = vpack.i.b16 %v2834, %v2833
    %v2847 = vpack.i.b16 %v2836, %v2835
    %v2848 = vcombine.low %v2839, %v2840
    %v2849 = vcombine.low %v2841, %v2842
    %v2850 = vcombine.low %v2843, %v2844
    %v2851 = vcombine.low %v2845, %v2846
    %v2853 = vunpack.c.l.s4 1966171168
    %v2854 = vunpack.c.0.s8 %v2853
    %v2855 = vlaneseq
    %v2856 = vshrl.u32 %v2855, 7
    %v2857 = vsub.s32 %v2854, %v2856
    %v2858 = vrot.slane %v2848, %v2857
    %v2860 = vunpack.c.l.s4 1966171168
    %v2861 = vunpack.c.0.s8 %v2860
    %v2862 = vlaneseq
    %v2863 = vshrl.u32 %v2862, 7
    %v2864 = vsub.s32 %v2861, %v2863
    %v2865 = vrot.slane %v2849, %v2864
    %v2867 = vunpack.c.l.s4 1966171168
    %v2868 = vunpack.c.0.s8 %v2867
    %v2869 = vlaneseq
    %v2870 = vshrl.u32 %v2869, 7
    %v2871 = vsub.s32 %v2868, %v2870
    %v2872 = vrot.slane %v2850, %v2871
    %v2874 = vunpack.c.l.s4 1966171168
    %v2875 = vunpack.c.0.s8 %v2874
    %v2876 = vlaneseq
    %v2877 = vshrl.u32 %v2876, 7
    %v2878 = vsub.s32 %v2875, %v2877
    %v2879 = vrot.slane %v2851, %v2878
    %v2880 = vcombine.low %v2858, %v2865
    %v2881 = vcombine.low %v2872, %v2879
    %v2883 = vunpack.c.l.s4 1966171168
    %v2884 = vunpack.c.0.s8 %v2883
    %v2885 = vlaneseq
    %v2886 = vshrl.u32 %v2885, 7
    %v2887 = vsub.s32 %v2884, %v2886
    %v2888 = vrot.slane %v2880, %v2887
    %v2890 = vunpack.c.l.s4 1966171168
    %v2891 = vunpack.c.0.s8 %v2890
    %v2892 = vlaneseq
    %v2893 = vshrl.u32 %v2892, 7
    %v2894 = vsub.s32 %v2891, %v2893
    %v2895 = vrot.slane %v2881, %v2894
    %v2896 = vcombine.low %v2888, %v2895
    %v2898 = vunpack.c.l.s4 1966171168
    %v2899 = vunpack.c.0.s8 %v2898
    %v2900 = vlaneseq
    %v2901 = vshrl.u32 %v2900, 7
    %v2902 = vsub.s32 %v2899, %v2901
    %v2903 = vrot.slane %v2847, %v2902
    %v2905 = vunpack.c.l.s4 1966171168
    %v2906 = vunpack.c.0.s8 %v2905
    %v2907 = vlaneseq
    %v2908 = vshrl.u32 %v2907, 7
    %v2909 = vsub.s32 %v2906, %v2908
    %v2910 = vrot.slane %v2903, %v2909
    %v2913 = vunpack.c.l.b16 %v2837
    %v2914 = vunpack.c.l.b16 %v2838
    %v2915 = vpack.c.b16 %v2914, %v2913
    %vm2917 = vcmask 130048
    %v2919 = vsel %vm2917, %v2896, 0
    %v2922 = vsel %vm2917, %v2910, 0
    %2924 = vmatprep.subr.bf16.mxu0 0
    %2925 = vmatpush1.bf16.msra.mxu0 %v2915
    %2926 = vmatprep.subr.bf16.mxu0 0
    %2927 = vmatpush1.bf16.msra.mxu0 0
    %2928 = vmatprep.subr.bf16.mxu0 0
    %2929 = vmatpush1.bf16.msra.mxu0 0
    %2930 = vmatprep.subr.bf16.mxu0 0
    %2931 = vmatpush1.bf16.msra.mxu0 0
    %2932 = vmatprep.subr.bf16.mxu0 0
    %2933 = vmatpush1.bf16.msra.mxu0 0
    %2934 = vmatprep.subr.bf16.mxu0 0
    %2935 = vmatpush1.bf16.msra.mxu0 0
    %2936 = vmatprep.subr.bf16.mxu0 0
    %2937 = vmatpush1.bf16.msra.mxu0 0
    %2938 = vmatprep.subr.bf16.mxu0 0
    %2939 = vmatpush1.bf16.msra.mxu0 0
    %2940 = vmatprep.subr.bf16.mxu0 0
    %2941 = vmatpush1.bf16.msra.mxu0 0
    %2942 = vmatprep.subr.bf16.mxu0 0
    %2943 = vmatpush1.bf16.msra.mxu0 0
    %2944 = vmatprep.subr.bf16.mxu0 0
    %2945 = vmatpush1.bf16.msra.mxu0 0
    %2946 = vmatprep.subr.bf16.mxu0 0
    %2947 = vmatpush1.bf16.msra.mxu0 0
    %2948 = vmatprep.subr.bf16.mxu0 0
    %2949 = vmatpush1.bf16.msra.mxu0 0
    %2950 = vmatprep.subr.bf16.mxu0 0
    %2951 = vmatpush1.bf16.msra.mxu0 0
    %2952 = vmatprep.subr.bf16.mxu0 0
    %2953 = vmatpush1.bf16.msra.mxu0 0
    %2954 = vmatprep.subr.bf16.mxu0 0
    %2955 = vmatpush1.bf16.msra.mxu0 0
    %2956 = vmatprep.mubr.bf16.mxu0 0
    %2957 = vmatmul.mubr.bf16.gmra.mrb[0].mxu0 %v2919
    %v2958 = vpop.f32.mrb[0].mxu0
    %v2959 = vadd.f32 0.0, %v2958
    %v2960 = vpop.f32.mrb[0].mxu0
    %v2961 = vpop.f32.mrb[0].mxu0
    %v2962 = vadd.f32 0.0, %v2961
    %v2963 = vpop.f32.mrb[0].mxu0
    %2964 = vmatprep.mubr.bf16.mxu0 0
    %2965 = vmatmul.mubr.bf16.gmra.mrb[0].mxu0 %v2922
    %v2966 = vpop.f32.mrb[0].mxu0
    %v2967 = vadd.f32 0.0, %v2966
    %v2968 = vpop.f32.mrb[0].mxu0
    %v2969 = vpop.f32.mrb[0].mxu0
    %v2970 = vpop.f32.mrb[0].mxu0
    %2971 = vdwg.mxu0
    %v2975 = vcombine.high %v2959, %v2959
    %v2977 = vunpack.c.l.s4 1966171168
    %v2978 = vunpack.c.0.s8 %v2977
    %v2979 = vlaneseq
    %v2980 = vshrl.u32 %v2979, 7
    %v2981 = vsub.s32 %v2978, %v2980
    %v2982 = vrot.slane %v2959, %v2981
    %v2984 = vunpack.c.l.s4 1966171168
    %v2985 = vunpack.c.0.s8 %v2984
    %v2986 = vlaneseq
    %v2987 = vshrl.u32 %v2986, 7
    %v2988 = vsub.s32 %v2985, %v2987
    %v2989 = vrot.slane %v2975, %v2988
    %v2990 = vcombine.high %v2982, %v2982
    %v2991 = vcombine.high %v2989, %v2989
    %v2993 = vunpack.c.l.s4 1966171168
    %v2994 = vunpack.c.0.s8 %v2993
    %v2995 = vlaneseq
    %v2996 = vshrl.u32 %v2995, 7
    %v2997 = vsub.s32 %v2994, %v2996
    %v2998 = vrot.slane %v2982, %v2997
    %v3000 = vunpack.c.l.s4 1966171168
    %v3001 = vunpack.c.0.s8 %v3000
    %v3002 = vlaneseq
    %v3003 = vshrl.u32 %v3002, 7
    %v3004 = vsub.s32 %v3001, %v3003
    %v3005 = vrot.slane %v2989, %v3004
    %v3007 = vunpack.c.l.s4 1966171168
    %v3008 = vunpack.c.0.s8 %v3007
    %v3009 = vlaneseq
    %v3010 = vshrl.u32 %v3009, 7
    %v3011 = vsub.s32 %v3008, %v3010
    %v3012 = vrot.slane %v2990, %v3011
    %v3014 = vunpack.c.l.s4 1966171168
    %v3015 = vunpack.c.0.s8 %v3014
    %v3016 = vlaneseq
    %v3017 = vshrl.u32 %v3016, 7
    %v3018 = vsub.s32 %v3015, %v3017
    %v3019 = vrot.slane %v2991, %v3018
    %v3020 = vcombine.high %v2998, %v2998
    %v3021 = vcombine.high %v3005, %v3005
    %v3022 = vcombine.high %v3012, %v3012
    %v3023 = vcombine.high %v3019, %v3019
    %v3024 = vcombine.high %v2962, %v2962
    %v3026 = vunpack.c.l.s4 1966171168
    %v3027 = vunpack.c.0.s8 %v3026
    %v3028 = vlaneseq
    %v3029 = vshrl.u32 %v3028, 7
    %v3030 = vsub.s32 %v3027, %v3029
    %v3031 = vrot.slane %v2962, %v3030
    %v3033 = vunpack.c.l.s4 1966171168
    %v3034 = vunpack.c.0.s8 %v3033
    %v3035 = vlaneseq
    %v3036 = vshrl.u32 %v3035, 7
    %v3037 = vsub.s32 %v3034, %v3036
    %v3038 = vrot.slane %v3024, %v3037
    %v3039 = vcombine.high %v3031, %v3031
    %v3040 = vcombine.high %v3038, %v3038
    %v3042 = vunpack.c.l.s4 1966171168
    %v3043 = vunpack.c.0.s8 %v3042
    %v3044 = vlaneseq
    %v3045 = vshrl.u32 %v3044, 7
    %v3046 = vsub.s32 %v3043, %v3045
    %v3047 = vrot.slane %v3031, %v3046
    %v3049 = vunpack.c.l.s4 1966171168
    %v3050 = vunpack.c.0.s8 %v3049
    %v3051 = vlaneseq
    %v3052 = vshrl.u32 %v3051, 7
    %v3053 = vsub.s32 %v3050, %v3052
    %v3054 = vrot.slane %v3038, %v3053
    %v3056 = vunpack.c.l.s4 1966171168
    %v3057 = vunpack.c.0.s8 %v3056
    %v3058 = vlaneseq
    %v3059 = vshrl.u32 %v3058, 7
    %v3060 = vsub.s32 %v3057, %v3059
    %v3061 = vrot.slane %v3039, %v3060
    %v3063 = vunpack.c.l.s4 1966171168
    %v3064 = vunpack.c.0.s8 %v3063
    %v3065 = vlaneseq
    %v3066 = vshrl.u32 %v3065, 7
    %v3067 = vsub.s32 %v3064, %v3066
    %v3068 = vrot.slane %v3040, %v3067
    %v3069 = vcombine.high %v3047, %v3047
    %v3070 = vcombine.high %v3054, %v3054
    %v3071 = vcombine.high %v3061, %v3061
    %v3072 = vcombine.high %v3068, %v3068
    %v3074 = vunpack.c.l.s4 1966171168
    %v3075 = vunpack.c.0.s8 %v3074
    %v3076 = vlaneseq
    %v3077 = vshrl.u32 %v3076, 7
    %v3078 = vsub.s32 %v3075, %v3077
    %v3079 = vrot.slane %v2967, %v3078
    %v3080 = vcombine.high %v3079, %v3079
    %v3082 = vunpack.c.l.s4 1966171168
    %v3083 = vunpack.c.0.s8 %v3082
    %v3084 = vlaneseq
    %v3085 = vshrl.u32 %v3084, 7
    %v3086 = vsub.s32 %v3083, %v3085
    %v3087 = vrot.slane %v3079, %v3086
    %v3089 = vunpack.c.l.s4 1966171168
    %v3090 = vunpack.c.0.s8 %v3089
    %v3091 = vlaneseq
    %v3092 = vshrl.u32 %v3091, 7
    %v3093 = vsub.s32 %v3090, %v3092
    %v3094 = vrot.slane %v3080, %v3093
    %v3113 = vld [vmem:[%s6] sm:$0x1]
    %v3115 = vlaneseq
    %v3116 = vshrl.u32 %v3115, 7
    %v3117 = vsub.s32 0, %v3116
    %v3118 = vrot.slane %v3113, %v3117
    %v3119 = vcombine.high %v3118, %v3118
    %v3121 = vunpack.c.l.s4 1966171168
    %v3122 = vunpack.c.0.s8 %v3121
    %v3123 = vlaneseq
    %v3124 = vshrl.u32 %v3123, 7
    %v3125 = vsub.s32 %v3122, %v3124
    %v3126 = vrot.slane %v3118, %v3125
    %v3128 = vunpack.c.l.s4 1966171168
    %v3129 = vunpack.c.0.s8 %v3128
    %v3130 = vlaneseq
    %v3131 = vshrl.u32 %v3130, 7
    %v3132 = vsub.s32 %v3129, %v3131
    %v3133 = vrot.slane %v3119, %v3132
    %v3134 = vcombine.high %v3126, %v3126
    %v3135 = vcombine.high %v3133, %v3133
    %v3137 = vunpack.c.l.s4 1966171168
    %v3138 = vunpack.c.0.s8 %v3137
    %v3139 = vlaneseq
    %v3140 = vshrl.u32 %v3139, 7
    %v3141 = vsub.s32 %v3138, %v3140
    %v3142 = vrot.slane %v3126, %v3141
    %v3144 = vunpack.c.l.s4 1966171168
    %v3145 = vunpack.c.0.s8 %v3144
    %v3146 = vlaneseq
    %v3147 = vshrl.u32 %v3146, 7
    %v3148 = vsub.s32 %v3145, %v3147
    %v3149 = vrot.slane %v3133, %v3148
    %v3151 = vunpack.c.l.s4 1966171168
    %v3152 = vunpack.c.0.s8 %v3151
    %v3153 = vlaneseq
    %v3154 = vshrl.u32 %v3153, 7
    %v3155 = vsub.s32 %v3152, %v3154
    %v3156 = vrot.slane %v3134, %v3155
    %v3158 = vunpack.c.l.s4 1966171168
    %v3159 = vunpack.c.0.s8 %v3158
    %v3160 = vlaneseq
    %v3161 = vshrl.u32 %v3160, 7
    %v3162 = vsub.s32 %v3159, %v3161
    %v3163 = vrot.slane %v3135, %v3162
    %v3164 = vcombine.high %v3142, %v3142
    %v3165 = vcombine.high %v3149, %v3149
    %v3166 = vcombine.high %v3156, %v3156
    %v3167 = vcombine.high %v3163, %v3163
    %v3176 = vmul.f32 %v2998, %v3142
    %v3177 = vmul.f32 %v3012, %v3156
    %v3178 = vmul.f32 %v3020, %v3164
    %v3179 = vmul.f32 %v3022, %v3166
    %v3180 = vmul.f32 %v3005, %v3149
    %v3181 = vmul.f32 %v3019, %v3163
    %v3182 = vmul.f32 %v3021, %v3165
    %v3183 = vmul.f32 %v3023, %v3167
    %v3184 = vmul.f32 %v3047, %v3142
    %v3185 = vmul.f32 %v3061, %v3142
    %v3186 = vmul.f32 %v3069, %v3156
    %v3187 = vmul.f32 %v3071, %v3164
    %v3188 = vmul.f32 %v3054, %v3166
    %v3189 = vmul.f32 %v3068, %v3149
    %v3190 = vmul.f32 %v3070, %v3163
    %v3191 = vmul.f32 %v3072, %v3165
    %v3192 = vmul.f32 %v3087, %v3167
    %v3193 = vmul.f32 %v3094, %v3142
    %v3194 = vld [vmem:[%s7] sm:$0x1]
    %v3196 = vlaneseq
    %v3197 = vshrl.u32 %v3196, 7
    %v3198 = vsub.s32 0, %v3197
    %v3199 = vrot.slane %v3194, %v3198
    %v3200 = vcombine.high %v3199, %v3199
    %v3202 = vunpack.c.l.s4 1966171168
    %v3203 = vunpack.c.0.s8 %v3202
    %v3204 = vlaneseq
    %v3205 = vshrl.u32 %v3204, 7
    %v3206 = vsub.s32 %v3203, %v3205
    %v3207 = vrot.slane %v3199, %v3206
    %v3209 = vunpack.c.l.s4 1966171168
    %v3210 = vunpack.c.0.s8 %v3209
    %v3211 = vlaneseq
    %v3212 = vshrl.u32 %v3211, 7
    %v3213 = vsub.s32 %v3210, %v3212
    %v3214 = vrot.slane %v3200, %v3213
    %v3215 = vcombine.high %v3207, %v3207
    %v3216 = vcombine.high %v3214, %v3214
    %v3218 = vunpack.c.l.s4 1966171168
    %v3219 = vunpack.c.0.s8 %v3218
    %v3220 = vlaneseq
    %v3221 = vshrl.u32 %v3220, 7
    %v3222 = vsub.s32 %v3219, %v3221
    %v3223 = vrot.slane %v3207, %v3222
    %v3225 = vunpack.c.l.s4 1966171168
    %v3226 = vunpack.c.0.s8 %v3225
    %v3227 = vlaneseq
    %v3228 = vshrl.u32 %v3227, 7
    %v3229 = vsub.s32 %v3226, %v3228
    %v3230 = vrot.slane %v3214, %v3229
    %v3232 = vunpack.c.l.s4 1966171168
    %v3233 = vunpack.c.0.s8 %v3232
    %v3234 = vlaneseq
    %v3235 = vshrl.u32 %v3234, 7
    %v3236 = vsub.s32 %v3233, %v3235
    %v3237 = vrot.slane %v3215, %v3236
    %v3239 = vunpack.c.l.s4 1966171168
    %v3240 = vunpack.c.0.s8 %v3239
    %v3241 = vlaneseq
    %v3242 = vshrl.u32 %v3241, 7
    %v3243 = vsub.s32 %v3240, %v3242
    %v3244 = vrot.slane %v3216, %v3243
    %v3245 = vcombine.high %v3223, %v3223
    %v3246 = vcombine.high %v3230, %v3230
    %v3247 = vcombine.high %v3237, %v3237
    %v3248 = vcombine.high %v3244, %v3244
    %v3257 = vadd.f32 %v3176, %v3223
    %v3258 = vadd.f32 %v3177, %v3237
    %v3259 = vadd.f32 %v3178, %v3245
    %v3260 = vadd.f32 %v3179, %v3247
    %v3261 = vadd.f32 %v3180, %v3230
    %v3262 = vadd.f32 %v3181, %v3244
    %v3263 = vadd.f32 %v3182, %v3246
    %v3264 = vadd.f32 %v3183, %v3248
    %v3265 = vadd.f32 %v3184, %v3223
    %v3266 = vadd.f32 %v3185, %v3223
    %v3267 = vadd.f32 %v3186, %v3237
    %v3268 = vadd.f32 %v3187, %v3245
    %v3269 = vadd.f32 %v3188, %v3247
    %v3270 = vadd.f32 %v3189, %v3230
    %v3271 = vadd.f32 %v3190, %v3244
    %v3272 = vadd.f32 %v3191, %v3246
    %v3273 = vadd.f32 %v3192, %v3248
    %v3274 = vadd.f32 %v3193, %v3223
    %v3275 = vmax.f32 %v3257, 0.0
    %v3276 = vmax.f32 %v3258, 0.0
    %v3277 = vmax.f32 %v3259, 0.0
    %v3278 = vmax.f32 %v3260, 0.0
    %v3279 = vmax.f32 %v3261, 0.0
    %v3280 = vmax.f32 %v3262, 0.0
    %v3281 = vmax.f32 %v3263, 0.0
    %v3282 = vmax.f32 %v3264, 0.0
    %v3283 = vmax.f32 %v3265, 0.0
    %v3284 = vmax.f32 %v3266, 0.0
    %v3285 = vmax.f32 %v3267, 0.0
    %v3286 = vmax.f32 %v3268, 0.0
    %v3287 = vmax.f32 %v3269, 0.0
    %v3288 = vmax.f32 %v3270, 0.0
    %v3289 = vmax.f32 %v3271, 0.0
    %v3290 = vmax.f32 %v3272, 0.0
    %v3291 = vmax.f32 %v3273, 0.0
    %v3292 = vmax.f32 %v3274, 0.0
    %v3311 = vcombine.low %v3275, %v3276
    %v3312 = vcombine.low %v3277, %v3278
    %v3313 = vcombine.low %v3279, %v3280
    %v3314 = vcombine.low %v3281, %v3282
    %v3316 = vunpack.c.l.s4 1966171168
    %v3317 = vunpack.c.0.s8 %v3316
    %v3318 = vlaneseq
    %v3319 = vshrl.u32 %v3318, 7
    %v3320 = vsub.s32 %v3317, %v3319
    %v3321 = vrot.slane %v3311, %v3320
    %v3323 = vunpack.c.l.s4 1966171168
    %v3324 = vunpack.c.0.s8 %v3323
    %v3325 = vlaneseq
    %v3326 = vshrl.u32 %v3325, 7
    %v3327 = vsub.s32 %v3324, %v3326
    %v3328 = vrot.slane %v3312, %v3327
    %v3330 = vunpack.c.l.s4 1966171168
    %v3331 = vunpack.c.0.s8 %v3330
    %v3332 = vlaneseq
    %v3333 = vshrl.u32 %v3332, 7
    %v3334 = vsub.s32 %v3331, %v3333
    %v3335 = vrot.slane %v3313, %v3334
    %v3337 = vunpack.c.l.s4 1966171168
    %v3338 = vunpack.c.0.s8 %v3337
    %v3339 = vlaneseq
    %v3340 = vshrl.u32 %v3339, 7
    %v3341 = vsub.s32 %v3338, %v3340
    %v3342 = vrot.slane %v3314, %v3341
    %v3343 = vcombine.low %v3321, %v3328
    %v3344 = vcombine.low %v3335, %v3342
    %v3346 = vunpack.c.l.s4 1966171168
    %v3347 = vunpack.c.0.s8 %v3346
    %v3348 = vlaneseq
    %v3349 = vshrl.u32 %v3348, 7
    %v3350 = vsub.s32 %v3347, %v3349
    %v3351 = vrot.slane %v3343, %v3350
    %v3353 = vunpack.c.l.s4 1966171168
    %v3354 = vunpack.c.0.s8 %v3353
    %v3355 = vlaneseq
    %v3356 = vshrl.u32 %v3355, 7
    %v3357 = vsub.s32 %v3354, %v3356
    %v3358 = vrot.slane %v3344, %v3357
    %v3359 = vcombine.low %v3351, %v3358
    %v3361 = vunpack.c.l.s4 1966171168
    %v3362 = vunpack.c.0.s8 %v3361
    %v3363 = vlaneseq
    %v3364 = vshrl.u32 %v3363, 7
    %v3365 = vsub.s32 %v3362, %v3364
    %v3366 = vrot.slane %v3283, %v3365
    %v3368 = vunpack.c.l.s4 1966171168
    %v3369 = vunpack.c.0.s8 %v3368
    %v3370 = vlaneseq
    %v3371 = vshrl.u32 %v3370, 7
    %v3372 = vsub.s32 %v3369, %v3371
    %v3373 = vrot.slane %v3366, %v3372
    %v3374 = vcombine.low %v3284, %v3285
    %v3375 = vcombine.low %v3286, %v3287
    %v3376 = vcombine.low %v3288, %v3289
    %v3377 = vcombine.low %v3290, %v3291
    %v3379 = vunpack.c.l.s4 1966171168
    %v3380 = vunpack.c.0.s8 %v3379
    %v3381 = vlaneseq
    %v3382 = vshrl.u32 %v3381, 7
    %v3383 = vsub.s32 %v3380, %v3382
    %v3384 = vrot.slane %v3374, %v3383
    %v3386 = vunpack.c.l.s4 1966171168
    %v3387 = vunpack.c.0.s8 %v3386
    %v3388 = vlaneseq
    %v3389 = vshrl.u32 %v3388, 7
    %v3390 = vsub.s32 %v3387, %v3389
    %v3391 = vrot.slane %v3375, %v3390
    %v3393 = vunpack.c.l.s4 1966171168
    %v3394 = vunpack.c.0.s8 %v3393
    %v3395 = vlaneseq
    %v3396 = vshrl.u32 %v3395, 7
    %v3397 = vsub.s32 %v3394, %v3396
    %v3398 = vrot.slane %v3376, %v3397
    %v3400 = vunpack.c.l.s4 1966171168
    %v3401 = vunpack.c.0.s8 %v3400
    %v3402 = vlaneseq
    %v3403 = vshrl.u32 %v3402, 7
    %v3404 = vsub.s32 %v3401, %v3403
    %v3405 = vrot.slane %v3377, %v3404
    %v3406 = vcombine.low %v3384, %v3391
    %v3407 = vcombine.low %v3398, %v3405
    %v3409 = vunpack.c.l.s4 1966171168
    %v3410 = vunpack.c.0.s8 %v3409
    %v3411 = vlaneseq
    %v3412 = vshrl.u32 %v3411, 7
    %v3413 = vsub.s32 %v3410, %v3412
    %v3414 = vrot.slane %v3406, %v3413
    %v3416 = vunpack.c.l.s4 1966171168
    %v3417 = vunpack.c.0.s8 %v3416
    %v3418 = vlaneseq
    %v3419 = vshrl.u32 %v3418, 7
    %v3420 = vsub.s32 %v3417, %v3419
    %v3421 = vrot.slane %v3407, %v3420
    %v3422 = vcombine.low %v3414, %v3421
    %v3424 = vunpack.c.l.s4 1966171168
    %v3425 = vunpack.c.0.s8 %v3424
    %v3426 = vlaneseq
    %v3427 = vshrl.u32 %v3426, 7
    %v3428 = vsub.s32 %v3425, %v3427
    %v3429 = vrot.slane %v3292, %v3428
    %v3431 = vunpack.c.l.s4 1966171168
    %v3432 = vunpack.c.0.s8 %v3431
    %v3433 = vlaneseq
    %v3434 = vshrl.u32 %v3433, 7
    %v3435 = vsub.s32 %v3432, %v3434
    %v3436 = vrot.slane %v3429, %v3435
    %v3441 = vpack.c.bf16 %v3373, %v3359
    %v3442 = vpack.c.bf16 %v3436, %v3422
    %v3444 = vshrl.u32 %v3441, 16
    %v3446 = vshll.u32 %v3441, 16
    %v3448 = vrot.slane %v3446, 1
    %v3449 = vor.u32 %v3444, %v3448
    %v3451 = vshrl.u32 %v3442, 16
    %v3453 = vshll.u32 %v3442, 16
    %v3455 = vrot.slane %v3453, 1
    %v3456 = vor.u32 %v3451, %v3455
    %v3459 = vrot.slane %v3441, 1
    %v3460 = vrot.slane %v3442, 1
    %v3461 = vrot.slane %v3444, 1
    %v3462 = vrot.slane %v3446, 2
    %v3463 = vor.u32 %v3461, %v3462
    %v3464 = vrot.slane %v3451, 1
    %v3465 = vrot.slane %v3453, 2
    %v3466 = vor.u32 %v3464, %v3465
    %v3467 = vrot.slane %v3441, 2
    %v3468 = vrot.slane %v3442, 2
    %v3469 = vcombine.low %v3441, %v3449
    %v3470 = vcombine.low %v3459, %v3463
    %v3472 = vunpack.c.l.s4 1966171168
    %v3473 = vunpack.c.0.s8 %v3472
    %v3474 = vlaneseq
    %v3475 = vshrl.u32 %v3474, 7
    %v3476 = vsub.s32 %v3473, %v3475
    %v3477 = vrot.slane %v3469, %v3476
    %v3479 = vunpack.c.l.s4 1966171168
    %v3480 = vunpack.c.0.s8 %v3479
    %v3481 = vlaneseq
    %v3482 = vshrl.u32 %v3481, 7
    %v3483 = vsub.s32 %v3480, %v3482
    %v3484 = vrot.slane %v3470, %v3483
    %v3486 = vunpack.c.l.s4 1966171168
    %v3487 = vunpack.c.0.s8 %v3486
    %v3488 = vlaneseq
    %v3489 = vshrl.u32 %v3488, 7
    %v3490 = vsub.s32 %v3487, %v3489
    %v3491 = vrot.slane %v3467, %v3490
    %v3492 = vcombine.low %v3477, %v3484
    %v3493 = vcombine.high %v3477, %v3484
    %v3494 = vcombine.high %v3491, %v3491
    %v3496 = vunpack.c.l.s4 1966171168
    %v3497 = vunpack.c.0.s8 %v3496
    %v3498 = vlaneseq
    %v3499 = vshrl.u32 %v3498, 7
    %v3500 = vsub.s32 %v3497, %v3499
    %v3501 = vrot.slane %v3492, %v3500
    %v3503 = vunpack.c.l.s4 1966171168
    %v3504 = vunpack.c.0.s8 %v3503
    %v3505 = vlaneseq
    %v3506 = vshrl.u32 %v3505, 7
    %v3507 = vsub.s32 %v3504, %v3506
    %v3508 = vrot.slane %v3493, %v3507
    %v3510 = vunpack.c.l.s4 1966171168
    %v3511 = vunpack.c.0.s8 %v3510
    %v3512 = vlaneseq
    %v3513 = vshrl.u32 %v3512, 7
    %v3514 = vsub.s32 %v3511, %v3513
    %v3515 = vrot.slane %v3491, %v3514
    %v3517 = vunpack.c.l.s4 1966171168
    %v3518 = vunpack.c.0.s8 %v3517
    %v3519 = vlaneseq
    %v3520 = vshrl.u32 %v3519, 7
    %v3521 = vsub.s32 %v3518, %v3520
    %v3522 = vrot.slane %v3494, %v3521
    %v3523 = vcombine.low %v3501, %v3515
    %v3524 = vcombine.high %v3501, %v3515
    %v3525 = vcombine.low %v3508, %v3522
    %v3526 = vcombine.low %v3442, %v3456
    %v3527 = vcombine.low %v3460, %v3466
    %v3529 = vunpack.c.l.s4 1966171168
    %v3530 = vunpack.c.0.s8 %v3529
    %v3531 = vlaneseq
    %v3532 = vshrl.u32 %v3531, 7
    %v3533 = vsub.s32 %v3530, %v3532
    %v3534 = vrot.slane %v3526, %v3533
    %v3536 = vunpack.c.l.s4 1966171168
    %v3537 = vunpack.c.0.s8 %v3536
    %v3538 = vlaneseq
    %v3539 = vshrl.u32 %v3538, 7
    %v3540 = vsub.s32 %v3537, %v3539
    %v3541 = vrot.slane %v3527, %v3540
    %v3543 = vunpack.c.l.s4 1966171168
    %v3544 = vunpack.c.0.s8 %v3543
    %v3545 = vlaneseq
    %v3546 = vshrl.u32 %v3545, 7
    %v3547 = vsub.s32 %v3544, %v3546
    %v3548 = vrot.slane %v3468, %v3547
    %v3549 = vcombine.low %v3534, %v3541
    %v3550 = vcombine.high %v3534, %v3541
    %v3551 = vcombine.high %v3548, %v3548
    %v3553 = vunpack.c.l.s4 1966171168
    %v3554 = vunpack.c.0.s8 %v3553
    %v3555 = vlaneseq
    %v3556 = vshrl.u32 %v3555, 7
    %v3557 = vsub.s32 %v3554, %v3556
    %v3558 = vrot.slane %v3549, %v3557
    %v3560 = vunpack.c.l.s4 1966171168
    %v3561 = vunpack.c.0.s8 %v3560
    %v3562 = vlaneseq
    %v3563 = vshrl.u32 %v3562, 7
    %v3564 = vsub.s32 %v3561, %v3563
    %v3565 = vrot.slane %v3550, %v3564
    %v3567 = vunpack.c.l.s4 1966171168
    %v3568 = vunpack.c.0.s8 %v3567
    %v3569 = vlaneseq
    %v3570 = vshrl.u32 %v3569, 7
    %v3571 = vsub.s32 %v3568, %v3570
    %v3572 = vrot.slane %v3548, %v3571
    %v3574 = vunpack.c.l.s4 1966171168
    %v3575 = vunpack.c.0.s8 %v3574
    %v3576 = vlaneseq
    %v3577 = vshrl.u32 %v3576, 7
    %v3578 = vsub.s32 %v3575, %v3577
    %v3579 = vrot.slane %v3551, %v3578
    %v3580 = vcombine.low %v3558, %v3572
    %v3581 = vcombine.high %v3558, %v3572
    %v3582 = vcombine.low %v3565, %v3579
    %v3583 = vunpack.i.l.s16 %v3523
    %v3584 = vunpack.i.h.s16 %v3523
    %v3585 = vunpack.i.l.s16 %v3525
    %v3586 = vunpack.i.h.s16 %v3525
    %v3587 = vunpack.i.l.s16 %v3524
    %v3588 = vunpack.i.l.s16 %v3580
    %v3589 = vunpack.i.h.s16 %v3580
    %v3590 = vunpack.i.l.s16 %v3582
    %v3591 = vunpack.i.h.s16 %v3582
    %v3592 = vunpack.i.l.s16 %v3581
    %v3593 = vld [vmem:[%s8] sm:$0xff]
    %v3594 = vld [vmem:[%s8 + $0x8] sm:$0xff]
    %v3595 = vld [vmem:[%s8 + $0x10] sm:$0xff]
    %v3596 = vld [vmem:[%s8 + $0x18] sm:$0xff]
    %v3597 = vld [vmem:[%s8 + $0x20] sm:$0xff]
    %v3598 = vld [vmem:[%s8 + $0x28] sm:$0xff]
    %v3599 = vld [vmem:[%s8 + $0x30] sm:$0xff]
    %v3600 = vld [vmem:[%s8 + $0x38] sm:$0xff]
    %v3601 = vld [vmem:[%s8 + $0x40] sm:$0xff]
    %v3602 = vld [vmem:[%s8 + $0x48] sm:$0xff]
    %v3603 = vld [vmem:[%s8 + $0x50] sm:$0xff]
    %v3604 = vld [vmem:[%s8 + $0x58] sm:$0xff]
    %v3605 = vld [vmem:[%s8 + $0x60] sm:$0xff]
    %v3606 = vld [vmem:[%s8 + $0x68] sm:$0xff]
    %v3607 = vld [vmem:[%s8 + $0x70] sm:$0xff]
    %v3608 = vld [vmem:[%s8 + $0x78] sm:$0xff]
    %v3609 = vld [vmem:[%s8 + $0x80] sm:$0xff]
    %v3610 = vld [vmem:[%s8 + $0x88] sm:$0xff]
    %v3611 = vld [vmem:[%s8 + $0x90] sm:$0xff]
    %v3612 = vld [vmem:[%s8 + $0x98] sm:$0xff]
    %v3613 = vld [vmem:[%s8 + $0xa0] sm:$0xff]
    %v3614 = vld [vmem:[%s8 + $0xa8] sm:$0xff]
    %v3615 = vld [vmem:[%s8 + $0xb0] sm:$0xff]
    %v3616 = vld [vmem:[%s8 + $0xb8] sm:$0xff]
    %v3617 = vld [vmem:[%s8 + $0xc0] sm:$0xff]
    %v3618 = vld [vmem:[%s8 + $0xc8] sm:$0xff]
    %v3619 = vld [vmem:[%s8 + $0xd0] sm:$0xff]
    %v3620 = vld [vmem:[%s8 + $0xd8] sm:$0xff]
    %v3621 = vld [vmem:[%s8 + $0xe0] sm:$0xff]
    %v3622 = vld [vmem:[%s8 + $0xe8] sm:$0xff]
    %v3623 = vld [vmem:[%s8 + $0xf0] sm:$0xff]
    %v3624 = vld [vmem:[%s8 + $0xf8] sm:$0xff]
    %v3625 = vld [vmem:[%s8 + $0x100] sm:$0xff]
    %v3626 = vld [vmem:[%s8 + $0x108] sm:$0xff]
    %v3627 = vld [vmem:[%s8 + $0x110] sm:$0xff]
    %v3628 = vld [vmem:[%s8 + $0x118] sm:$0xff]
    %v3629 = vld [vmem:[%s8 + $0x120] sm:$0xff]
    %v3630 = vld [vmem:[%s8 + $0x128] sm:$0xff]
    %v3631 = vld [vmem:[%s8 + $0x130] sm:$0xff]
    %v3632 = vld [vmem:[%s8 + $0x138] sm:$0xff]
    %v3633 = vld [vmem:[%s8 + $0x140] sm:$0xff]
    %v3634 = vld [vmem:[%s8 + $0x148] sm:$0xff]
    %v3635 = vld [vmem:[%s8 + $0x150] sm:$0xff]
    %v3636 = vld [vmem:[%s8 + $0x158] sm:$0xff]
    %v3637 = vld [vmem:[%s8 + $0x160] sm:$0xff]
    %v3638 = vld [vmem:[%s8 + $0x168] sm:$0xff]
    %v3639 = vld [vmem:[%s8 + $0x170] sm:$0xff]
    %v3640 = vld [vmem:[%s8 + $0x178] sm:$0xff]
    %v3641 = vld [vmem:[%s8 + $0x180] sm:$0xff]
    %v3642 = vld [vmem:[%s8 + $0x188] sm:$0xff]
    %v3643 = vld [vmem:[%s8 + $0x190] sm:$0xff]
    %v3644 = vld [vmem:[%s8 + $0x198] sm:$0xff]
    %v3645 = vld [vmem:[%s8 + $0x1a0] sm:$0xff]
    %v3646 = vld [vmem:[%s8 + $0x1a8] sm:$0xff]
    %v3647 = vld [vmem:[%s8 + $0x1b0] sm:$0xff]
    %v3648 = vld [vmem:[%s8 + $0x1b8] sm:$0xff]
    %v3649 = vld [vmem:[%s8 + $0x1c0] sm:$0xff]
    %v3650 = vld [vmem:[%s8 + $0x1c8] sm:$0xff]
    %v3651 = vld [vmem:[%s8 + $0x1d0] sm:$0xff]
    %v3652 = vld [vmem:[%s8 + $0x1d8] sm:$0xff]
    %v3653 = vld [vmem:[%s8 + $0x1e0] sm:$0xff]
    %v3654 = vld [vmem:[%s8 + $0x1e8] sm:$0xff]
    %v3655 = vld [vmem:[%s8 + $0x1f0] sm:$0xff]
    %v3656 = vld [vmem:[%s8 + $0x1f8] sm:$0xff]
    %v3657 = vld [vmem:[%s8 + $0x200] sm:$0xff]
    %v3658 = vld [vmem:[%s8 + $0x208] sm:$0xff]
    %v3659 = vld [vmem:[%s8 + $0x210] sm:$0xff]
    %v3660 = vld [vmem:[%s8 + $0x218] sm:$0xff]
    %v3661 = vld [vmem:[%s8 + $0x220] sm:$0xff]
    %v3662 = vld [vmem:[%s8 + $0x228] sm:$0xff]
    %v3663 = vld [vmem:[%s8 + $0x230] sm:$0xff]
    %v3664 = vld [vmem:[%s8 + $0x238] sm:$0xff]
    %v3665 = vld [vmem:[%s8 + $0x240] sm:$0xff]
    %v3666 = vld [vmem:[%s8 + $0x248] sm:$0xff]
    %v3667 = vld [vmem:[%s8 + $0x250] sm:$0xff]
    %v3668 = vld [vmem:[%s8 + $0x258] sm:$0xff]
    %v3669 = vld [vmem:[%s8 + $0x260] sm:$0xff]
    %v3670 = vld [vmem:[%s8 + $0x268] sm:$0xff]
    %v3671 = vld [vmem:[%s8 + $0x270] sm:$0xff]
    %v3672 = vld [vmem:[%s8 + $0x278] sm:$0xff]
    %v3673 = vpack.i.b16 %v3584, %v3583
    %v3674 = vpack.i.b16 %v3586, %v3585
    %v3675 = vpack.i.b16 %v3588, %v3587
    %v3676 = vpack.i.b16 %v3590, %v3589
    %v3677 = vpack.i.b16 %v3592, %v3591
    %v3678 = vcombine.low %v3673, %v3674
    %v3679 = vcombine.high %v3673, %v3674
    %v3680 = vcombine.low %v3675, %v3676
    %v3681 = vcombine.high %v3675, %v3676
    %v3682 = vcombine.high %v3677, %v3677
    %v3684 = vunpack.c.l.s4 1966171168
    %v3685 = vunpack.c.0.s8 %v3684
    %v3686 = vlaneseq
    %v3687 = vshrl.u32 %v3686, 7
    %v3688 = vsub.s32 %v3685, %v3687
    %v3689 = vrot.slane %v3678, %v3688
    %v3691 = vunpack.c.l.s4 1966171168
    %v3692 = vunpack.c.0.s8 %v3691
    %v3693 = vlaneseq
    %v3694 = vshrl.u32 %v3693, 7
    %v3695 = vsub.s32 %v3692, %v3694
    %v3696 = vrot.slane %v3679, %v3695
    %v3698 = vunpack.c.l.s4 1966171168
    %v3699 = vunpack.c.0.s8 %v3698
    %v3700 = vlaneseq
    %v3701 = vshrl.u32 %v3700, 7
    %v3702 = vsub.s32 %v3699, %v3701
    %v3703 = vrot.slane %v3680, %v3702
    %v3705 = vunpack.c.l.s4 1966171168
    %v3706 = vunpack.c.0.s8 %v3705
    %v3707 = vlaneseq
    %v3708 = vshrl.u32 %v3707, 7
    %v3709 = vsub.s32 %v3706, %v3708
    %v3710 = vrot.slane %v3681, %v3709
    %v3712 = vunpack.c.l.s4 1966171168
    %v3713 = vunpack.c.0.s8 %v3712
    %v3714 = vlaneseq
    %v3715 = vshrl.u32 %v3714, 7
    %v3716 = vsub.s32 %v3713, %v3715
    %v3717 = vrot.slane %v3677, %v3716
    %v3719 = vunpack.c.l.s4 1966171168
    %v3720 = vunpack.c.0.s8 %v3719
    %v3721 = vlaneseq
    %v3722 = vshrl.u32 %v3721, 7
    %v3723 = vsub.s32 %v3720, %v3722
    %v3724 = vrot.slane %v3682, %v3723
    %v3725 = vcombine.low %v3689, %v3703
    %v3726 = vcombine.high %v3689, %v3703
    %v3727 = vcombine.low %v3696, %v3710
    %v3728 = vcombine.high %v3717, %v3717
    %v3730 = vunpack.c.l.s4 1966171168
    %v3731 = vunpack.c.0.s8 %v3730
    %v3732 = vlaneseq
    %v3733 = vshrl.u32 %v3732, 7
    %v3734 = vsub.s32 %v3731, %v3733
    %v3735 = vrot.slane %v3725, %v3734
    %v3737 = vunpack.c.l.s4 1966171168
    %v3738 = vunpack.c.0.s8 %v3737
    %v3739 = vlaneseq
    %v3740 = vshrl.u32 %v3739, 7
    %v3741 = vsub.s32 %v3738, %v3740
    %v3742 = vrot.slane %v3727, %v3741
    %v3744 = vunpack.c.l.s4 1966171168
    %v3745 = vunpack.c.0.s8 %v3744
    %v3746 = vlaneseq
    %v3747 = vshrl.u32 %v3746, 7
    %v3748 = vsub.s32 %v3745, %v3747
    %v3749 = vrot.slane %v3726, %v3748
    %v3751 = vunpack.c.l.s4 1966171168
    %v3752 = vunpack.c.0.s8 %v3751
    %v3753 = vlaneseq
    %v3754 = vshrl.u32 %v3753, 7
    %v3755 = vsub.s32 %v3752, %v3754
    %v3756 = vrot.slane %v3717, %v3755
    %v3758 = vunpack.c.l.s4 1966171168
    %v3759 = vunpack.c.0.s8 %v3758
    %v3760 = vlaneseq
    %v3761 = vshrl.u32 %v3760, 7
    %v3762 = vsub.s32 %v3759, %v3761
    %v3763 = vrot.slane %v3724, %v3762
    %v3765 = vunpack.c.l.s4 1966171168
    %v3766 = vunpack.c.0.s8 %v3765
    %v3767 = vlaneseq
    %v3768 = vshrl.u32 %v3767, 7
    %v3769 = vsub.s32 %v3766, %v3768
    %v3770 = vrot.slane %v3728, %v3769
    %v3771 = vcombine.low %v3735, %v3756
    %v3772 = vcombine.high %v3735, %v3756
    %v3773 = vcombine.low %v3742, %v3763
    %v3774 = vcombine.low %v3749, %v3770
    %v3775 = vcombine.high %v3749, %v3770
    %v3861 = vunpack.c.l.b16 %v3593
    %v3862 = vunpack.c.h.b16 %v3593
    %v3863 = vunpack.c.l.b16 %v3594
    %v3864 = vunpack.c.h.b16 %v3594
    %v3865 = vunpack.c.l.b16 %v3595
    %v3866 = vunpack.c.h.b16 %v3595
    %v3867 = vunpack.c.l.b16 %v3596
    %v3868 = vunpack.c.h.b16 %v3596
    %v3869 = vunpack.c.l.b16 %v3597
    %v3870 = vunpack.c.h.b16 %v3597
    %v3871 = vunpack.c.l.b16 %v3598
    %v3872 = vunpack.c.h.b16 %v3598
    %v3873 = vunpack.c.l.b16 %v3599
    %v3874 = vunpack.c.h.b16 %v3599
    %v3875 = vunpack.c.l.b16 %v3600
    %v3876 = vunpack.c.h.b16 %v3600
    %v3877 = vunpack.c.l.b16 %v3601
    %v3878 = vunpack.c.h.b16 %v3601
    %v3879 = vunpack.c.l.b16 %v3602
    %v3880 = vunpack.c.h.b16 %v3602
    %v3881 = vunpack.c.l.b16 %v3603
    %v3882 = vunpack.c.h.b16 %v3603
    %v3883 = vunpack.c.l.b16 %v3604
    %v3884 = vunpack.c.h.b16 %v3604
    %v3885 = vunpack.c.l.b16 %v3605
    %v3886 = vunpack.c.h.b16 %v3605
    %v3887 = vunpack.c.l.b16 %v3606
    %v3888 = vunpack.c.h.b16 %v3606
    %v3889 = vunpack.c.l.b16 %v3607
    %v3890 = vunpack.c.h.b16 %v3607
    %v3891 = vunpack.c.l.b16 %v3608
    %v3892 = vunpack.c.h.b16 %v3608
    %v3893 = vunpack.c.l.b16 %v3609
    %v3894 = vunpack.c.h.b16 %v3609
    %v3895 = vunpack.c.l.b16 %v3610
    %v3896 = vunpack.c.h.b16 %v3610
    %v3897 = vunpack.c.l.b16 %v3611
    %v3898 = vunpack.c.h.b16 %v3611
    %v3899 = vunpack.c.l.b16 %v3612
    %v3900 = vunpack.c.h.b16 %v3612
    %v3901 = vunpack.c.l.b16 %v3613
    %v3902 = vunpack.c.h.b16 %v3613
    %v3903 = vunpack.c.l.b16 %v3614
    %v3904 = vunpack.c.h.b16 %v3614
    %v3905 = vunpack.c.l.b16 %v3615
    %v3906 = vunpack.c.h.b16 %v3615
    %v3907 = vunpack.c.l.b16 %v3616
    %v3908 = vunpack.c.h.b16 %v3616
    %v3909 = vunpack.c.l.b16 %v3617
    %v3910 = vunpack.c.h.b16 %v3617
    %v3911 = vunpack.c.l.b16 %v3618
    %v3912 = vunpack.c.h.b16 %v3618
    %v3913 = vunpack.c.l.b16 %v3619
    %v3914 = vunpack.c.h.b16 %v3619
    %v3915 = vunpack.c.l.b16 %v3620
    %v3916 = vunpack.c.h.b16 %v3620
    %v3917 = vunpack.c.l.b16 %v3621
    %v3918 = vunpack.c.h.b16 %v3621
    %v3919 = vunpack.c.l.b16 %v3622
    %v3920 = vunpack.c.h.b16 %v3622
    %v3921 = vunpack.c.l.b16 %v3623
    %v3922 = vunpack.c.h.b16 %v3623
    %v3923 = vunpack.c.l.b16 %v3624
    %v3924 = vunpack.c.h.b16 %v3624
    %v3925 = vunpack.c.l.b16 %v3625
    %v3926 = vunpack.c.h.b16 %v3625
    %v3927 = vunpack.c.l.b16 %v3626
    %v3928 = vunpack.c.h.b16 %v3626
    %v3929 = vunpack.c.l.b16 %v3627
    %v3930 = vunpack.c.h.b16 %v3627
    %v3931 = vunpack.c.l.b16 %v3628
    %v3932 = vunpack.c.h.b16 %v3628
    %v3933 = vunpack.c.l.b16 %v3629
    %v3934 = vunpack.c.h.b16 %v3629
    %v3935 = vunpack.c.l.b16 %v3630
    %v3936 = vunpack.c.h.b16 %v3630
    %v3937 = vunpack.c.l.b16 %v3631
    %v3938 = vunpack.c.h.b16 %v3631
    %v3939 = vunpack.c.l.b16 %v3632
    %v3940 = vunpack.c.h.b16 %v3632
    %v3941 = vunpack.c.l.b16 %v3633
    %v3942 = vunpack.c.h.b16 %v3633
    %v3943 = vunpack.c.l.b16 %v3634
    %v3944 = vunpack.c.h.b16 %v3634
    %v3945 = vunpack.c.l.b16 %v3635
    %v3946 = vunpack.c.h.b16 %v3635
    %v3947 = vunpack.c.l.b16 %v3636
    %v3948 = vunpack.c.h.b16 %v3636
    %v3949 = vunpack.c.l.b16 %v3637
    %v3950 = vunpack.c.h.b16 %v3637
    %v3951 = vunpack.c.l.b16 %v3638
    %v3952 = vunpack.c.h.b16 %v3638
    %v3953 = vunpack.c.l.b16 %v3639
    %v3954 = vunpack.c.h.b16 %v3639
    %v3955 = vunpack.c.l.b16 %v3640
    %v3956 = vunpack.c.h.b16 %v3640
    %v3957 = vunpack.c.l.b16 %v3641
    %v3958 = vunpack.c.h.b16 %v3641
    %v3959 = vunpack.c.l.b16 %v3642
    %v3960 = vunpack.c.h.b16 %v3642
    %v3961 = vunpack.c.l.b16 %v3643
    %v3962 = vunpack.c.h.b16 %v3643
    %v3963 = vunpack.c.l.b16 %v3644
    %v3964 = vunpack.c.h.b16 %v3644
    %v3965 = vunpack.c.l.b16 %v3645
    %v3966 = vunpack.c.h.b16 %v3645
    %v3967 = vunpack.c.l.b16 %v3646
    %v3968 = vunpack.c.h.b16 %v3646
    %v3969 = vunpack.c.l.b16 %v3647
    %v3970 = vunpack.c.h.b16 %v3647
    %v3971 = vunpack.c.l.b16 %v3648
    %v3972 = vunpack.c.h.b16 %v3648
    %v3973 = vunpack.c.l.b16 %v3649
    %v3974 = vunpack.c.h.b16 %v3649
    %v3975 = vunpack.c.l.b16 %v3650
    %v3976 = vunpack.c.h.b16 %v3650
    %v3977 = vunpack.c.l.b16 %v3651
    %v3978 = vunpack.c.h.b16 %v3651
    %v3979 = vunpack.c.l.b16 %v3652
    %v3980 = vunpack.c.h.b16 %v3652
    %v3981 = vunpack.c.l.b16 %v3653
    %v3982 = vunpack.c.h.b16 %v3653
    %v3983 = vunpack.c.l.b16 %v3654
    %v3984 = vunpack.c.h.b16 %v3654
    %v3985 = vunpack.c.l.b16 %v3655
    %v3986 = vunpack.c.h.b16 %v3655
    %v3987 = vunpack.c.l.b16 %v3656
    %v3988 = vunpack.c.h.b16 %v3656
    %v3989 = vunpack.c.l.b16 %v3657
    %v3990 = vunpack.c.h.b16 %v3657
    %v3991 = vunpack.c.l.b16 %v3658
    %v3992 = vunpack.c.h.b16 %v3658
    %v3993 = vunpack.c.l.b16 %v3659
    %v3994 = vunpack.c.h.b16 %v3659
    %v3995 = vunpack.c.l.b16 %v3660
    %v3996 = vunpack.c.h.b16 %v3660
    %v3997 = vunpack.c.l.b16 %v3661
    %v3998 = vunpack.c.h.b16 %v3661
    %v3999 = vunpack.c.l.b16 %v3662
    %v4000 = vunpack.c.h.b16 %v3662
    %v4001 = vunpack.c.l.b16 %v3663
    %v4002 = vunpack.c.h.b16 %v3663
    %v4003 = vunpack.c.l.b16 %v3664
    %v4004 = vunpack.c.h.b16 %v3664
    %v4005 = vunpack.c.l.b16 %v3665
    %v4006 = vunpack.c.h.b16 %v3665
    %v4007 = vunpack.c.l.b16 %v3666
    %v4008 = vunpack.c.h.b16 %v3666
    %v4009 = vunpack.c.l.b16 %v3667
    %v4010 = vunpack.c.h.b16 %v3667
    %v4011 = vunpack.c.l.b16 %v3668
    %v4012 = vunpack.c.h.b16 %v3668
    %v4013 = vunpack.c.l.b16 %v3669
    %v4014 = vunpack.c.h.b16 %v3669
    %v4015 = vunpack.c.l.b16 %v3670
    %v4016 = vunpack.c.h.b16 %v3670
    %v4017 = vunpack.c.l.b16 %v3671
    %v4018 = vunpack.c.h.b16 %v3671
    %v4019 = vunpack.c.l.b16 %v3672
    %v4020 = vunpack.c.h.b16 %v3672
    %v4021 = vpack.c.b16 %v3863, %v3861
    %v4022 = vpack.c.b16 %v3864, %v3862
    %v4023 = vpack.c.b16 %v3867, %v3865
    %v4024 = vpack.c.b16 %v3868, %v3866
    %v4025 = vpack.c.b16 %v3871, %v3869
    %v4026 = vpack.c.b16 %v3872, %v3870
    %v4027 = vpack.c.b16 %v3875, %v3873
    %v4028 = vpack.c.b16 %v3876, %v3874
    %v4029 = vpack.c.b16 %v3879, %v3877
    %v4030 = vpack.c.b16 %v3880, %v3878
    %v4031 = vpack.c.b16 %v3883, %v3881
    %v4032 = vpack.c.b16 %v3884, %v3882
    %v4033 = vpack.c.b16 %v3887, %v3885
    %v4034 = vpack.c.b16 %v3888, %v3886
    %v4035 = vpack.c.b16 %v3891, %v3889
    %v4036 = vpack.c.b16 %v3892, %v3890
    %v4037 = vpack.c.b16 %v3895, %v3893
    %v4038 = vpack.c.b16 %v3896, %v3894
    %v4039 = vpack.c.b16 %v3899, %v3897
    %v4040 = vpack.c.b16 %v3900, %v3898
    %v4041 = vpack.c.b16 %v3903, %v3901
    %v4042 = vpack.c.b16 %v3904, %v3902
    %v4043 = vpack.c.b16 %v3907, %v3905
    %v4044 = vpack.c.b16 %v3908, %v3906
    %v4045 = vpack.c.b16 %v3911, %v3909
    %v4046 = vpack.c.b16 %v3912, %v3910
    %v4047 = vpack.c.b16 %v3915, %v3913
    %v4048 = vpack.c.b16 %v3916, %v3914
    %v4049 = vpack.c.b16 %v3919, %v3917
    %v4050 = vpack.c.b16 %v3920, %v3918
    %v4051 = vpack.c.b16 %v3923, %v3921
    %v4052 = vpack.c.b16 %v3924, %v3922
    %v4053 = vpack.c.b16 %v3927, %v3925
    %v4054 = vpack.c.b16 %v3928, %v3926
    %v4055 = vpack.c.b16 %v3931, %v3929
    %v4056 = vpack.c.b16 %v3932, %v3930
    %v4057 = vpack.c.b16 %v3935, %v3933
    %v4058 = vpack.c.b16 %v3936, %v3934
    %v4059 = vpack.c.b16 %v3939, %v3937
    %v4060 = vpack.c.b16 %v3940, %v3938
    %v4061 = vpack.c.b16 %v3943, %v3941
    %v4062 = vpack.c.b16 %v3944, %v3942
    %v4063 = vpack.c.b16 %v3947, %v3945
    %v4064 = vpack.c.b16 %v3948, %v3946
    %v4065 = vpack.c.b16 %v3951, %v3949
    %v4066 = vpack.c.b16 %v3952, %v3950
    %v4067 = vpack.c.b16 %v3955, %v3953
    %v4068 = vpack.c.b16 %v3956, %v3954
    %v4069 = vpack.c.b16 %v3959, %v3957
    %v4070 = vpack.c.b16 %v3960, %v3958
    %v4071 = vpack.c.b16 %v3963, %v3961
    %v4072 = vpack.c.b16 %v3964, %v3962
    %v4073 = vpack.c.b16 %v3967, %v3965
    %v4074 = vpack.c.b16 %v3968, %v3966
    %v4075 = vpack.c.b16 %v3971, %v3969
    %v4076 = vpack.c.b16 %v3972, %v3970
    %v4077 = vpack.c.b16 %v3975, %v3973
    %v4078 = vpack.c.b16 %v3976, %v3974
    %v4079 = vpack.c.b16 %v3979, %v3977
    %v4080 = vpack.c.b16 %v3980, %v3978
    %v4081 = vpack.c.b16 %v3983, %v3981
    %v4082 = vpack.c.b16 %v3984, %v3982
    %v4083 = vpack.c.b16 %v3987, %v3985
    %v4084 = vpack.c.b16 %v3988, %v3986
    %v4085 = vpack.c.b16 %v3991, %v3989
    %v4086 = vpack.c.b16 %v3992, %v3990
    %v4087 = vpack.c.b16 %v3995, %v3993
    %v4088 = vpack.c.b16 %v3996, %v3994
    %v4089 = vpack.c.b16 %v3999, %v3997
    %v4090 = vpack.c.b16 %v4000, %v3998
    %v4091 = vpack.c.b16 %v4003, %v4001
    %v4092 = vpack.c.b16 %v4004, %v4002
    %v4093 = vpack.c.b16 %v4007, %v4005
    %v4094 = vpack.c.b16 %v4008, %v4006
    %v4095 = vpack.c.b16 %v4011, %v4009
    %v4096 = vpack.c.b16 %v4012, %v4010
    %v4097 = vpack.c.b16 %v4015, %v4013
    %v4098 = vpack.c.b16 %v4016, %v4014
    %v4099 = vpack.c.b16 %v4019, %v4017
    %v4100 = vpack.c.b16 %v4020, %v4018
    %4181 = vmatprep.subr.bf16.mxu0 %v4022
    %4182 = vmatpush1.bf16.msra.mxu0 %v4021
    %4183 = vmatprep.subr.bf16.mxu0 %v4024
    %4184 = vmatpush1.bf16.msra.mxu0 %v4023
    %4185 = vmatprep.subr.bf16.mxu0 %v4026
    %4186 = vmatpush1.bf16.msra.mxu0 %v4025
    %4187 = vmatprep.subr.bf16.mxu0 %v4028
    %4188 = vmatpush1.bf16.msra.mxu0 %v4027
    %4189 = vmatprep.subr.bf16.mxu0 %v4030
    %4190 = vmatpush1.bf16.msra.mxu0 %v4029
    %4191 = vmatprep.subr.bf16.mxu0 %v4032
    %4192 = vmatpush1.bf16.msra.mxu0 %v4031
    %4193 = vmatprep.subr.bf16.mxu0 %v4034
    %4194 = vmatpush1.bf16.msra.mxu0 %v4033
    %4195 = vmatprep.subr.bf16.mxu0 %v4036
    %4196 = vmatpush1.bf16.msra.mxu0 %v4035
    %4197 = vmatprep.subr.bf16.mxu0 %v4038
    %4198 = vmatpush1.bf16.msra.mxu0 %v4037
    %4199 = vmatprep.subr.bf16.mxu0 %v4040
    %4200 = vmatpush1.bf16.msra.mxu0 %v4039
    %4201 = vmatprep.subr.bf16.mxu0 %v4042
    %4202 = vmatpush1.bf16.msra.mxu0 %v4041
    %4203 = vmatprep.subr.bf16.mxu0 %v4044
    %4204 = vmatpush1.bf16.msra.mxu0 %v4043
    %4205 = vmatprep.subr.bf16.mxu0 %v4046
    %4206 = vmatpush1.bf16.msra.mxu0 %v4045
    %4207 = vmatprep.subr.bf16.mxu0 %v4048
    %4208 = vmatpush1.bf16.msra.mxu0 %v4047
    %4209 = vmatprep.subr.bf16.mxu0 %v4050
    %4210 = vmatpush1.bf16.msra.mxu0 %v4049
    %4211 = vmatprep.subr.bf16.mxu0 %v4052
    %4212 = vmatpush1.bf16.msra.mxu0 %v4051
    %4213 = vmatprep.mubr.bf16.mxu0 %v3774
    %4214 = vmatmul.mubr.bf16.gmra.mrb[0].mxu0 %v3771
    %v4215 = vpop.f32.mrb[0].mxu0
    %v4216 = vadd.f32 0.0, %v4215
    %v4217 = vpop.f32.mrb[0].mxu0
    %v4218 = vadd.f32 0.0, %v4217
    %v4219 = vpop.f32.mrb[0].mxu0
    %v4220 = vadd.f32 0.0, %v4219
    %v4221 = vpop.f32.mrb[0].mxu0
    %v4222 = vadd.f32 0.0, %v4221
    %4223 = vdwg.mxu0
    %4224 = vmatprep.subr.bf16.mxu0 %v4054
    %4225 = vmatpush1.bf16.msra.mxu0 %v4053
    %4226 = vmatprep.subr.bf16.mxu0 %v4056
    %4227 = vmatpush1.bf16.msra.mxu0 %v4055
    %4228 = vmatprep.subr.bf16.mxu0 %v4058
    %4229 = vmatpush1.bf16.msra.mxu0 %v4057
    %4230 = vmatprep.subr.bf16.mxu0 %v4060
    %4231 = vmatpush1.bf16.msra.mxu0 %v4059
    %4232 = vmatprep.subr.bf16.mxu0 %v4062
    %4233 = vmatpush1.bf16.msra.mxu0 %v4061
    %4234 = vmatprep.subr.bf16.mxu0 %v4064
    %4235 = vmatpush1.bf16.msra.mxu0 %v4063
    %4236 = vmatprep.subr.bf16.mxu0 %v4066
    %4237 = vmatpush1.bf16.msra.mxu0 %v4065
    %4238 = vmatprep.subr.bf16.mxu0 %v4068
    %4239 = vmatpush1.bf16.msra.mxu0 %v4067
    %4240 = vmatprep.subr.bf16.mxu0 %v4070
    %4241 = vmatpush1.bf16.msra.mxu0 %v4069
    %4242 = vmatprep.subr.bf16.mxu0 %v4072
    %4243 = vmatpush1.bf16.msra.mxu0 %v4071
    %4244 = vmatprep.subr.bf16.mxu0 %v4074
    %4245 = vmatpush1.bf16.msra.mxu0 %v4073
    %4246 = vmatprep.subr.bf16.mxu0 %v4076
    %4247 = vmatpush1.bf16.msra.mxu0 %v4075
    %4248 = vmatprep.subr.bf16.mxu0 %v4078
    %4249 = vmatpush1.bf16.msra.mxu0 %v4077
    %4250 = vmatprep.subr.bf16.mxu0 %v4080
    %4251 = vmatpush1.bf16.msra.mxu0 %v4079
    %4252 = vmatprep.subr.bf16.mxu0 %v4082
    %4253 = vmatpush1.bf16.msra.mxu0 %v4081
    %4254 = vmatprep.subr.bf16.mxu0 %v4084
    %4255 = vmatpush1.bf16.msra.mxu0 %v4083
    %4256 = vmatprep.mubr.bf16.mxu0 %v3775
    %4257 = vmatmul.mubr.bf16.gmra.mrb[0].mxu0 %v3772
    %v4258 = vpop.f32.mrb[0].mxu0
    %v4259 = vadd.f32 %v4216, %v4258
    %v4260 = vpop.f32.mrb[0].mxu0
    %v4261 = vadd.f32 %v4218, %v4260
    %v4262 = vpop.f32.mrb[0].mxu0
    %v4263 = vadd.f32 %v4220, %v4262
    %v4264 = vpop.f32.mrb[0].mxu0
    %v4265 = vadd.f32 %v4222, %v4264
    %4266 = vdwg.mxu0
    %4267 = vmatprep.subr.bf16.mxu0 %v4086
    %4268 = vmatpush1.bf16.msra.mxu0 %v4085
    %4269 = vmatprep.subr.bf16.mxu0 %v4088
    %4270 = vmatpush1.bf16.msra.mxu0 %v4087
    %4271 = vmatprep.subr.bf16.mxu0 %v4090
    %4272 = vmatpush1.bf16.msra.mxu0 %v4089
    %4273 = vmatprep.subr.bf16.mxu0 %v4092
    %4274 = vmatpush1.bf16.msra.mxu0 %v4091
    %4275 = vmatprep.subr.bf16.mxu0 %v4094
    %4276 = vmatpush1.bf16.msra.mxu0 %v4093
    %4277 = vmatprep.subr.bf16.mxu0 %v4096
    %4278 = vmatpush1.bf16.msra.mxu0 %v4095
    %4279 = vmatprep.subr.bf16.mxu0 %v4098
    %4280 = vmatpush1.bf16.msra.mxu0 %v4097
    %4281 = vmatprep.subr.bf16.mxu0 %v4100
    %4282 = vmatpush1.bf16.msra.mxu0 %v4099
    %4283 = vmatprep.subr.bf16.mxu0 0
    %4284 = vmatpush1.bf16.msra.mxu0 0
    %4285 = vmatprep.subr.bf16.mxu0 0
    %4286 = vmatpush1.bf16.msra.mxu0 0
    %4287 = vmatprep.subr.bf16.mxu0 0
    %4288 = vmatpush1.bf16.msra.mxu0 0
    %4289 = vmatprep.subr.bf16.mxu0 0
    %4290 = vmatpush1.bf16.msra.mxu0 0
    %4291 = vmatprep.subr.bf16.mxu0 0
    %4292 = vmatpush1.bf16.msra.mxu0 0
    %4293 = vmatprep.subr.bf16.mxu0 0
    %4294 = vmatpush1.bf16.msra.mxu0 0
    %4295 = vmatprep.subr.bf16.mxu0 0
    %4296 = vmatpush1.bf16.msra.mxu0 0
    %4297 = vmatprep.subr.bf16.mxu0 0
    %4298 = vmatpush1.bf16.msra.mxu0 0
    %4299 = vmatprep.mubr.bf16.mxu0 0
    %4300 = vmatmul.mubr.bf16.gmra.mrb[0].mxu0 %v3773
    %v4301 = vpop.f32.mrb[0].mxu0
    %v4302 = vadd.f32 %v4259, %v4301
    %v4303 = vpop.f32.mrb[0].mxu0
    %v4304 = vadd.f32 %v4261, %v4303
    %v4305 = vpop.f32.mrb[0].mxu0
    %v4306 = vadd.f32 %v4263, %v4305
    %v4307 = vpop.f32.mrb[0].mxu0
    %v4308 = vadd.f32 %v4265, %v4307
    %4309 = vdwg.mxu0
    %v4314 = vcombine.low %v4302, %v4304
    %v4315 = vcombine.high %v4302, %v4304
    %v4317 = vunpack.c.l.s4 1966171168
    %v4318 = vunpack.c.0.s8 %v4317
    %v4319 = vlaneseq
    %v4320 = vshrl.u32 %v4319, 7
    %v4321 = vsub.s32 %v4318, %v4320
    %v4322 = vrot.slane %v4314, %v4321
    %v4324 = vunpack.c.l.s4 1966171168
    %v4325 = vunpack.c.0.s8 %v4324
    %v4326 = vlaneseq
    %v4327 = vshrl.u32 %v4326, 7
    %v4328 = vsub.s32 %v4325, %v4327
    %v4329 = vrot.slane %v4315, %v4328
    %v4330 = vcombine.high %v4322, %v4322
    %v4331 = vcombine.high %v4329, %v4329
    %v4333 = vunpack.c.l.s4 1966171168
    %v4334 = vunpack.c.0.s8 %v4333
    %v4335 = vlaneseq
    %v4336 = vshrl.u32 %v4335, 7
    %v4337 = vsub.s32 %v4334, %v4336
    %v4338 = vrot.slane %v4322, %v4337
    %v4340 = vunpack.c.l.s4 1966171168
    %v4341 = vunpack.c.0.s8 %v4340
    %v4342 = vlaneseq
    %v4343 = vshrl.u32 %v4342, 7
    %v4344 = vsub.s32 %v4341, %v4343
    %v4345 = vrot.slane %v4329, %v4344
    %v4347 = vunpack.c.l.s4 1966171168
    %v4348 = vunpack.c.0.s8 %v4347
    %v4349 = vlaneseq
    %v4350 = vshrl.u32 %v4349, 7
    %v4351 = vsub.s32 %v4348, %v4350
    %v4352 = vrot.slane %v4330, %v4351
    %v4354 = vunpack.c.l.s4 1966171168
    %v4355 = vunpack.c.0.s8 %v4354
    %v4356 = vlaneseq
    %v4357 = vshrl.u32 %v4356, 7
    %v4358 = vsub.s32 %v4355, %v4357
    %v4359 = vrot.slane %v4331, %v4358
    %v4360 = vcombine.high %v4338, %v4338
    %v4361 = vcombine.high %v4345, %v4345
    %v4362 = vcombine.high %v4352, %v4352
    %v4363 = vcombine.high %v4359, %v4359
    %v4364 = vcombine.low %v4306, %v4308
    %v4366 = vunpack.c.l.s4 1966171168
    %v4367 = vunpack.c.0.s8 %v4366
    %v4368 = vlaneseq
    %v4369 = vshrl.u32 %v4368, 7
    %v4370 = vsub.s32 %v4367, %v4369
    %v4371 = vrot.slane %v4364, %v4370
    %v4372 = vcombine.high %v4371, %v4371
    %v4374 = vunpack.c.l.s4 1966171168
    %v4375 = vunpack.c.0.s8 %v4374
    %v4376 = vlaneseq
    %v4377 = vshrl.u32 %v4376, 7
    %v4378 = vsub.s32 %v4375, %v4377
    %v4379 = vrot.slane %v4371, %v4378
    %v4381 = vunpack.c.l.s4 1966171168
    %v4382 = vunpack.c.0.s8 %v4381
    %v4383 = vlaneseq
    %v4384 = vshrl.u32 %v4383, 7
    %v4385 = vsub.s32 %v4382, %v4384
    %v4386 = vrot.slane %v4372, %v4385
    %v4397 = vld [vmem:[%s9] sm:$0x3]
    %v4399 = vlaneseq
    %v4400 = vshrl.u32 %v4399, 7
    %v4401 = vsub.s32 0, %v4400
    %v4402 = vrot.slane %v4397, %v4401
    %v4403 = vlaneseq
    %v4404 = vshrl.u32 %v4403, 7
    %v4405 = vsub.s32 1, %v4404
    %v4406 = vrot.slane %v4397, %v4405
    %v4407 = vcombine.low %v4402, %v4406
    %v4408 = vcombine.high %v4402, %v4406
    %v4410 = vunpack.c.l.s4 1966171168
    %v4411 = vunpack.c.0.s8 %v4410
    %v4412 = vlaneseq
    %v4413 = vshrl.u32 %v4412, 7
    %v4414 = vsub.s32 %v4411, %v4413
    %v4415 = vrot.slane %v4407, %v4414
    %v4417 = vunpack.c.l.s4 1966171168
    %v4418 = vunpack.c.0.s8 %v4417
    %v4419 = vlaneseq
    %v4420 = vshrl.u32 %v4419, 7
    %v4421 = vsub.s32 %v4418, %v4420
    %v4422 = vrot.slane %v4408, %v4421
    %v4423 = vcombine.high %v4415, %v4415
    %v4425 = vunpack.c.l.s4 1966171168
    %v4426 = vunpack.c.0.s8 %v4425
    %v4427 = vlaneseq
    %v4428 = vshrl.u32 %v4427, 7
    %v4429 = vsub.s32 %v4426, %v4428
    %v4430 = vrot.slane %v4415, %v4429
    %v4432 = vunpack.c.l.s4 1966171168
    %v4433 = vunpack.c.0.s8 %v4432
    %v4434 = vlaneseq
    %v4435 = vshrl.u32 %v4434, 7
    %v4436 = vsub.s32 %v4433, %v4435
    %v4437 = vrot.slane %v4422, %v4436
    %v4439 = vunpack.c.l.s4 1966171168
    %v4440 = vunpack.c.0.s8 %v4439
    %v4441 = vlaneseq
    %v4442 = vshrl.u32 %v4441, 7
    %v4443 = vsub.s32 %v4440, %v4442
    %v4444 = vrot.slane %v4423, %v4443
    %v4445 = vcombine.high %v4430, %v4430
    %v4446 = vcombine.high %v4444, %v4444
    %v4452 = vmul.f32 %v4338, %v4430
    %v4453 = vmul.f32 %v4352, %v4444
    %v4454 = vmul.f32 %v4360, %v4445
    %v4455 = vmul.f32 %v4362, %v4446
    %v4456 = vmul.f32 %v4345, %v4437
    %v4457 = vmul.f32 %v4359, %v4430
    %v4458 = vmul.f32 %v4361, %v4444
    %v4459 = vmul.f32 %v4363, %v4445
    %v4460 = vmul.f32 %v4379, %v4446
    %v4461 = vmul.f32 %v4386, %v4437
    %v4462 = vld [vmem:[%s10] sm:$0x3]
    %v4464 = vlaneseq
    %v4465 = vshrl.u32 %v4464, 7
    %v4466 = vsub.s32 0, %v4465
    %v4467 = vrot.slane %v4462, %v4466
    %v4468 = vlaneseq
    %v4469 = vshrl.u32 %v4468, 7
    %v4470 = vsub.s32 1, %v4469
    %v4471 = vrot.slane %v4462, %v4470
    %v4472 = vcombine.low %v4467, %v4471
    %v4473 = vcombine.high %v4467, %v4471
    %v4475 = vunpack.c.l.s4 1966171168
    %v4476 = vunpack.c.0.s8 %v4475
    %v4477 = vlaneseq
    %v4478 = vshrl.u32 %v4477, 7
    %v4479 = vsub.s32 %v4476, %v4478
    %v4480 = vrot.slane %v4472, %v4479
    %v4482 = vunpack.c.l.s4 1966171168
    %v4483 = vunpack.c.0.s8 %v4482
    %v4484 = vlaneseq
    %v4485 = vshrl.u32 %v4484, 7
    %v4486 = vsub.s32 %v4483, %v4485
    %v4487 = vrot.slane %v4473, %v4486
    %v4488 = vcombine.high %v4480, %v4480
    %v4490 = vunpack.c.l.s4 1966171168
    %v4491 = vunpack.c.0.s8 %v4490
    %v4492 = vlaneseq
    %v4493 = vshrl.u32 %v4492, 7
    %v4494 = vsub.s32 %v4491, %v4493
    %v4495 = vrot.slane %v4480, %v4494
    %v4497 = vunpack.c.l.s4 1966171168
    %v4498 = vunpack.c.0.s8 %v4497
    %v4499 = vlaneseq
    %v4500 = vshrl.u32 %v4499, 7
    %v4501 = vsub.s32 %v4498, %v4500
    %v4502 = vrot.slane %v4487, %v4501
    %v4504 = vunpack.c.l.s4 1966171168
    %v4505 = vunpack.c.0.s8 %v4504
    %v4506 = vlaneseq
    %v4507 = vshrl.u32 %v4506, 7
    %v4508 = vsub.s32 %v4505, %v4507
    %v4509 = vrot.slane %v4488, %v4508
    %v4510 = vcombine.high %v4495, %v4495
    %v4511 = vcombine.high %v4509, %v4509
    %v4517 = vadd.f32 %v4452, %v4495
    %v4518 = vadd.f32 %v4453, %v4509
    %v4519 = vadd.f32 %v4454, %v4510
    %v4520 = vadd.f32 %v4455, %v4511
    %v4521 = vadd.f32 %v4456, %v4502
    %v4522 = vadd.f32 %v4457, %v4495
    %v4523 = vadd.f32 %v4458, %v4509
    %v4524 = vadd.f32 %v4459, %v4510
    %v4525 = vadd.f32 %v4460, %v4511
    %v4526 = vadd.f32 %v4461, %v4502
    %v4527 = vmax.f32 %v4517, 0.0
    %v4528 = vmax.f32 %v4518, 0.0
    %v4529 = vmax.f32 %v4519, 0.0
    %v4530 = vmax.f32 %v4520, 0.0
    %v4531 = vmax.f32 %v4521, 0.0
    %v4532 = vmax.f32 %v4522, 0.0
    %v4533 = vmax.f32 %v4523, 0.0
    %v4534 = vmax.f32 %v4524, 0.0
    %v4535 = vmax.f32 %v4525, 0.0
    %v4536 = vmax.f32 %v4526, 0.0
    %v4547 = vcombine.low %v4527, %v4528
    %v4548 = vcombine.low %v4529, %v4530
    %v4550 = vunpack.c.l.s4 1966171168
    %v4551 = vunpack.c.0.s8 %v4550
    %v4552 = vlaneseq
    %v4553 = vshrl.u32 %v4552, 7
    %v4554 = vsub.s32 %v4551, %v4553
    %v4555 = vrot.slane %v4547, %v4554
    %v4557 = vunpack.c.l.s4 1966171168
    %v4558 = vunpack.c.0.s8 %v4557
    %v4559 = vlaneseq
    %v4560 = vshrl.u32 %v4559, 7
    %v4561 = vsub.s32 %v4558, %v4560
    %v4562 = vrot.slane %v4548, %v4561
    %v4564 = vunpack.c.l.s4 1966171168
    %v4565 = vunpack.c.0.s8 %v4564
    %v4566 = vlaneseq
    %v4567 = vshrl.u32 %v4566, 7
    %v4568 = vsub.s32 %v4565, %v4567
    %v4569 = vrot.slane %v4531, %v4568
    %v4570 = vcombine.low %v4555, %v4562
    %v4571 = vcombine.high %v4555, %v4562
    %v4572 = vcombine.high %v4569, %v4569
    %v4574 = vunpack.c.l.s4 1966171168
    %v4575 = vunpack.c.0.s8 %v4574
    %v4576 = vlaneseq
    %v4577 = vshrl.u32 %v4576, 7
    %v4578 = vsub.s32 %v4575, %v4577
    %v4579 = vrot.slane %v4570, %v4578
    %v4581 = vunpack.c.l.s4 1966171168
    %v4582 = vunpack.c.0.s8 %v4581
    %v4583 = vlaneseq
    %v4584 = vshrl.u32 %v4583, 7
    %v4585 = vsub.s32 %v4582, %v4584
    %v4586 = vrot.slane %v4571, %v4585
    %v4588 = vunpack.c.l.s4 1966171168
    %v4589 = vunpack.c.0.s8 %v4588
    %v4590 = vlaneseq
    %v4591 = vshrl.u32 %v4590, 7
    %v4592 = vsub.s32 %v4589, %v4591
    %v4593 = vrot.slane %v4569, %v4592
    %v4595 = vunpack.c.l.s4 1966171168
    %v4596 = vunpack.c.0.s8 %v4595
    %v4597 = vlaneseq
    %v4598 = vshrl.u32 %v4597, 7
    %v4599 = vsub.s32 %v4596, %v4598
    %v4600 = vrot.slane %v4572, %v4599
    %v4601 = vcombine.low %v4579, %v4593
    %v4602 = vcombine.low %v4586, %v4600
    %v4603 = vcombine.low %v4532, %v4533
    %v4604 = vcombine.low %v4534, %v4535
    %v4606 = vunpack.c.l.s4 1966171168
    %v4607 = vunpack.c.0.s8 %v4606
    %v4608 = vlaneseq
    %v4609 = vshrl.u32 %v4608, 7
    %v4610 = vsub.s32 %v4607, %v4609
    %v4611 = vrot.slane %v4603, %v4610
    %v4613 = vunpack.c.l.s4 1966171168
    %v4614 = vunpack.c.0.s8 %v4613
    %v4615 = vlaneseq
    %v4616 = vshrl.u32 %v4615, 7
    %v4617 = vsub.s32 %v4614, %v4616
    %v4618 = vrot.slane %v4604, %v4617
    %v4620 = vunpack.c.l.s4 1966171168
    %v4621 = vunpack.c.0.s8 %v4620
    %v4622 = vlaneseq
    %v4623 = vshrl.u32 %v4622, 7
    %v4624 = vsub.s32 %v4621, %v4623
    %v4625 = vrot.slane %v4536, %v4624
    %v4626 = vcombine.low %v4611, %v4618
    %v4627 = vcombine.high %v4611, %v4618
    %v4628 = vcombine.high %v4625, %v4625
    %v4630 = vunpack.c.l.s4 1966171168
    %v4631 = vunpack.c.0.s8 %v4630
    %v4632 = vlaneseq
    %v4633 = vshrl.u32 %v4632, 7
    %v4634 = vsub.s32 %v4631, %v4633
    %v4635 = vrot.slane %v4626, %v4634
    %v4637 = vunpack.c.l.s4 1966171168
    %v4638 = vunpack.c.0.s8 %v4637
    %v4639 = vlaneseq
    %v4640 = vshrl.u32 %v4639, 7
    %v4641 = vsub.s32 %v4638, %v4640
    %v4642 = vrot.slane %v4627, %v4641
    %v4644 = vunpack.c.l.s4 1966171168
    %v4645 = vunpack.c.0.s8 %v4644
    %v4646 = vlaneseq
    %v4647 = vshrl.u32 %v4646, 7
    %v4648 = vsub.s32 %v4645, %v4647
    %v4649 = vrot.slane %v4625, %v4648
    %v4651 = vunpack.c.l.s4 1966171168
    %v4652 = vunpack.c.0.s8 %v4651
    %v4653 = vlaneseq
    %v4654 = vshrl.u32 %v4653, 7
    %v4655 = vsub.s32 %v4652, %v4654
    %v4656 = vrot.slane %v4628, %v4655
    %v4657 = vcombine.low %v4635, %v4649
    %v4658 = vcombine.low %v4642, %v4656
    %v4663 = vpack.c.bf16 %v4601, %v4601
    %v4664 = vpack.c.bf16 %v4602, %v4602
    %v4665 = vpack.c.bf16 %v4657, %v4657
    %v4666 = vpack.c.bf16 %v4658, %v4658
    %v4668 = vshrl.u32 %v4663, 16
    %v4670 = vshll.u32 %v4663, 16
    %v4672 = vrot.slane %v4670, 1
    %v4673 = vor.u32 %v4668, %v4672
    %v4675 = vshrl.u32 %v4664, 16
    %v4677 = vshll.u32 %v4664, 16
    %v4679 = vrot.slane %v4677, 1
    %v4680 = vor.u32 %v4675, %v4679
    %v4682 = vshrl.u32 %v4665, 16
    %v4684 = vshll.u32 %v4665, 16
    %v4686 = vrot.slane %v4684, 1
    %v4687 = vor.u32 %v4682, %v4686
    %v4689 = vshrl.u32 %v4666, 16
    %v4691 = vshll.u32 %v4666, 16
    %v4693 = vrot.slane %v4691, 1
    %v4694 = vor.u32 %v4689, %v4693
    %v4699 = vrot.slane %v4663, 1
    %v4700 = vrot.slane %v4664, 1
    %v4701 = vrot.slane %v4665, 1
    %v4702 = vrot.slane %v4666, 1
    %v4703 = vcombine.low %v4663, %v4664
    %v4704 = vcombine.low %v4673, %v4680
    %v4705 = vcombine.low %v4699, %v4700
    %v4707 = vunpack.c.l.s4 1966171168
    %v4708 = vunpack.c.0.s8 %v4707
    %v4709 = vlaneseq
    %v4710 = vshrl.u32 %v4709, 7
    %v4711 = vsub.s32 %v4708, %v4710
    %v4712 = vrot.slane %v4703, %v4711
    %v4714 = vunpack.c.l.s4 1966171168
    %v4715 = vunpack.c.0.s8 %v4714
    %v4716 = vlaneseq
    %v4717 = vshrl.u32 %v4716, 7
    %v4718 = vsub.s32 %v4715, %v4717
    %v4719 = vrot.slane %v4704, %v4718
    %v4721 = vunpack.c.l.s4 1966171168
    %v4722 = vunpack.c.0.s8 %v4721
    %v4723 = vlaneseq
    %v4724 = vshrl.u32 %v4723, 7
    %v4725 = vsub.s32 %v4722, %v4724
    %v4726 = vrot.slane %v4705, %v4725
    %v4727 = vcombine.low %v4712, %v4719
    %v4728 = vcombine.high %v4712, %v4719
    %v4729 = vcombine.high %v4726, %v4726
    %v4731 = vunpack.c.l.s4 1966171168
    %v4732 = vunpack.c.0.s8 %v4731
    %v4733 = vlaneseq
    %v4734 = vshrl.u32 %v4733, 7
    %v4735 = vsub.s32 %v4732, %v4734
    %v4736 = vrot.slane %v4727, %v4735
    %v4738 = vunpack.c.l.s4 1966171168
    %v4739 = vunpack.c.0.s8 %v4738
    %v4740 = vlaneseq
    %v4741 = vshrl.u32 %v4740, 7
    %v4742 = vsub.s32 %v4739, %v4741
    %v4743 = vrot.slane %v4728, %v4742
    %v4745 = vunpack.c.l.s4 1966171168
    %v4746 = vunpack.c.0.s8 %v4745
    %v4747 = vlaneseq
    %v4748 = vshrl.u32 %v4747, 7
    %v4749 = vsub.s32 %v4746, %v4748
    %v4750 = vrot.slane %v4726, %v4749
    %v4752 = vunpack.c.l.s4 1966171168
    %v4753 = vunpack.c.0.s8 %v4752
    %v4754 = vlaneseq
    %v4755 = vshrl.u32 %v4754, 7
    %v4756 = vsub.s32 %v4753, %v4755
    %v4757 = vrot.slane %v4729, %v4756
    %v4758 = vcombine.low %v4736, %v4750
    %v4759 = vcombine.low %v4743, %v4757
    %v4760 = vcombine.low %v4665, %v4666
    %v4761 = vcombine.low %v4687, %v4694
    %v4762 = vcombine.low %v4701, %v4702
    %v4764 = vunpack.c.l.s4 1966171168
    %v4765 = vunpack.c.0.s8 %v4764
    %v4766 = vlaneseq
    %v4767 = vshrl.u32 %v4766, 7
    %v4768 = vsub.s32 %v4765, %v4767
    %v4769 = vrot.slane %v4760, %v4768
    %v4771 = vunpack.c.l.s4 1966171168
    %v4772 = vunpack.c.0.s8 %v4771
    %v4773 = vlaneseq
    %v4774 = vshrl.u32 %v4773, 7
    %v4775 = vsub.s32 %v4772, %v4774
    %v4776 = vrot.slane %v4761, %v4775
    %v4778 = vunpack.c.l.s4 1966171168
    %v4779 = vunpack.c.0.s8 %v4778
    %v4780 = vlaneseq
    %v4781 = vshrl.u32 %v4780, 7
    %v4782 = vsub.s32 %v4779, %v4781
    %v4783 = vrot.slane %v4762, %v4782
    %v4784 = vcombine.low %v4769, %v4776
    %v4785 = vcombine.high %v4769, %v4776
    %v4786 = vcombine.high %v4783, %v4783
    %v4788 = vunpack.c.l.s4 1966171168
    %v4789 = vunpack.c.0.s8 %v4788
    %v4790 = vlaneseq
    %v4791 = vshrl.u32 %v4790, 7
    %v4792 = vsub.s32 %v4789, %v4791
    %v4793 = vrot.slane %v4784, %v4792
    %v4795 = vunpack.c.l.s4 1966171168
    %v4796 = vunpack.c.0.s8 %v4795
    %v4797 = vlaneseq
    %v4798 = vshrl.u32 %v4797, 7
    %v4799 = vsub.s32 %v4796, %v4798
    %v4800 = vrot.slane %v4785, %v4799
    %v4802 = vunpack.c.l.s4 1966171168
    %v4803 = vunpack.c.0.s8 %v4802
    %v4804 = vlaneseq
    %v4805 = vshrl.u32 %v4804, 7
    %v4806 = vsub.s32 %v4803, %v4805
    %v4807 = vrot.slane %v4783, %v4806
    %v4809 = vunpack.c.l.s4 1966171168
    %v4810 = vunpack.c.0.s8 %v4809
    %v4811 = vlaneseq
    %v4812 = vshrl.u32 %v4811, 7
    %v4813 = vsub.s32 %v4810, %v4812
    %v4814 = vrot.slane %v4786, %v4813
    %v4815 = vcombine.low %v4793, %v4807
    %v4816 = vcombine.low %v4800, %v4814
    %v4817 = vunpack.i.l.s16 %v4758
    %v4818 = vunpack.i.h.s16 %v4758
    %v4819 = vunpack.i.l.s16 %v4759
    %v4820 = vunpack.i.l.s16 %v4815
    %v4821 = vunpack.i.h.s16 %v4815
    %v4822 = vunpack.i.l.s16 %v4816
    %v4823 = vld [vmem:[%s11] sm:$0xf]
    %v4824 = vld [vmem:[%s11 + $0x4] sm:$0xf]
    %v4825 = vld [vmem:[%s11 + $0x8] sm:$0xf]
    %v4826 = vld [vmem:[%s11 + $0xc] sm:$0xf]
    %v4827 = vld [vmem:[%s11 + $0x10] sm:$0xf]
    %v4828 = vld [vmem:[%s11 + $0x14] sm:$0xf]
    %v4829 = vld [vmem:[%s11 + $0x18] sm:$0xf]
    %v4830 = vld [vmem:[%s11 + $0x1c] sm:$0xf]
    %v4831 = vld [vmem:[%s11 + $0x20] sm:$0xf]
    %v4832 = vld [vmem:[%s11 + $0x24] sm:$0xf]
    %v4833 = vld [vmem:[%s11 + $0x28] sm:$0xf]
    %v4834 = vld [vmem:[%s11 + $0x2c] sm:$0xf]
    %v4835 = vld [vmem:[%s11 + $0x30] sm:$0xf]
    %v4836 = vld [vmem:[%s11 + $0x34] sm:$0xf]
    %v4837 = vld [vmem:[%s11 + $0x38] sm:$0xf]
    %v4838 = vld [vmem:[%s11 + $0x3c] sm:$0xf]
    %v4839 = vld [vmem:[%s11 + $0x40] sm:$0xf]
    %v4840 = vld [vmem:[%s11 + $0x44] sm:$0xf]
    %v4841 = vld [vmem:[%s11 + $0x48] sm:$0xf]
    %v4842 = vld [vmem:[%s11 + $0x4c] sm:$0xf]
    %v4843 = vld [vmem:[%s11 + $0x50] sm:$0xf]
    %v4844 = vld [vmem:[%s11 + $0x54] sm:$0xf]
    %v4845 = vld [vmem:[%s11 + $0x58] sm:$0xf]
    %v4846 = vld [vmem:[%s11 + $0x5c] sm:$0xf]
    %v4847 = vld [vmem:[%s11 + $0x60] sm:$0xf]
    %v4848 = vld [vmem:[%s11 + $0x64] sm:$0xf]
    %v4849 = vld [vmem:[%s11 + $0x68] sm:$0xf]
    %v4850 = vld [vmem:[%s11 + $0x6c] sm:$0xf]
    %v4851 = vld [vmem:[%s11 + $0x70] sm:$0xf]
    %v4852 = vld [vmem:[%s11 + $0x74] sm:$0xf]
    %v4853 = vld [vmem:[%s11 + $0x78] sm:$0xf]
    %v4854 = vld [vmem:[%s11 + $0x7c] sm:$0xf]
    %v4855 = vld [vmem:[%s11 + $0x80] sm:$0xf]
    %v4856 = vld [vmem:[%s11 + $0x84] sm:$0xf]
    %v4857 = vld [vmem:[%s11 + $0x88] sm:$0xf]
    %v4858 = vld [vmem:[%s11 + $0x8c] sm:$0xf]
    %v4859 = vld [vmem:[%s11 + $0x90] sm:$0xf]
    %v4860 = vld [vmem:[%s11 + $0x94] sm:$0xf]
    %v4861 = vld [vmem:[%s11 + $0x98] sm:$0xf]
    %v4862 = vld [vmem:[%s11 + $0x9c] sm:$0xf]
    %v4863 = vld [vmem:[%s11 + $0xa0] sm:$0xf]
    %v4864 = vld [vmem:[%s11 + $0xa4] sm:$0xf]
    %v4865 = vld [vmem:[%s11 + $0xa8] sm:$0xf]
    %v4866 = vld [vmem:[%s11 + $0xac] sm:$0xf]
    %v4867 = vld [vmem:[%s11 + $0xb0] sm:$0xf]
    %v4868 = vld [vmem:[%s11 + $0xb4] sm:$0xf]
    %v4869 = vld [vmem:[%s11 + $0xb8] sm:$0xf]
    %v4870 = vld [vmem:[%s11 + $0xbc] sm:$0xf]
    %v4871 = vld [vmem:[%s11 + $0xc0] sm:$0xf]
    %v4872 = vld [vmem:[%s11 + $0xc4] sm:$0xf]
    %v4873 = vld [vmem:[%s11 + $0xc8] sm:$0xf]
    %v4874 = vld [vmem:[%s11 + $0xcc] sm:$0xf]
    %v4875 = vld [vmem:[%s11 + $0xd0] sm:$0xf]
    %v4876 = vld [vmem:[%s11 + $0xd4] sm:$0xf]
    %v4877 = vld [vmem:[%s11 + $0xd8] sm:$0xf]
    %v4878 = vld [vmem:[%s11 + $0xdc] sm:$0xf]
    %v4879 = vld [vmem:[%s11 + $0xe0] sm:$0xf]
    %v4880 = vld [vmem:[%s11 + $0xe4] sm:$0xf]
    %v4881 = vld [vmem:[%s11 + $0xe8] sm:$0xf]
    %v4882 = vld [vmem:[%s11 + $0xec] sm:$0xf]
    %v4883 = vld [vmem:[%s11 + $0xf0] sm:$0xf]
    %v4884 = vld [vmem:[%s11 + $0xf4] sm:$0xf]
    %v4885 = vld [vmem:[%s11 + $0xf8] sm:$0xf]
    %v4886 = vld [vmem:[%s11 + $0xfc] sm:$0xf]
    %v4887 = vld [vmem:[%s11 + $0x100] sm:$0xf]
    %v4888 = vld [vmem:[%s11 + $0x104] sm:$0xf]
    %v4889 = vld [vmem:[%s11 + $0x108] sm:$0xf]
    %v4890 = vld [vmem:[%s11 + $0x10c] sm:$0xf]
    %v4891 = vld [vmem:[%s11 + $0x110] sm:$0xf]
    %v4892 = vld [vmem:[%s11 + $0x114] sm:$0xf]
    %v4893 = vld [vmem:[%s11 + $0x118] sm:$0xf]
    %v4894 = vld [vmem:[%s11 + $0x11c] sm:$0xf]
    %v4895 = vld [vmem:[%s11 + $0x120] sm:$0xf]
    %v4896 = vld [vmem:[%s11 + $0x124] sm:$0xf]
    %v4897 = vld [vmem:[%s11 + $0x128] sm:$0xf]
    %v4898 = vld [vmem:[%s11 + $0x12c] sm:$0xf]
    %v4899 = vld [vmem:[%s11 + $0x130] sm:$0xf]
    %v4900 = vld [vmem:[%s11 + $0x134] sm:$0xf]
    %v4901 = vld [vmem:[%s11 + $0x138] sm:$0xf]
    %v4902 = vld [vmem:[%s11 + $0x13c] sm:$0xf]
    %v4903 = vld [vmem:[%s11 + $0x140] sm:$0xf]
    %v4904 = vld [vmem:[%s11 + $0x144] sm:$0xf]
    %v4905 = vld [vmem:[%s11 + $0x148] sm:$0xf]
    %v4906 = vld [vmem:[%s11 + $0x14c] sm:$0xf]
    %v4907 = vld [vmem:[%s11 + $0x150] sm:$0xf]
    %v4908 = vld [vmem:[%s11 + $0x154] sm:$0xf]
    %v4909 = vld [vmem:[%s11 + $0x158] sm:$0xf]
    %v4910 = vld [vmem:[%s11 + $0x15c] sm:$0xf]
    %v4911 = vld [vmem:[%s11 + $0x160] sm:$0xf]
    %v4912 = vld [vmem:[%s11 + $0x164] sm:$0xf]
    %v4913 = vld [vmem:[%s11 + $0x168] sm:$0xf]
    %v4914 = vld [vmem:[%s11 + $0x16c] sm:$0xf]
    %v4915 = vld [vmem:[%s11 + $0x170] sm:$0xf]
    %v4916 = vld [vmem:[%s11 + $0x174] sm:$0xf]
    %v4917 = vld [vmem:[%s11 + $0x178] sm:$0xf]
    %v4918 = vld [vmem:[%s11 + $0x17c] sm:$0xf]
    %v4919 = vpack.i.b16 %v4818, %v4817
    %v4920 = vpack.i.b16 %v4820, %v4819
    %v4921 = vpack.i.b16 %v4822, %v4821
    %v4922 = vcombine.low %v4919, %v4920
    %v4923 = vcombine.high %v4919, %v4920
    %v4924 = vcombine.high %v4921, %v4921
    %v4926 = vunpack.c.l.s4 1966171168
    %v4927 = vunpack.c.0.s8 %v4926
    %v4928 = vlaneseq
    %v4929 = vshrl.u32 %v4928, 7
    %v4930 = vsub.s32 %v4927, %v4929
    %v4931 = vrot.slane %v4922, %v4930
    %v4933 = vunpack.c.l.s4 1966171168
    %v4934 = vunpack.c.0.s8 %v4933
    %v4935 = vlaneseq
    %v4936 = vshrl.u32 %v4935, 7
    %v4937 = vsub.s32 %v4934, %v4936
    %v4938 = vrot.slane %v4923, %v4937
    %v4940 = vunpack.c.l.s4 1966171168
    %v4941 = vunpack.c.0.s8 %v4940
    %v4942 = vlaneseq
    %v4943 = vshrl.u32 %v4942, 7
    %v4944 = vsub.s32 %v4941, %v4943
    %v4945 = vrot.slane %v4921, %v4944
    %v4947 = vunpack.c.l.s4 1966171168
    %v4948 = vunpack.c.0.s8 %v4947
    %v4949 = vlaneseq
    %v4950 = vshrl.u32 %v4949, 7
    %v4951 = vsub.s32 %v4948, %v4950
    %v4952 = vrot.slane %v4924, %v4951
    %v4953 = vcombine.low %v4931, %v4945
    %v4954 = vcombine.high %v4931, %v4945
    %v4955 = vcombine.low %v4938, %v4952
    %v4956 = vcombine.high %v4938, %v4952
    %v4958 = vunpack.c.l.s4 1966171168
    %v4959 = vunpack.c.0.s8 %v4958
    %v4960 = vlaneseq
    %v4961 = vshrl.u32 %v4960, 7
    %v4962 = vsub.s32 %v4959, %v4961
    %v4963 = vrot.slane %v4953, %v4962
    %v4965 = vunpack.c.l.s4 1966171168
    %v4966 = vunpack.c.0.s8 %v4965
    %v4967 = vlaneseq
    %v4968 = vshrl.u32 %v4967, 7
    %v4969 = vsub.s32 %v4966, %v4968
    %v4970 = vrot.slane %v4955, %v4969
    %v4972 = vunpack.c.l.s4 1966171168
    %v4973 = vunpack.c.0.s8 %v4972
    %v4974 = vlaneseq
    %v4975 = vshrl.u32 %v4974, 7
    %v4976 = vsub.s32 %v4973, %v4975
    %v4977 = vrot.slane %v4954, %v4976
    %v4979 = vunpack.c.l.s4 1966171168
    %v4980 = vunpack.c.0.s8 %v4979
    %v4981 = vlaneseq
    %v4982 = vshrl.u32 %v4981, 7
    %v4983 = vsub.s32 %v4980, %v4982
    %v4984 = vrot.slane %v4956, %v4983
    %v4985 = vcombine.high %v4963, %v4963
    %v4986 = vcombine.high %v4977, %v4977
    %v5089 = vunpack.c.l.b16 %v4823
    %v5090 = vunpack.c.l.b16 %v4824
    %v5091 = vunpack.c.l.b16 %v4825
    %v5092 = vunpack.c.l.b16 %v4826
    %v5093 = vunpack.c.l.b16 %v4827
    %v5094 = vunpack.c.l.b16 %v4828
    %v5095 = vunpack.c.l.b16 %v4829
    %v5096 = vunpack.c.l.b16 %v4830
    %v5097 = vunpack.c.l.b16 %v4831
    %v5098 = vunpack.c.l.b16 %v4832
    %v5099 = vunpack.c.l.b16 %v4833
    %v5100 = vunpack.c.l.b16 %v4834
    %v5101 = vunpack.c.l.b16 %v4835
    %v5102 = vunpack.c.l.b16 %v4836
    %v5103 = vunpack.c.l.b16 %v4837
    %v5104 = vunpack.c.l.b16 %v4838
    %v5105 = vunpack.c.l.b16 %v4839
    %v5106 = vunpack.c.l.b16 %v4840
    %v5107 = vunpack.c.l.b16 %v4841
    %v5108 = vunpack.c.l.b16 %v4842
    %v5109 = vunpack.c.l.b16 %v4843
    %v5110 = vunpack.c.l.b16 %v4844
    %v5111 = vunpack.c.l.b16 %v4845
    %v5112 = vunpack.c.l.b16 %v4846
    %v5113 = vunpack.c.l.b16 %v4847
    %v5114 = vunpack.c.l.b16 %v4848
    %v5115 = vunpack.c.l.b16 %v4849
    %v5116 = vunpack.c.l.b16 %v4850
    %v5117 = vunpack.c.l.b16 %v4851
    %v5118 = vunpack.c.l.b16 %v4852
    %v5119 = vunpack.c.l.b16 %v4853
    %v5120 = vunpack.c.l.b16 %v4854
    %v5121 = vunpack.c.l.b16 %v4855
    %v5122 = vunpack.c.l.b16 %v4856
    %v5123 = vunpack.c.l.b16 %v4857
    %v5124 = vunpack.c.l.b16 %v4858
    %v5125 = vunpack.c.l.b16 %v4859
    %v5126 = vunpack.c.l.b16 %v4860
    %v5127 = vunpack.c.l.b16 %v4861
    %v5128 = vunpack.c.l.b16 %v4862
    %v5129 = vunpack.c.l.b16 %v4863
    %v5130 = vunpack.c.l.b16 %v4864
    %v5131 = vunpack.c.l.b16 %v4865
    %v5132 = vunpack.c.l.b16 %v4866
    %v5133 = vunpack.c.l.b16 %v4867
    %v5134 = vunpack.c.l.b16 %v4868
    %v5135 = vunpack.c.l.b16 %v4869
    %v5136 = vunpack.c.l.b16 %v4870
    %v5137 = vunpack.c.l.b16 %v4871
    %v5138 = vunpack.c.l.b16 %v4872
    %v5139 = vunpack.c.l.b16 %v4873
    %v5140 = vunpack.c.l.b16 %v4874
    %v5141 = vunpack.c.l.b16 %v4875
    %v5142 = vunpack.c.l.b16 %v4876
    %v5143 = vunpack.c.l.b16 %v4877
    %v5144 = vunpack.c.l.b16 %v4878
    %v5145 = vunpack.c.l.b16 %v4879
    %v5146 = vunpack.c.l.b16 %v4880
    %v5147 = vunpack.c.l.b16 %v4881
    %v5148 = vunpack.c.l.b16 %v4882
    %v5149 = vunpack.c.l.b16 %v4883
    %v5150 = vunpack.c.l.b16 %v4884
    %v5151 = vunpack.c.l.b16 %v4885
    %v5152 = vunpack.c.l.b16 %v4886
    %v5153 = vunpack.c.l.b16 %v4887
    %v5154 = vunpack.c.l.b16 %v4888
    %v5155 = vunpack.c.l.b16 %v4889
    %v5156 = vunpack.c.l.b16 %v4890
    %v5157 = vunpack.c.l.b16 %v4891
    %v5158 = vunpack.c.l.b16 %v4892
    %v5159 = vunpack.c.l.b16 %v4893
    %v5160 = vunpack.c.l.b16 %v4894
    %v5161 = vunpack.c.l.b16 %v4895
    %v5162 = vunpack.c.l.b16 %v4896
    %v5163 = vunpack.c.l.b16 %v4897
    %v5164 = vunpack.c.l.b16 %v4898
    %v5165 = vunpack.c.l.b16 %v4899
    %v5166 = vunpack.c.l.b16 %v4900
    %v5167 = vunpack.c.l.b16 %v4901
    %v5168 = vunpack.c.l.b16 %v4902
    %v5169 = vunpack.c.l.b16 %v4903
    %v5170 = vunpack.c.l.b16 %v4904
    %v5171 = vunpack.c.l.b16 %v4905
    %v5172 = vunpack.c.l.b16 %v4906
    %v5173 = vunpack.c.l.b16 %v4907
    %v5174 = vunpack.c.l.b16 %v4908
    %v5175 = vunpack.c.l.b16 %v4909
    %v5176 = vunpack.c.l.b16 %v4910
    %v5177 = vunpack.c.l.b16 %v4911
    %v5178 = vunpack.c.l.b16 %v4912
    %v5179 = vunpack.c.l.b16 %v4913
    %v5180 = vunpack.c.l.b16 %v4914
    %v5181 = vunpack.c.l.b16 %v4915
    %v5182 = vunpack.c.l.b16 %v4916
    %v5183 = vunpack.c.l.b16 %v4917
    %v5184 = vunpack.c.l.b16 %v4918
    %v5185 = vpack.c.b16 %v5090, %v5089
    %v5186 = vpack.c.b16 %v5092, %v5091
    %v5187 = vpack.c.b16 %v5094, %v5093
    %v5188 = vpack.c.b16 %v5096, %v5095
    %v5189 = vpack.c.b16 %v5098, %v5097
    %v5190 = vpack.c.b16 %v5100, %v5099
    %v5191 = vpack.c.b16 %v5102, %v5101
    %v5192 = vpack.c.b16 %v5104, %v5103
    %v5193 = vpack.c.b16 %v5106, %v5105
    %v5194 = vpack.c.b16 %v5108, %v5107
    %v5195 = vpack.c.b16 %v5110, %v5109
    %v5196 = vpack.c.b16 %v5112, %v5111
    %v5197 = vpack.c.b16 %v5114, %v5113
    %v5198 = vpack.c.b16 %v5116, %v5115
    %v5199 = vpack.c.b16 %v5118, %v5117
    %v5200 = vpack.c.b16 %v5120, %v5119
    %v5201 = vpack.c.b16 %v5122, %v5121
    %v5202 = vpack.c.b16 %v5124, %v5123
    %v5203 = vpack.c.b16 %v5126, %v5125
    %v5204 = vpack.c.b16 %v5128, %v5127
    %v5205 = vpack.c.b16 %v5130, %v5129
    %v5206 = vpack.c.b16 %v5132, %v5131
    %v5207 = vpack.c.b16 %v5134, %v5133
    %v5208 = vpack.c.b16 %v5136, %v5135
    %v5209 = vpack.c.b16 %v5138, %v5137
    %v5210 = vpack.c.b16 %v5140, %v5139
    %v5211 = vpack.c.b16 %v5142, %v5141
    %v5212 = vpack.c.b16 %v5144, %v5143
    %v5213 = vpack.c.b16 %v5146, %v5145
    %v5214 = vpack.c.b16 %v5148, %v5147
    %v5215 = vpack.c.b16 %v5150, %v5149
    %v5216 = vpack.c.b16 %v5152, %v5151
    %v5217 = vpack.c.b16 %v5154, %v5153
    %v5218 = vpack.c.b16 %v5156, %v5155
    %v5219 = vpack.c.b16 %v5158, %v5157
    %v5220 = vpack.c.b16 %v5160, %v5159
    %v5221 = vpack.c.b16 %v5162, %v5161
    %v5222 = vpack.c.b16 %v5164, %v5163
    %v5223 = vpack.c.b16 %v5166, %v5165
    %v5224 = vpack.c.b16 %v5168, %v5167
    %v5225 = vpack.c.b16 %v5170, %v5169
    %v5226 = vpack.c.b16 %v5172, %v5171
    %v5227 = vpack.c.b16 %v5174, %v5173
    %v5228 = vpack.c.b16 %v5176, %v5175
    %v5229 = vpack.c.b16 %v5178, %v5177
    %v5230 = vpack.c.b16 %v5180, %v5179
    %v5231 = vpack.c.b16 %v5182, %v5181
    %v5232 = vpack.c.b16 %v5184, %v5183
    %5281 = vmatprep.subr.bf16.mxu0 0
    %5282 = vmatpush1.bf16.msra.mxu0 %v5185
    %5283 = vmatprep.subr.bf16.mxu0 0
    %5284 = vmatpush1.bf16.msra.mxu0 %v5186
    %5285 = vmatprep.subr.bf16.mxu0 0
    %5286 = vmatpush1.bf16.msra.mxu0 %v5187
    %5287 = vmatprep.subr.bf16.mxu0 0
    %5288 = vmatpush1.bf16.msra.mxu0 %v5188
    %5289 = vmatprep.subr.bf16.mxu0 0
    %5290 = vmatpush1.bf16.msra.mxu0 %v5189
    %5291 = vmatprep.subr.bf16.mxu0 0
    %5292 = vmatpush1.bf16.msra.mxu0 %v5190
    %5293 = vmatprep.subr.bf16.mxu0 0
    %5294 = vmatpush1.bf16.msra.mxu0 %v5191
    %5295 = vmatprep.subr.bf16.mxu0 0
    %5296 = vmatpush1.bf16.msra.mxu0 %v5192
    %5297 = vmatprep.subr.bf16.mxu0 0
    %5298 = vmatpush1.bf16.msra.mxu0 %v5193
    %5299 = vmatprep.subr.bf16.mxu0 0
    %5300 = vmatpush1.bf16.msra.mxu0 %v5194
    %5301 = vmatprep.subr.bf16.mxu0 0
    %5302 = vmatpush1.bf16.msra.mxu0 %v5195
    %5303 = vmatprep.subr.bf16.mxu0 0
    %5304 = vmatpush1.bf16.msra.mxu0 %v5196
    %5305 = vmatprep.subr.bf16.mxu0 0
    %5306 = vmatpush1.bf16.msra.mxu0 %v5197
    %5307 = vmatprep.subr.bf16.mxu0 0
    %5308 = vmatpush1.bf16.msra.mxu0 %v5198
    %5309 = vmatprep.subr.bf16.mxu0 0
    %5310 = vmatpush1.bf16.msra.mxu0 %v5199
    %5311 = vmatprep.subr.bf16.mxu0 0
    %5312 = vmatpush1.bf16.msra.mxu0 %v5200
    %5313 = vmatprep.mubr.bf16.mxu0 %v4977
    %5314 = vmatmul.mubr.bf16.gmra.mrb[0].mxu0 %v4963
    %v5315 = vpop.f32.mrb[0].mxu0
    %v5316 = vadd.f32 0.0, %v5315
    %v5317 = vpop.f32.mrb[0].mxu0
    %v5318 = vpop.f32.mrb[0].mxu0
    %v5319 = vpop.f32.mrb[0].mxu0
    %5320 = vdwg.mxu0
    %5321 = vmatprep.subr.bf16.mxu0 0
    %5322 = vmatpush1.bf16.msra.mxu0 %v5201
    %5323 = vmatprep.subr.bf16.mxu0 0
    %5324 = vmatpush1.bf16.msra.mxu0 %v5202
    %5325 = vmatprep.subr.bf16.mxu0 0
    %5326 = vmatpush1.bf16.msra.mxu0 %v5203
    %5327 = vmatprep.subr.bf16.mxu0 0
    %5328 = vmatpush1.bf16.msra.mxu0 %v5204
    %5329 = vmatprep.subr.bf16.mxu0 0
    %5330 = vmatpush1.bf16.msra.mxu0 %v5205
    %5331 = vmatprep.subr.bf16.mxu0 0
    %5332 = vmatpush1.bf16.msra.mxu0 %v5206
    %5333 = vmatprep.subr.bf16.mxu0 0
    %5334 = vmatpush1.bf16.msra.mxu0 %v5207
    %5335 = vmatprep.subr.bf16.mxu0 0
    %5336 = vmatpush1.bf16.msra.mxu0 %v5208
    %5337 = vmatprep.subr.bf16.mxu0 0
    %5338 = vmatpush1.bf16.msra.mxu0 %v5209
    %5339 = vmatprep.subr.bf16.mxu0 0
    %5340 = vmatpush1.bf16.msra.mxu0 %v5210
    %5341 = vmatprep.subr.bf16.mxu0 0
    %5342 = vmatpush1.bf16.msra.mxu0 %v5211
    %5343 = vmatprep.subr.bf16.mxu0 0
    %5344 = vmatpush1.bf16.msra.mxu0 %v5212
    %5345 = vmatprep.subr.bf16.mxu0 0
    %5346 = vmatpush1.bf16.msra.mxu0 %v5213
    %5347 = vmatprep.subr.bf16.mxu0 0
    %5348 = vmatpush1.bf16.msra.mxu0 %v5214
    %5349 = vmatprep.subr.bf16.mxu0 0
    %5350 = vmatpush1.bf16.msra.mxu0 %v5215
    %5351 = vmatprep.subr.bf16.mxu0 0
    %5352 = vmatpush1.bf16.msra.mxu0 %v5216
    %5353 = vmatprep.mubr.bf16.mxu0 %v4986
    %5354 = vmatmul.mubr.bf16.gmra.mrb[0].mxu0 %v4985
    %v5355 = vpop.f32.mrb[0].mxu0
    %v5356 = vadd.f32 %v5316, %v5355
    %v5357 = vpop.f32.mrb[0].mxu0
    %v5358 = vpop.f32.mrb[0].mxu0
    %v5359 = vpop.f32.mrb[0].mxu0
    %5360 = vdwg.mxu0
    %5361 = vmatprep.subr.bf16.mxu0 0
    %5362 = vmatpush1.bf16.msra.mxu0 %v5217
    %5363 = vmatprep.subr.bf16.mxu0 0
    %5364 = vmatpush1.bf16.msra.mxu0 %v5218
    %5365 = vmatprep.subr.bf16.mxu0 0
    %5366 = vmatpush1.bf16.msra.mxu0 %v5219
    %5367 = vmatprep.subr.bf16.mxu0 0
    %5368 = vmatpush1.bf16.msra.mxu0 %v5220
    %5369 = vmatprep.subr.bf16.mxu0 0
    %5370 = vmatpush1.bf16.msra.mxu0 %v5221
    %5371 = vmatprep.subr.bf16.mxu0 0
    %5372 = vmatpush1.bf16.msra.mxu0 %v5222
    %5373 = vmatprep.subr.bf16.mxu0 0
    %5374 = vmatpush1.bf16.msra.mxu0 %v5223
    %5375 = vmatprep.subr.bf16.mxu0 0
    %5376 = vmatpush1.bf16.msra.mxu0 %v5224
    %5377 = vmatprep.subr.bf16.mxu0 0
    %5378 = vmatpush1.bf16.msra.mxu0 %v5225
    %5379 = vmatprep.subr.bf16.mxu0 0
    %5380 = vmatpush1.bf16.msra.mxu0 %v5226
    %5381 = vmatprep.subr.bf16.mxu0 0
    %5382 = vmatpush1.bf16.msra.mxu0 %v5227
    %5383 = vmatprep.subr.bf16.mxu0 0
    %5384 = vmatpush1.bf16.msra.mxu0 %v5228
    %5385 = vmatprep.subr.bf16.mxu0 0
    %5386 = vmatpush1.bf16.msra.mxu0 %v5229
    %5387 = vmatprep.subr.bf16.mxu0 0
    %5388 = vmatpush1.bf16.msra.mxu0 %v5230
    %5389 = vmatprep.subr.bf16.mxu0 0
    %5390 = vmatpush1.bf16.msra.mxu0 %v5231
    %5391 = vmatprep.subr.bf16.mxu0 0
    %5392 = vmatpush1.bf16.msra.mxu0 %v5232
    %5393 = vmatprep.mubr.bf16.mxu0 %v4984
    %5394 = vmatmul.mubr.bf16.gmra.mrb[0].mxu0 %v4970
    %v5395 = vpop.f32.mrb[0].mxu0
    %v5396 = vadd.f32 %v5356, %v5395
    %v5397 = vpop.f32.mrb[0].mxu0
    %v5398 = vpop.f32.mrb[0].mxu0
    %v5399 = vpop.f32.mrb[0].mxu0
    %5400 = vdwg.mxu0
    %v5402 = vcombine.high %v5396, %v5396
    %v5404 = vunpack.c.l.s4 1966171168
    %v5405 = vunpack.c.0.s8 %v5404
    %v5406 = vlaneseq
    %v5407 = vshrl.u32 %v5406, 7
    %v5408 = vsub.s32 %v5405, %v5407
    %v5409 = vrot.slane %v5396, %v5408
    %v5411 = vunpack.c.l.s4 1966171168
    %v5412 = vunpack.c.0.s8 %v5411
    %v5413 = vlaneseq
    %v5414 = vshrl.u32 %v5413, 7
    %v5415 = vsub.s32 %v5412, %v5414
    %v5416 = vrot.slane %v5402, %v5415
    %v5417 = vcombine.high %v5409, %v5409
    %v5418 = vcombine.high %v5416, %v5416
    %v5420 = vunpack.c.l.s4 1966171168
    %v5421 = vunpack.c.0.s8 %v5420
    %v5422 = vlaneseq
    %v5423 = vshrl.u32 %v5422, 7
    %v5424 = vsub.s32 %v5421, %v5423
    %v5425 = vrot.slane %v5409, %v5424
    %v5427 = vunpack.c.l.s4 1966171168
    %v5428 = vunpack.c.0.s8 %v5427
    %v5429 = vlaneseq
    %v5430 = vshrl.u32 %v5429, 7
    %v5431 = vsub.s32 %v5428, %v5430
    %v5432 = vrot.slane %v5416, %v5431
    %v5434 = vunpack.c.l.s4 1966171168
    %v5435 = vunpack.c.0.s8 %v5434
    %v5436 = vlaneseq
    %v5437 = vshrl.u32 %v5436, 7
    %v5438 = vsub.s32 %v5435, %v5437
    %v5439 = vrot.slane %v5417, %v5438
    %v5441 = vunpack.c.l.s4 1966171168
    %v5442 = vunpack.c.0.s8 %v5441
    %v5443 = vlaneseq
    %v5444 = vshrl.u32 %v5443, 7
    %v5445 = vsub.s32 %v5442, %v5444
    %v5446 = vrot.slane %v5418, %v5445
    %v5447 = vcombine.high %v5425, %v5425
    %v5448 = vcombine.high %v5439, %v5439
    %v5455 = vld [vmem:[%s12] sm:$0x1]
    %v5457 = vlaneseq
    %v5458 = vshrl.u32 %v5457, 7
    %v5459 = vsub.s32 0, %v5458
    %v5460 = vrot.slane %v5455, %v5459
    %v5462 = vunpack.c.l.s4 1966171168
    %v5463 = vunpack.c.0.s8 %v5462
    %v5464 = vlaneseq
    %v5465 = vshrl.u32 %v5464, 7
    %v5466 = vsub.s32 %v5463, %v5465
    %v5467 = vrot.slane %v5460, %v5466
    %v5468 = vcombine.high %v5467, %v5467
    %v5470 = vunpack.c.l.s4 1966171168
    %v5471 = vunpack.c.0.s8 %v5470
    %v5472 = vlaneseq
    %v5473 = vshrl.u32 %v5472, 7
    %v5474 = vsub.s32 %v5471, %v5473
    %v5475 = vrot.slane %v5467, %v5474
    %v5477 = vunpack.c.l.s4 1966171168
    %v5478 = vunpack.c.0.s8 %v5477
    %v5479 = vlaneseq
    %v5480 = vshrl.u32 %v5479, 7
    %v5481 = vsub.s32 %v5478, %v5480
    %v5482 = vrot.slane %v5468, %v5481
    %v5483 = vcombine.high %v5475, %v5475
    %v5487 = vmul.f32 %v5425, %v5475
    %v5488 = vmul.f32 %v5439, %v5482
    %v5489 = vmul.f32 %v5447, %v5483
    %v5490 = vmul.f32 %v5448, %v5475
    %v5491 = vmul.f32 %v5432, %v5482
    %v5492 = vmul.f32 %v5446, %v5483
    %v5493 = vld [vmem:[%s13] sm:$0x1]
    %v5495 = vlaneseq
    %v5496 = vshrl.u32 %v5495, 7
    %v5497 = vsub.s32 0, %v5496
    %v5498 = vrot.slane %v5493, %v5497
    %v5500 = vunpack.c.l.s4 1966171168
    %v5501 = vunpack.c.0.s8 %v5500
    %v5502 = vlaneseq
    %v5503 = vshrl.u32 %v5502, 7
    %v5504 = vsub.s32 %v5501, %v5503
    %v5505 = vrot.slane %v5498, %v5504
    %v5506 = vcombine.high %v5505, %v5505
    %v5508 = vunpack.c.l.s4 1966171168
    %v5509 = vunpack.c.0.s8 %v5508
    %v5510 = vlaneseq
    %v5511 = vshrl.u32 %v5510, 7
    %v5512 = vsub.s32 %v5509, %v5511
    %v5513 = vrot.slane %v5505, %v5512
    %v5515 = vunpack.c.l.s4 1966171168
    %v5516 = vunpack.c.0.s8 %v5515
    %v5517 = vlaneseq
    %v5518 = vshrl.u32 %v5517, 7
    %v5519 = vsub.s32 %v5516, %v5518
    %v5520 = vrot.slane %v5506, %v5519
    %v5521 = vcombine.high %v5513, %v5513
    %v5525 = vadd.f32 %v5487, %v5513
    %v5526 = vadd.f32 %v5488, %v5520
    %v5527 = vadd.f32 %v5489, %v5521
    %v5528 = vadd.f32 %v5490, %v5513
    %v5529 = vadd.f32 %v5491, %v5520
    %v5530 = vadd.f32 %v5492, %v5521
    %v5531 = vmax.f32 %v5525, 0.0
    %v5532 = vmax.f32 %v5526, 0.0
    %v5533 = vmax.f32 %v5527, 0.0
    %v5534 = vmax.f32 %v5528, 0.0
    %v5535 = vmax.f32 %v5529, 0.0
    %v5536 = vmax.f32 %v5530, 0.0
    %v5543 = vcombine.low %v5531, %v5532
    %v5545 = vunpack.c.l.s4 1966171168
    %v5546 = vunpack.c.0.s8 %v5545
    %v5547 = vlaneseq
    %v5548 = vshrl.u32 %v5547, 7
    %v5549 = vsub.s32 %v5546, %v5548
    %v5550 = vrot.slane %v5543, %v5549
    %v5552 = vunpack.c.l.s4 1966171168
    %v5553 = vunpack.c.0.s8 %v5552
    %v5554 = vlaneseq
    %v5555 = vshrl.u32 %v5554, 7
    %v5556 = vsub.s32 %v5553, %v5555
    %v5557 = vrot.slane %v5533, %v5556
    %v5558 = vcombine.low %v5550, %v5557
    %v5560 = vunpack.c.l.s4 1966171168
    %v5561 = vunpack.c.0.s8 %v5560
    %v5562 = vlaneseq
    %v5563 = vshrl.u32 %v5562, 7
    %v5564 = vsub.s32 %v5561, %v5563
    %v5565 = vrot.slane %v5558, %v5564
    %v5566 = vcombine.low %v5534, %v5535
    %v5568 = vunpack.c.l.s4 1966171168
    %v5569 = vunpack.c.0.s8 %v5568
    %v5570 = vlaneseq
    %v5571 = vshrl.u32 %v5570, 7
    %v5572 = vsub.s32 %v5569, %v5571
    %v5573 = vrot.slane %v5566, %v5572
    %v5575 = vunpack.c.l.s4 1966171168
    %v5576 = vunpack.c.0.s8 %v5575
    %v5577 = vlaneseq
    %v5578 = vshrl.u32 %v5577, 7
    %v5579 = vsub.s32 %v5576, %v5578
    %v5580 = vrot.slane %v5536, %v5579
    %v5581 = vcombine.low %v5573, %v5580
    %v5583 = vunpack.c.l.s4 1966171168
    %v5584 = vunpack.c.0.s8 %v5583
    %v5585 = vlaneseq
    %v5586 = vshrl.u32 %v5585, 7
    %v5587 = vsub.s32 %v5584, %v5586
    %v5588 = vrot.slane %v5581, %v5587
    %vm5591 = vcmask 1042432
    %v5592 = vsel %vm5591, %v5565, 0.0
    %v5593 = vrot.slane %v5592, 4
    %v5594 = vadd.f32 %v5592, %v5593
    %v5595 = vrot.slane %v5594, 2
    %v5596 = vadd.f32 %v5594, %v5595
    %v5597 = vrot.slane %v5596, 1
    %v5598 = vadd.f32 %v5596, %v5597
    %v5599 = vsel %vm5591, %v5588, 0.0
    %v5600 = vrot.slane %v5599, 4
    %v5601 = vadd.f32 %v5599, %v5600
    %v5602 = vrot.slane %v5601, 2
    %v5603 = vadd.f32 %v5601, %v5602
    %v5604 = vrot.slane %v5603, 1
    %v5605 = vadd.f32 %v5603, %v5604
    %v5606 = vrcp.pop 3.0
    %v5607 = vmul.f32 %v5598, %v5606
    %v5608 = vmul.f32 %v5605, %v5606
    %vm5611 = vcmask 1041409
    %v5612 = vsel %vm5611, %v5608, %v5607
    %v5614 = vpack.c.bf16 %v2732, %v2732
    %v5615 = vpack.c.bf16 %v5612, %v5612
    %v5616 = vld [vmem:[%s14] sm:$0xf]
    %v5617 = vld [vmem:[%s14 + $0x4] sm:$0xf]
    %v5618 = vld [vmem:[%s14 + $0x8] sm:$0xf]
    %v5619 = vld [vmem:[%s14 + $0xc] sm:$0xf]
    %v5620 = vld [vmem:[%s14 + $0x10] sm:$0xf]
    %v5621 = vld [vmem:[%s14 + $0x14] sm:$0xf]
    %v5622 = vld [vmem:[%s14 + $0x18] sm:$0xf]
    %v5623 = vld [vmem:[%s14 + $0x1c] sm:$0xf]
    %v5624 = vld [vmem:[%s14 + $0x20] sm:$0xf]
    %v5625 = vld [vmem:[%s14 + $0x24] sm:$0xf]
    %v5626 = vld [vmem:[%s14 + $0x28] sm:$0xf]
    %v5627 = vld [vmem:[%s14 + $0x2c] sm:$0xf]
    %v5628 = vld [vmem:[%s14 + $0x30] sm:$0xf]
    %v5629 = vld [vmem:[%s14 + $0x34] sm:$0xf]
    %v5630 = vld [vmem:[%s14 + $0x38] sm:$0xf]
    %v5631 = vld [vmem:[%s14 + $0x3c] sm:$0xf]
    %v5632 = vld [vmem:[%s14 + $0x40] sm:$0xf]
    %v5633 = vld [vmem:[%s14 + $0x44] sm:$0xf]
    %v5634 = vld [vmem:[%s14 + $0x48] sm:$0xf]
    %v5635 = vld [vmem:[%s14 + $0x4c] sm:$0xf]
    %v5636 = vld [vmem:[%s14 + $0x50] sm:$0xf]
    %v5637 = vld [vmem:[%s14 + $0x54] sm:$0xf]
    %v5638 = vld [vmem:[%s14 + $0x58] sm:$0xf]
    %v5639 = vld [vmem:[%s14 + $0x5c] sm:$0xf]
    %v5640 = vld [vmem:[%s14 + $0x60] sm:$0xf]
    %v5641 = vld [vmem:[%s14 + $0x64] sm:$0xf]
    %v5642 = vld [vmem:[%s14 + $0x68] sm:$0xf]
    %v5643 = vld [vmem:[%s14 + $0x6c] sm:$0xf]
    %v5644 = vld [vmem:[%s14 + $0x70] sm:$0xf]
    %v5645 = vld [vmem:[%s14 + $0x74] sm:$0xf]
    %v5646 = vld [vmem:[%s14 + $0x78] sm:$0xf]
    %v5647 = vld [vmem:[%s14 + $0x7c] sm:$0xf]
    %v5648 = vld [vmem:[%s15] sm:$0x1]
    %v5650 = vlaneseq
    %v5651 = vshrl.u32 %v5650, 7
    %v5652 = vsub.s32 0, %v5651
    %v5653 = vrot.slane %v5648, %v5652
    %v5687 = vunpack.c.l.b16 %v5616
    %v5688 = vunpack.c.l.b16 %v5617
    %v5689 = vunpack.c.l.b16 %v5618
    %v5690 = vunpack.c.l.b16 %v5619
    %v5691 = vunpack.c.l.b16 %v5620
    %v5692 = vunpack.c.l.b16 %v5621
    %v5693 = vunpack.c.l.b16 %v5622
    %v5694 = vunpack.c.l.b16 %v5623
    %v5695 = vunpack.c.l.b16 %v5624
    %v5696 = vunpack.c.l.b16 %v5625
    %v5697 = vunpack.c.l.b16 %v5626
    %v5698 = vunpack.c.l.b16 %v5627
    %v5699 = vunpack.c.l.b16 %v5628
    %v5700 = vunpack.c.l.b16 %v5629
    %v5701 = vunpack.c.l.b16 %v5630
    %v5702 = vunpack.c.l.b16 %v5631
    %v5703 = vunpack.c.l.b16 %v5632
    %v5704 = vunpack.c.l.b16 %v5633
    %v5705 = vunpack.c.l.b16 %v5634
    %v5706 = vunpack.c.l.b16 %v5635
    %v5707 = vunpack.c.l.b16 %v5636
    %v5708 = vunpack.c.l.b16 %v5637
    %v5709 = vunpack.c.l.b16 %v5638
    %v5710 = vunpack.c.l.b16 %v5639
    %v5711 = vunpack.c.l.b16 %v5640
    %v5712 = vunpack.c.l.b16 %v5641
    %v5713 = vunpack.c.l.b16 %v5642
    %v5714 = vunpack.c.l.b16 %v5643
    %v5715 = vunpack.c.l.b16 %v5644
    %v5716 = vunpack.c.l.b16 %v5645
    %v5717 = vunpack.c.l.b16 %v5646
    %v5718 = vunpack.c.l.b16 %v5647
    %v5719 = vpack.c.b16 %v5688, %v5687
    %v5720 = vpack.c.b16 %v5690, %v5689
    %v5721 = vpack.c.b16 %v5692, %v5691
    %v5722 = vpack.c.b16 %v5694, %v5693
    %v5723 = vpack.c.b16 %v5696, %v5695
    %v5724 = vpack.c.b16 %v5698, %v5697
    %v5725 = vpack.c.b16 %v5700, %v5699
    %v5726 = vpack.c.b16 %v5702, %v5701
    %v5727 = vpack.c.b16 %v5704, %v5703
    %v5728 = vpack.c.b16 %v5706, %v5705
    %v5729 = vpack.c.b16 %v5708, %v5707
    %v5730 = vpack.c.b16 %v5710, %v5709
    %v5731 = vpack.c.b16 %v5712, %v5711
    %v5732 = vpack.c.b16 %v5714, %v5713
    %v5733 = vpack.c.b16 %v5716, %v5715
    %v5734 = vpack.c.b16 %v5718, %v5717
    %5751 = vmatprep.subr.bf16.mxu0 0
    %5752 = vmatpush1.bf16.msra.mxu0 %v5719
    %5753 = vmatprep.subr.bf16.mxu0 0
    %5754 = vmatpush1.bf16.msra.mxu0 %v5720
    %5755 = vmatprep.subr.bf16.mxu0 0
    %5756 = vmatpush1.bf16.msra.mxu0 %v5721
    %5757 = vmatprep.subr.bf16.mxu0 0
    %5758 = vmatpush1.bf16.msra.mxu0 %v5722
    %5759 = vmatprep.subr.bf16.mxu0 0
    %5760 = vmatpush1.bf16.msra.mxu0 %v5723
    %5761 = vmatprep.subr.bf16.mxu0 0
    %5762 = vmatpush1.bf16.msra.mxu0 %v5724
    %5763 = vmatprep.subr.bf16.mxu0 0
    %5764 = vmatpush1.bf16.msra.mxu0 %v5725
    %5765 = vmatprep.subr.bf16.mxu0 0
    %5766 = vmatpush1.bf16.msra.mxu0 %v5726
    %5767 = vmatprep.subr.bf16.mxu0 0
    %5768 = vmatpush1.bf16.msra.mxu0 %v5727
    %5769 = vmatprep.subr.bf16.mxu0 0
    %5770 = vmatpush1.bf16.msra.mxu0 %v5728
    %5771 = vmatprep.subr.bf16.mxu0 0
    %5772 = vmatpush1.bf16.msra.mxu0 %v5729
    %5773 = vmatprep.subr.bf16.mxu0 0
    %5774 = vmatpush1.bf16.msra.mxu0 %v5730
    %5775 = vmatprep.subr.bf16.mxu0 0
    %5776 = vmatpush1.bf16.msra.mxu0 %v5731
    %5777 = vmatprep.subr.bf16.mxu0 0
    %5778 = vmatpush1.bf16.msra.mxu0 %v5732
    %5779 = vmatprep.subr.bf16.mxu0 0
    %5780 = vmatpush1.bf16.msra.mxu0 %v5733
    %5781 = vmatprep.subr.bf16.mxu0 0
    %5782 = vmatpush1.bf16.msra.mxu0 %v5734
    %5783 = vmatprep.mubr.bf16.mxu0 %v5615
    %5784 = vmatmul.mubr.bf16.gmra.mrb[0].mxu0 %v5614
    %v5785 = vpop.f32.mrb[0].mxu0
    %v5786 = vadd.f32 %v5653, %v5785
    %v5787 = vpop.f32.mrb[0].mxu0
    %v5788 = vpop.f32.mrb[0].mxu0
    %v5789 = vpop.f32.mrb[0].mxu0
    %5790 = vdwg.mxu0
    %5791 = vst [vmem:[#allocation3] sm:$0x3] %v5786
    // Predicated region
    $region66: #{lstm_temporal_forward.1} parent=1 // pred_check
      _
    $region67: #{lstm_temporal_forward.1} parent=1 // pred_check_branch
      %5793 = sbr.rel (0) target = $region69
    $region68: #{lstm_temporal_forward.1} parent=1 // pred_region
      %s5795 = ssub.s32 32, 32
      %5796 = vsyncadd [#allocation4], %s5795
      %s5798 = sshll.u32 [#allocation3], 4
      %s5799 = int_to_ptr.vmem [resolvable:$true] %s5798
      %5801 = dma.vmem_to_hbm [thread:$0]  %s5799, 32, %s16, [#allocation4]
    $region69: #{lstm_temporal_forward.1} parent=1 // pred_fallthru
      _
    // Predicated region
    $region70: #{lstm_temporal_forward.1} parent=1 // pred_check
      _
    $region71: #{lstm_temporal_forward.1} parent=1 // pred_check_branch
      %5803 = sbr.rel (0) target = $region73
    $region72: #{lstm_temporal_forward.1} parent=1 // pred_region
      %5804 = dma.done [#allocation4], 32
    $region73: #{lstm_temporal_forward.1} parent=1 // pred_fallthru
      _
    %5805 = vsyncpa [#allocation4], 1

</llo_original>
